<compile_context>
chip_gen: v6e
topology: v6e:2x2x1
jax: 0.10.0
libtpu: 0.0.40
codegen_flags: <defaults>
</compile_context>

<pallas_src>
import numpy as np
import jax
import jax.numpy as jnp
from jax import lax
from jax.experimental import pallas as pl
from jax.experimental.pallas import tpu as pltpu

BN_EPS = 1e-5


# ----------------------------------------------------------------------------
# Fused Pallas kernel: 1x1 conv -> grouped 3x3 conv -> 1x1 conv (BN folded)
# ----------------------------------------------------------------------------
def _make_fused_kernel(Nb, H, W, Cin, base, cpg, Cout, Hs, col0, Wp):
    Cx = cpg * base          # widened layer-1 channel count (slab per ci)

    def kernel(x_ref, w1_ref, b1_ref, taps_ref, b2_ref, w3_ref, b3_ref,
               o_ref, y1p_ref):
        # ---- layer 1: 1x1 conv + BN + ReLU (MXU matmul, M = Nb*H*W) --------
        x = x_ref[...].reshape(Nb * H * W, Cin)
        y1 = jnp.dot(x, w1_ref[...], preferred_element_type=jnp.float32)
        y1 = jnp.maximum(y1 + b1_ref[...], 0.0)

        # Zero only the 1-pixel halo strips (cheap; done every step so the
        # kernel is correct even if the batch grid axis is core-split).
        zrow = jnp.zeros((Nb, 1, Wp, Cx), jnp.float32)
        y1p_ref[:, 0:1, :, :] = zrow
        y1p_ref[:, H + 1:H + 2, :, :] = zrow
        zcol = jnp.zeros((Nb, H, 1, Cx), jnp.float32)
        y1p_ref[:, 1:H + 1, col0 - 1:col0, :] = zcol
        y1p_ref[:, 1:H + 1, col0 + W:col0 + W + 1, :] = zcol

        # Sublane-aligned interior store (interior starts at column col0=8).
        y1p_ref[:, 1:H + 1, col0:col0 + W, :] = y1.reshape(Nb, H, W, Cx)

        # ---- layers 2 + 3, per row strip ------------------------------------
        # layer 2: grouped 3x3 conv as 9*cpg VPU multiply-accumulates into a
        # live vreg accumulator (written once, fused with bias + ReLU).
        # layer 3: 1x1 conv + BN (no activation: pre_activation=False).
        for r0 in range(0, H, Hs):
            acc = None
            for k in range(9):
                dy, dx = divmod(k, 3)
                c0 = col0 - 1 + dx
                for d in range(cpg):
                    win = y1p_ref[:, r0 + dy:r0 + dy + Hs, c0:c0 + W,
                                  d * base:(d + 1) * base]
                    term = win * taps_ref[k, d]          # (Nb,Hs,W,base)*(1,base)
                    acc = term if acc is None else acc + term
            y2 = jnp.maximum(acc + b2_ref[...], 0.0)

            y2m = y2.reshape(Nb * Hs * W, base).astype(w3_ref.dtype)
            out = jnp.dot(y2m, w3_ref[...],
                          preferred_element_type=jnp.float32) + b3_ref[...]
            o_ref[:, r0:r0 + Hs, :, :] = out.reshape(Nb, Hs, W, Cout).astype(
                o_ref.dtype)

    return kernel


# ----------------------------------------------------------------------------
# Parameter setup (deterministic, synthetic) + BN folding
# ----------------------------------------------------------------------------
def _bn_params(key, c):
    k1, k2, k3, k4 = jax.random.split(key, 4)
    gamma = 1.0 + 0.1 * jax.random.normal(k1, (c,), jnp.float32)
    beta = 0.05 * jax.random.normal(k2, (c,), jnp.float32)
    mean = 0.01 * jax.random.normal(k3, (c,), jnp.float32)
    var = 1.0 + 0.05 * jax.random.uniform(k4, (c,), jnp.float32)
    return gamma, beta, mean, var


def _fold_bn_into_conv(w_oihw, bn):
    """Returns (w_folded_oihw, bias) for conv (no conv bias) followed by BN."""
    gamma, beta, mean, var = bn
    scale = gamma / jnp.sqrt(var + BN_EPS)
    w_f = w_oihw * scale[:, None, None, None]
    b_f = beta - mean * scale
    return w_f, b_f


def make_params(input_channel, base, groups=32, seed=0):
    key = jax.random.PRNGKey(seed)
    ks = jax.random.split(key, 6)
    cpg = base // groups

    # PyTorch conv weight layout: (Cout, Cin/groups, kh, kw)
    w1 = 0.1 * jax.random.normal(ks[0], (base, input_channel, 1, 1), jnp.float32)
    w2 = 0.1 * jax.random.normal(ks[1], (base, cpg, 3, 3), jnp.float32)
    w3 = 0.1 * jax.random.normal(ks[2], (2 * base, base, 1, 1), jnp.float32)

    bn1 = _bn_params(ks[3], base)
    bn2 = _bn_params(ks[4], base)
    bn3 = _bn_params(ks[5], 2 * base)
    return dict(w1=w1, w2=w2, w3=w3, bn1=bn1, bn2=bn2, bn3=bn3,
                groups=groups, base=base, input_channel=input_channel)


# ----------------------------------------------------------------------------
# BottleNeck forward (fused Pallas path)
# ----------------------------------------------------------------------------
def bottleneck_forward(x_nchw, params, stride=1, use_bf16=False):
    """Input/output are NCHW float32, matching the PyTorch module."""
    # TODO(synk): the NCHW<->NHWC transposes (and the stride slice) are extra
    # HBM passes; an in-kernel NCHW writeback / NHWC end-to-end API would
    # remove them.
    x = jnp.transpose(x_nchw, (0, 2, 3, 1)).astype(jnp.float32)   # -> NHWC
    if stride > 1:
        # strided 1x1 conv == slicing then unit-stride 1x1 conv
        x = x[:, ::stride, ::stride, :]
    N, H, W, Cin = x.shape

    base = params["base"]
    groups = params["groups"]
    cpg = base // groups
    Cout = 2 * base
    Cx = cpg * base
    cdt = jnp.bfloat16 if use_bf16 else jnp.float32

    # Fold BN into each conv (inference mode).
    w1f, b1f = _fold_bn_into_conv(params["w1"], params["bn1"])
    w2f, b2f = _fold_bn_into_conv(params["w2"], params["bn2"])
    w3f, b3f = _fold_bn_into_conv(params["w3"], params["bn3"])

    # Generalized depthwise reformulation of the grouped conv:
    # slab d of the widened layer-1 output holds, for every output channel oc,
    # the input channel (oc // cpg) * cpg + d of its group.
    oc = np.arange(base)
    gidx = np.concatenate([(oc // cpg) * cpg + d for d in range(cpg)])  # (Cx,)

    w1_mat = jnp.transpose(w1f[:, :, 0, 0], (1, 0))                 # (Cin, base)
    w1_big = w1_mat[:, gidx].astype(cdt)                            # (Cin, Cx)
    b1_big = b1f[gidx].reshape(1, Cx)                               # f32
    # taps[k, d, 0, oc] = w2f[oc, d, ky, kx] with k = ky*3 + kx  (f32, VPU)
    taps = jnp.transpose(w2f, (2, 3, 1, 0)).reshape(9, cpg, 1, base)
    b2 = b2f.reshape(1, 1, base)
    w3_mat = jnp.transpose(w3f[:, :, 0, 0], (1, 0)).astype(cdt)     # (base, Cout)
    b3 = b3f.reshape(1, Cout)

    # Images per grid step (largest divisor of N up to 8).
    Nb = 1
    for d in range(1, min(N, 8) + 1):
        if N % d == 0:
            Nb = d
    # Row-strip height for layers 2+3: keep the live accumulator <= 128 rows.
    Hs = 1
    for d in range(1, H + 1):
        if H % d == 0 and Nb * d * W <= 128:
            Hs = d

    col0 = 8                      # interior starts at sublane col 8 (aligned)
    Wp = W + 16                   # padded scratch width

    kernel = _make_fused_kernel(Nb, H, W, Cin, base, cpg, Cout, Hs, col0, Wp)

    x_in = x.astype(cdt)          # bf16 MXU inputs when requested (wrapper cast)

    y = pl.pallas_call(
        kernel,
        out_shape=jax.ShapeDtypeStruct((N, H, W, Cout), jnp.float32),
        grid=(N // Nb,),
        in_specs=[
            pl.BlockSpec((Nb, H, W, Cin), lambda n: (n, 0, 0, 0)),
            pl.BlockSpec((Cin, Cx), lambda n: (0, 0)),
            pl.BlockSpec((1, Cx), lambda n: (0, 0)),
            pl.BlockSpec((9, cpg, 1, base), lambda n: (0, 0, 0, 0)),
            pl.BlockSpec((1, 1, base), lambda n: (0, 0, 0)),
            pl.BlockSpec((base, Cout), lambda n: (0, 0)),
            pl.BlockSpec((1, Cout), lambda n: (0, 0)),
        ],
        out_specs=pl.BlockSpec((Nb, H, W, Cout), lambda n: (n, 0, 0, 0)),
        scratch_shapes=[
            pltpu.VMEM((Nb, H + 2, Wp, Cx), jnp.float32),  # padded layer-1 act
        ],
        compiler_params=pltpu.CompilerParams(
            dimension_semantics=("parallel",),
            vmem_limit_bytes=32 * 1024 * 1024),
    )(x_in, w1_big, b1_big, taps, b2, w3_mat, b3)

    return jnp.transpose(y, (0, 3, 1, 2))                           # -> NCHW


# ----------------------------------------------------------------------------
# Pure-JAX reference (lax conv, explicit BN) for verification
# ----------------------------------------------------------------------------
def reference_forward(x_nchw, params, stride=1):
    def bn(y, bnp):
        gamma, beta, mean, var = bnp
        s = gamma / jnp.sqrt(var + BN_EPS)
        return y * s[None, :, None, None] + (beta - mean * s)[None, :, None, None]

    dn = ("NCHW", "OIHW", "NCHW")
    y = lax.conv_general_dilated(x_nchw, params["w1"], (stride, stride),
                                 "VALID", dimension_numbers=dn)
    y = jnp.maximum(bn(y, params["bn1"]), 0.0)
    y = lax.conv_general_dilated(y, params["w2"], (1, 1),
                                 ((1, 1), (1, 1)), dimension_numbers=dn,
                                 feature_group_count=params["groups"])
    y = jnp.maximum(bn(y, params["bn2"]), 0.0)
    y = lax.conv_general_dilated(y, params["w3"], (1, 1),
                                 "VALID", dimension_numbers=dn)
    return bn(y, params["bn3"])


# ----------------------------------------------------------------------------
if __name__ == "__main__":
    N, Cin, H, W = 2, 16, 16, 16
    key = jax.random.PRNGKey(0)
    x = jax.random.normal(key, (N, Cin, H, W), jnp.float32)       # NCHW input

    # Config 1: base=32 (groups=32 -> 1 channel/group, depthwise path), stride=1
    p1 = make_params(Cin, 32, groups=32, seed=0)
    out1 = jax.block_until_ready(bottleneck_forward(x, p1, stride=1))
    ref1 = jax.block_until_ready(reference_forward(x, p1, stride=1))
    assert out1.shape == (N, 64, H, W), out1.shape
    np.testing.assert_allclose(np.asarray(out1), np.asarray(ref1),
                               atol=1e-3, rtol=1e-3)

    # Config 2: base=64 (2 channels/group -> generalized VPU path), stride=2
    p2 = make_params(Cin, 64, groups=32, seed=1)
    out2 = jax.block_until_ready(bottleneck_forward(x, p2, stride=2))
    ref2 = jax.block_until_ready(reference_forward(x, p2, stride=2))
    assert out2.shape == (N, 128, H // 2, W // 2), out2.shape
    np.testing.assert_allclose(np.asarray(out2), np.asarray(ref2),
                               atol=1e-3, rtol=1e-3)

    # bf16 MXU-input variant (v5e/v6e/v7x); loose tolerance vs f32 reference.
    out1b = jax.block_until_ready(bottleneck_forward(x, p1, stride=1,
                                                     use_bf16=True))
    np.testing.assert_allclose(np.asarray(out1b), np.asarray(ref1),
                               atol=5e-2, rtol=5e-2)

    print("KERNEL_OK")
</pallas_src>

<mosaic_0001>
module attributes {stable_mosaic.version = 11 : i64} {
  func.func @kernel(%arg0: i32, %arg1: memref<2x16x16x16xf32, #tpu.memory_space<vmem>>, %arg2: memref<16x32xf32, #tpu.memory_space<vmem>>, %arg3: memref<1x32xf32, #tpu.memory_space<vmem>>, %arg4: memref<9x1x1x32xf32, #tpu.memory_space<vmem>>, %arg5: memref<1x1x32xf32, #tpu.memory_space<vmem>>, %arg6: memref<32x64xf32, #tpu.memory_space<vmem>>, %arg7: memref<1x64xf32, #tpu.memory_space<vmem>>, %arg8: memref<2x16x16x64xf32, #tpu.memory_space<vmem>>, %arg9: memref<2x18x32x32xf32, #tpu.memory_space<vmem>>) attributes {dimension_semantics = [#tpu.dimension_semantics<parallel>], iteration_bounds = array<i64: 1>, scalar_prefetch = 0 : i64, scratch_operands = 1 : i64, tpu.core_type = #tpu.core_type<tc>, window_params = [{transform_indices = @transform_0, window_bounds = array<i64: 2, 16, 16, 16>}, {pipeline_mode = #tpu.pipeline_mode<synchronous>, transform_indices = @transform_1, window_bounds = array<i64: 16, 32>}, {pipeline_mode = #tpu.pipeline_mode<synchronous>, transform_indices = @transform_2, window_bounds = array<i64: 1, 32>}, {pipeline_mode = #tpu.pipeline_mode<synchronous>, transform_indices = @transform_3, window_bounds = array<i64: 9, 1, 1, 32>}, {pipeline_mode = #tpu.pipeline_mode<synchronous>, transform_indices = @transform_4, window_bounds = array<i64: 1, 1, 32>}, {pipeline_mode = #tpu.pipeline_mode<synchronous>, transform_indices = @transform_5, window_bounds = array<i64: 32, 64>}, {pipeline_mode = #tpu.pipeline_mode<synchronous>, transform_indices = @transform_6, window_bounds = array<i64: 1, 64>}, {transform_indices = @transform_7, window_bounds = array<i64: 2, 16, 16, 64>}]} {
    %c0 = arith.constant 0 : index
    %c0_0 = arith.constant 0 : index
    %c0_1 = arith.constant 0 : index
    %c0_2 = arith.constant 0 : index
    %0 = vector.load %arg1[%c0, %c0_0, %c0_1, %c0_2] : memref<2x16x16x16xf32, #tpu.memory_space<vmem>>, vector<2x16x16x16xf32>
    %1 = vector.shape_cast %0 : vector<2x16x16x16xf32> to vector<512x16xf32>
    %c0_3 = arith.constant 0 : index
    %c0_4 = arith.constant 0 : index
    %2 = vector.load %arg2[%c0_3, %c0_4] : memref<16x32xf32, #tpu.memory_space<vmem>>, vector<16x32xf32>
    %cst = arith.constant dense<0.000000e+00> : vector<512x32xf32>
    %3 = tpu.matmul %1, %2, %cst {dimension_numbers = #tpu.dot_dimension_numbers<[1], [0], [0], [1], [0, 0, 1, 1], [], []>} : vector<512x16xf32>, vector<16x32xf32>, vector<512x32xf32> -> vector<512x32xf32>
    %c0_5 = arith.constant 0 : index
    %c0_6 = arith.constant 0 : index
    %4 = vector.load %arg3[%c0_5, %c0_6] : memref<1x32xf32, #tpu.memory_space<vmem>>, vector<1x32xf32>
    %5 = vector.broadcast %4 : vector<1x32xf32> to vector<512x32xf32>
    %6 = arith.addf %3, %5 : vector<512x32xf32>
    %cst_7 = arith.constant 0.000000e+00 : f32
    %7 = vector.broadcast %cst_7 : f32 to vector<512x32xf32>
    %8 = arith.maximumf %6, %7 : vector<512x32xf32>
    %cst_8 = arith.constant 0.000000e+00 : f32
    %9 = vector.broadcast %cst_8 : f32 to vector<2x1x32x32xf32>
    %c0_9 = arith.constant 0 : index
    %c0_10 = arith.constant 0 : index
    %c0_11 = arith.constant 0 : index
    %c0_12 = arith.constant 0 : index
    %10 = vector.load %arg9[%c0_9, %c0_10, %c0_11, %c0_12] : memref<2x18x32x32xf32, #tpu.memory_space<vmem>>, vector<2x1x32x32xf32>
    tpu.vector_store %arg9[%c0_9, %c0_10, %c0_11, %c0_12], %9 {strides = array<i32>} : memref<2x18x32x32xf32, #tpu.memory_space<vmem>>, vector<2x1x32x32xf32>,
    %c0_13 = arith.constant 0 : index
    %c17 = arith.constant 17 : index
    %c0_14 = arith.constant 0 : index
    %c0_15 = arith.constant 0 : index
    %11 = vector.load %arg9[%c0_13, %c17, %c0_14, %c0_15] : memref<2x18x32x32xf32, #tpu.memory_space<vmem>>, vector<2x1x32x32xf32>
    tpu.vector_store %arg9[%c0_13, %c17, %c0_14, %c0_15], %9 {strides = array<i32>} : memref<2x18x32x32xf32, #tpu.memory_space<vmem>>, vector<2x1x32x32xf32>,
    %cst_16 = arith.constant 0.000000e+00 : f32
    %12 = vector.broadcast %cst_16 : f32 to vector<2x16x1x32xf32>
    %c0_17 = arith.constant 0 : index
    %c1 = arith.constant 1 : index
    %c7 = arith.constant 7 : index
    %c0_18 = arith.constant 0 : index
    %13 = vector.load %arg9[%c0_17, %c1, %c7, %c0_18] : memref<2x18x32x32xf32, #tpu.memory_space<vmem>>, vector<2x16x1x32xf32>
    tpu.vector_store %arg9[%c0_17, %c1, %c7, %c0_18], %12 {strides = array<i32>} : memref<2x18x32x32xf32, #tpu.memory_space<vmem>>, vector<2x16x1x32xf32>,
    %c0_19 = arith.constant 0 : index
    %c1_20 = arith.constant 1 : index
    %c24 = arith.constant 24 : index
    %c0_21 = arith.constant 0 : index
    %14 = vector.load %arg9[%c0_19, %c1_20, %c24, %c0_21] : memref<2x18x32x32xf32, #tpu.memory_space<vmem>>, vector<2x16x1x32xf32>
    tpu.vector_store %arg9[%c0_19, %c1_20, %c24, %c0_21], %12 {strides = array<i32>} : memref<2x18x32x32xf32, #tpu.memory_space<vmem>>, vector<2x16x1x32xf32>,
    %15 = vector.shape_cast %8 : vector<512x32xf32> to vector<2x16x16x32xf32>
    %c0_22 = arith.constant 0 : index
    %c1_23 = arith.constant 1 : index
    %c8 = arith.constant 8 : index
    %c0_24 = arith.constant 0 : index
    %16 = vector.load %arg9[%c0_22, %c1_23, %c8, %c0_24] : memref<2x18x32x32xf32, #tpu.memory_space<vmem>>, vector<2x16x16x32xf32>
    tpu.vector_store %arg9[%c0_22, %c1_23, %c8, %c0_24], %15 {strides = array<i32>} : memref<2x18x32x32xf32, #tpu.memory_space<vmem>>, vector<2x16x16x32xf32>,
    %c0_25 = arith.constant 0 : index
    %c0_26 = arith.constant 0 : index
    %c7_27 = arith.constant 7 : index
    %c0_28 = arith.constant 0 : index
    %17 = vector.load %arg9[%c0_25, %c0_26, %c7_27, %c0_28] : memref<2x18x32x32xf32, #tpu.memory_space<vmem>>, vector<2x4x16x32xf32>
    %c0_29 = arith.constant 0 : index
    %c0_30 = arith.constant 0 : index
    %c0_31 = arith.constant 0 : index
    %c0_32 = arith.constant 0 : index
    %18 = vector.load %arg4[%c0_29, %c0_30, %c0_31, %c0_32] : memref<9x1x1x32xf32, #tpu.memory_space<vmem>>, vector<1x1x1x32xf32>
    %19 = vector.shape_cast %18 : vector<1x1x1x32xf32> to vector<1x32xf32>
    %20 = vector.shape_cast %19 : vector<1x32xf32> to vector<1x1x1x32xf32>
    %21 = vector.broadcast %20 : vector<1x1x1x32xf32> to vector<2x4x16x32xf32>
    %22 = arith.mulf %17, %21 : vector<2x4x16x32xf32>
    %c0_33 = arith.constant 0 : index
    %c0_34 = arith.constant 0 : index
    %c8_35 = arith.constant 8 : index
    %c0_36 = arith.constant 0 : index
    %23 = vector.load %arg9[%c0_33, %c0_34, %c8_35, %c0_36] : memref<2x18x32x32xf32, #tpu.memory_space<vmem>>, vector<2x4x16x32xf32>
    %c1_37 = arith.constant 1 : index
    %c0_38 = arith.constant 0 : index
    %c0_39 = arith.constant 0 : index
    %c0_40 = arith.constant 0 : index
    %24 = vector.load %arg4[%c1_37, %c0_38, %c0_39, %c0_40] : memref<9x1x1x32xf32, #tpu.memory_space<vmem>>, vector<1x1x1x32xf32>
    %25 = vector.shape_cast %24 : vector<1x1x1x32xf32> to vector<1x32xf32>
    %26 = vector.shape_cast %25 : vector<1x32xf32> to vector<1x1x1x32xf32>
    %27 = vector.broadcast %26 : vector<1x1x1x32xf32> to vector<2x4x16x32xf32>
    %28 = arith.mulf %23, %27 : vector<2x4x16x32xf32>
    %29 = arith.addf %22, %28 : vector<2x4x16x32xf32>
    %c0_41 = arith.constant 0 : index
    %c0_42 = arith.constant 0 : index
    %c9 = arith.constant 9 : index
    %c0_43 = arith.constant 0 : index
    %30 = vector.load %arg9[%c0_41, %c0_42, %c9, %c0_43] : memref<2x18x32x32xf32, #tpu.memory_space<vmem>>, vector<2x4x16x32xf32>
    %c2 = arith.constant 2 : index
    %c0_44 = arith.constant 0 : index
    %c0_45 = arith.constant 0 : index
    %c0_46 = arith.constant 0 : index
    %31 = vector.load %arg4[%c2, %c0_44, %c0_45, %c0_46] : memref<9x1x1x32xf32, #tpu.memory_space<vmem>>, vector<1x1x1x32xf32>
    %32 = vector.shape_cast %31 : vector<1x1x1x32xf32> to vector<1x32xf32>
    %33 = vector.shape_cast %32 : vector<1x32xf32> to vector<1x1x1x32xf32>
    %34 = vector.broadcast %33 : vector<1x1x1x32xf32> to vector<2x4x16x32xf32>
    %35 = arith.mulf %30, %34 : vector<2x4x16x32xf32>
    %36 = arith.addf %29, %35 : vector<2x4x16x32xf32>
    %c0_47 = arith.constant 0 : index
    %c1_48 = arith.constant 1 : index
    %c7_49 = arith.constant 7 : index
    %c0_50 = arith.constant 0 : index
    %37 = vector.load %arg9[%c0_47, %c1_48, %c7_49, %c0_50] : memref<2x18x32x32xf32, #tpu.memory_space<vmem>>, vector<2x4x16x32xf32>
    %c3 = arith.constant 3 : index
    %c0_51 = arith.constant 0 : index
    %c0_52 = arith.constant 0 : index
    %c0_53 = arith.constant 0 : index
    %38 = vector.load %arg4[%c3, %c0_51, %c0_52, %c0_53] : memref<9x1x1x32xf32, #tpu.memory_space<vmem>>, vector<1x1x1x32xf32>
    %39 = vector.shape_cast %38 : vector<1x1x1x32xf32> to vector<1x32xf32>
    %40 = vector.shape_cast %39 : vector<1x32xf32> to vector<1x1x1x32xf32>
    %41 = vector.broadcast %40 : vector<1x1x1x32xf32> to vector<2x4x16x32xf32>
    %42 = arith.mulf %37, %41 : vector<2x4x16x32xf32>
    %43 = arith.addf %36, %42 : vector<2x4x16x32xf32>
    %c0_54 = arith.constant 0 : index
    %c1_55 = arith.constant 1 : index
    %c8_56 = arith.constant 8 : index
    %c0_57 = arith.constant 0 : index
    %44 = vector.load %arg9[%c0_54, %c1_55, %c8_56, %c0_57] : memref<2x18x32x32xf32, #tpu.memory_space<vmem>>, vector<2x4x16x32xf32>
    %c4 = arith.constant 4 : index
    %c0_58 = arith.constant 0 : index
    %c0_59 = arith.constant 0 : index
    %c0_60 = arith.constant 0 : index
    %45 = vector.load %arg4[%c4, %c0_58, %c0_59, %c0_60] : memref<9x1x1x32xf32, #tpu.memory_space<vmem>>, vector<1x1x1x32xf32>
    %46 = vector.shape_cast %45 : vector<1x1x1x32xf32> to vector<1x32xf32>
    %47 = vector.shape_cast %46 : vector<1x32xf32> to vector<1x1x1x32xf32>
    %48 = vector.broadcast %47 : vector<1x1x1x32xf32> to vector<2x4x16x32xf32>
    %49 = arith.mulf %44, %48 : vector<2x4x16x32xf32>
    %50 = arith.addf %43, %49 : vector<2x4x16x32xf32>
    %c0_61 = arith.constant 0 : index
    %c1_62 = arith.constant 1 : index
    %c9_63 = arith.constant 9 : index
    %c0_64 = arith.constant 0 : index
    %51 = vector.load %arg9[%c0_61, %c1_62, %c9_63, %c0_64] : memref<2x18x32x32xf32, #tpu.memory_space<vmem>>, vector<2x4x16x32xf32>
    %c5 = arith.constant 5 : index
    %c0_65 = arith.constant 0 : index
    %c0_66 = arith.constant 0 : index
    %c0_67 = arith.constant 0 : index
    %52 = vector.load %arg4[%c5, %c0_65, %c0_66, %c0_67] : memref<9x1x1x32xf32, #tpu.memory_space<vmem>>, vector<1x1x1x32xf32>
    %53 = vector.shape_cast %52 : vector<1x1x1x32xf32> to vector<1x32xf32>
    %54 = vector.shape_cast %53 : vector<1x32xf32> to vector<1x1x1x32xf32>
    %55 = vector.broadcast %54 : vector<1x1x1x32xf32> to vector<2x4x16x32xf32>
    %56 = arith.mulf %51, %55 : vector<2x4x16x32xf32>
    %57 = arith.addf %50, %56 : vector<2x4x16x32xf32>
    %c0_68 = arith.constant 0 : index
    %c2_69 = arith.constant 2 : index
    %c7_70 = arith.constant 7 : index
    %c0_71 = arith.constant 0 : index
    %58 = vector.load %arg9[%c0_68, %c2_69, %c7_70, %c0_71] : memref<2x18x32x32xf32, #tpu.memory_space<vmem>>, vector<2x4x16x32xf32>
    %c6 = arith.constant 6 : index
    %c0_72 = arith.constant 0 : index
    %c0_73 = arith.constant 0 : index
    %c0_74 = arith.constant 0 : index
    %59 = vector.load %arg4[%c6, %c0_72, %c0_73, %c0_74] : memref<9x1x1x32xf32, #tpu.memory_space<vmem>>, vector<1x1x1x32xf32>
    %60 = vector.shape_cast %59 : vector<1x1x1x32xf32> to vector<1x32xf32>
    %61 = vector.shape_cast %60 : vector<1x32xf32> to vector<1x1x1x32xf32>
    %62 = vector.broadcast %61 : vector<1x1x1x32xf32> to vector<2x4x16x32xf32>
    %63 = arith.mulf %58, %62 : vector<2x4x16x32xf32>
    %64 = arith.addf %57, %63 : vector<2x4x16x32xf32>
    %c0_75 = arith.constant 0 : index
    %c2_76 = arith.constant 2 : index
    %c8_77 = arith.constant 8 : index
    %c0_78 = arith.constant 0 : index
    %65 = vector.load %arg9[%c0_75, %c2_76, %c8_77, %c0_78] : memref<2x18x32x32xf32, #tpu.memory_space<vmem>>, vector<2x4x16x32xf32>
    %c7_79 = arith.constant 7 : index
    %c0_80 = arith.constant 0 : index
    %c0_81 = arith.constant 0 : index
    %c0_82 = arith.constant 0 : index
    %66 = vector.load %arg4[%c7_79, %c0_80, %c0_81, %c0_82] : memref<9x1x1x32xf32, #tpu.memory_space<vmem>>, vector<1x1x1x32xf32>
    %67 = vector.shape_cast %66 : vector<1x1x1x32xf32> to vector<1x32xf32>
    %68 = vector.shape_cast %67 : vector<1x32xf32> to vector<1x1x1x32xf32>
    %69 = vector.broadcast %68 : vector<1x1x1x32xf32> to vector<2x4x16x32xf32>
    %70 = arith.mulf %65, %69 : vector<2x4x16x32xf32>
    %71 = arith.addf %64, %70 : vector<2x4x16x32xf32>
    %c0_83 = arith.constant 0 : index
    %c2_84 = arith.constant 2 : index
    %c9_85 = arith.constant 9 : index
    %c0_86 = arith.constant 0 : index
    %72 = vector.load %arg9[%c0_83, %c2_84, %c9_85, %c0_86] : memref<2x18x32x32xf32, #tpu.memory_space<vmem>>, vector<2x4x16x32xf32>
    %c8_87 = arith.constant 8 : index
    %c0_88 = arith.constant 0 : index
    %c0_89 = arith.constant 0 : index
    %c0_90 = arith.constant 0 : index
    %73 = vector.load %arg4[%c8_87, %c0_88, %c0_89, %c0_90] : memref<9x1x1x32xf32, #tpu.memory_space<vmem>>, vector<1x1x1x32xf32>
    %74 = vector.shape_cast %73 : vector<1x1x1x32xf32> to vector<1x32xf32>
    %75 = vector.shape_cast %74 : vector<1x32xf32> to vector<1x1x1x32xf32>
    %76 = vector.broadcast %75 : vector<1x1x1x32xf32> to vector<2x4x16x32xf32>
    %77 = arith.mulf %72, %76 : vector<2x4x16x32xf32>
    %78 = arith.addf %71, %77 : vector<2x4x16x32xf32>
    %c0_91 = arith.constant 0 : index
    %c0_92 = arith.constant 0 : index
    %c0_93 = arith.constant 0 : index
    %79 = vector.load %arg5[%c0_91, %c0_92, %c0_93] : memref<1x1x32xf32, #tpu.memory_space<vmem>>, vector<1x1x32xf32>
    %80 = vector.shape_cast %79 : vector<1x1x32xf32> to vector<1x1x1x32xf32>
    %81 = vector.broadcast %80 : vector<1x1x1x32xf32> to vector<2x4x16x32xf32>
    %82 = arith.addf %78, %81 : vector<2x4x16x32xf32>
    %cst_94 = arith.constant 0.000000e+00 : f32
    %83 = vector.broadcast %cst_94 : f32 to vector<2x4x16x32xf32>
    %84 = arith.maximumf %82, %83 : vector<2x4x16x32xf32>
    %85 = vector.shape_cast %84 : vector<2x4x16x32xf32> to vector<128x32xf32>
    %c0_95 = arith.constant 0 : index
    %c0_96 = arith.constant 0 : index
    %86 = vector.load %arg6[%c0_95, %c0_96] : memref<32x64xf32, #tpu.memory_space<vmem>>, vector<32x64xf32>
    %cst_97 = arith.constant dense<0.000000e+00> : vector<128x64xf32>
    %87 = tpu.matmul %85, %86, %cst_97 {dimension_numbers = #tpu.dot_dimension_numbers<[1], [0], [0], [1], [0, 0, 1, 1], [], []>} : vector<128x32xf32>, vector<32x64xf32>, vector<128x64xf32> -> vector<128x64xf32>
    %c0_98 = arith.constant 0 : index
    %c0_99 = arith.constant 0 : index
    %88 = vector.load %arg7[%c0_98, %c0_99] : memref<1x64xf32, #tpu.memory_space<vmem>>, vector<1x64xf32>
    %89 = vector.broadcast %88 : vector<1x64xf32> to vector<128x64xf32>
    %90 = arith.addf %87, %89 : vector<128x64xf32>
    %91 = vector.shape_cast %90 : vector<128x64xf32> to vector<2x4x16x64xf32>
    %c0_100 = arith.constant 0 : index
    %c0_101 = arith.constant 0 : index
    %c0_102 = arith.constant 0 : index
    %c0_103 = arith.constant 0 : index
    %92 = vector.load %arg8[%c0_100, %c0_101, %c0_102, %c0_103] : memref<2x16x16x64xf32, #tpu.memory_space<vmem>>, vector<2x4x16x64xf32>
    tpu.vector_store %arg8[%c0_100, %c0_101, %c0_102, %c0_103], %91 {strides = array<i32>} : memref<2x16x16x64xf32, #tpu.memory_space<vmem>>, vector<2x4x16x64xf32>,
    %c0_104 = arith.constant 0 : index
    %c4_105 = arith.constant 4 : index
    %c7_106 = arith.constant 7 : index
    %c0_107 = arith.constant 0 : index
    %93 = vector.load %arg9[%c0_104, %c4_105, %c7_106, %c0_107] : memref<2x18x32x32xf32, #tpu.memory_space<vmem>>, vector<2x4x16x32xf32>
    %c0_108 = arith.constant 0 : index
    %c0_109 = arith.constant 0 : index
    %c0_110 = arith.constant 0 : index
    %c0_111 = arith.constant 0 : index
    %94 = vector.load %arg4[%c0_108, %c0_109, %c0_110, %c0_111] : memref<9x1x1x32xf32, #tpu.memory_space<vmem>>, vector<1x1x1x32xf32>
    %95 = vector.shape_cast %94 : vector<1x1x1x32xf32> to vector<1x32xf32>
    %96 = vector.shape_cast %95 : vector<1x32xf32> to vector<1x1x1x32xf32>
    %97 = vector.broadcast %96 : vector<1x1x1x32xf32> to vector<2x4x16x32xf32>
    %98 = arith.mulf %93, %97 : vector<2x4x16x32xf32>
    %c0_112 = arith.constant 0 : index
    %c4_113 = arith.constant 4 : index
    %c8_114 = arith.constant 8 : index
    %c0_115 = arith.constant 0 : index
    %99 = vector.load %arg9[%c0_112, %c4_113, %c8_114, %c0_115] : memref<2x18x32x32xf32, #tpu.memory_space<vmem>>, vector<2x4x16x32xf32>
    %c1_116 = arith.constant 1 : index
    %c0_117 = arith.constant 0 : index
    %c0_118 = arith.constant 0 : index
    %c0_119 = arith.constant 0 : index
    %100 = vector.load %arg4[%c1_116, %c0_117, %c0_118, %c0_119] : memref<9x1x1x32xf32, #tpu.memory_space<vmem>>, vector<1x1x1x32xf32>
    %101 = vector.shape_cast %100 : vector<1x1x1x32xf32> to vector<1x32xf32>
    %102 = vector.shape_cast %101 : vector<1x32xf32> to vector<1x1x1x32xf32>
    %103 = vector.broadcast %102 : vector<1x1x1x32xf32> to vector<2x4x16x32xf32>
    %104 = arith.mulf %99, %103 : vector<2x4x16x32xf32>
    %105 = arith.addf %98, %104 : vector<2x4x16x32xf32>
    %c0_120 = arith.constant 0 : index
    %c4_121 = arith.constant 4 : index
    %c9_122 = arith.constant 9 : index
    %c0_123 = arith.constant 0 : index
    %106 = vector.load %arg9[%c0_120, %c4_121, %c9_122, %c0_123] : memref<2x18x32x32xf32, #tpu.memory_space<vmem>>, vector<2x4x16x32xf32>
    %c2_124 = arith.constant 2 : index
    %c0_125 = arith.constant 0 : index
    %c0_126 = arith.constant 0 : index
    %c0_127 = arith.constant 0 : index
    %107 = vector.load %arg4[%c2_124, %c0_125, %c0_126, %c0_127] : memref<9x1x1x32xf32, #tpu.memory_space<vmem>>, vector<1x1x1x32xf32>
    %108 = vector.shape_cast %107 : vector<1x1x1x32xf32> to vector<1x32xf32>
    %109 = vector.shape_cast %108 : vector<1x32xf32> to vector<1x1x1x32xf32>
    %110 = vector.broadcast %109 : vector<1x1x1x32xf32> to vector<2x4x16x32xf32>
    %111 = arith.mulf %106, %110 : vector<2x4x16x32xf32>
    %112 = arith.addf %105, %111 : vector<2x4x16x32xf32>
    %c0_128 = arith.constant 0 : index
    %c5_129 = arith.constant 5 : index
    %c7_130 = arith.constant 7 : index
    %c0_131 = arith.constant 0 : index
    %113 = vector.load %arg9[%c0_128, %c5_129, %c7_130, %c0_131] : memref<2x18x32x32xf32, #tpu.memory_space<vmem>>, vector<2x4x16x32xf32>
    %c3_132 = arith.constant 3 : index
    %c0_133 = arith.constant 0 : index
    %c0_134 = arith.constant 0 : index
    %c0_135 = arith.constant 0 : index
    %114 = vector.load %arg4[%c3_132, %c0_133, %c0_134, %c0_135] : memref<9x1x1x32xf32, #tpu.memory_space<vmem>>, vector<1x1x1x32xf32>
    %115 = vector.shape_cast %114 : vector<1x1x1x32xf32> to vector<1x32xf32>
    %116 = vector.shape_cast %115 : vector<1x32xf32> to vector<1x1x1x32xf32>
    %117 = vector.broadcast %116 : vector<1x1x1x32xf32> to vector<2x4x16x32xf32>
    %118 = arith.mulf %113, %117 : vector<2x4x16x32xf32>
    %119 = arith.addf %112, %118 : vector<2x4x16x32xf32>
    %c0_136 = arith.constant 0 : index
    %c5_137 = arith.constant 5 : index
    %c8_138 = arith.constant 8 : index
    %c0_139 = arith.constant 0 : index
    %120 = vector.load %arg9[%c0_136, %c5_137, %c8_138, %c0_139] : memref<2x18x32x32xf32, #tpu.memory_space<vmem>>, vector<2x4x16x32xf32>
    %c4_140 = arith.constant 4 : index
    %c0_141 = arith.constant 0 : index
    %c0_142 = arith.constant 0 : index
    %c0_143 = arith.constant 0 : index
    %121 = vector.load %arg4[%c4_140, %c0_141, %c0_142, %c0_143] : memref<9x1x1x32xf32, #tpu.memory_space<vmem>>, vector<1x1x1x32xf32>
    %122 = vector.shape_cast %121 : vector<1x1x1x32xf32> to vector<1x32xf32>
    %123 = vector.shape_cast %122 : vector<1x32xf32> to vector<1x1x1x32xf32>
    %124 = vector.broadcast %123 : vector<1x1x1x32xf32> to vector<2x4x16x32xf32>
    %125 = arith.mulf %120, %124 : vector<2x4x16x32xf32>
    %126 = arith.addf %119, %125 : vector<2x4x16x32xf32>
    %c0_144 = arith.constant 0 : index
    %c5_145 = arith.constant 5 : index
    %c9_146 = arith.constant 9 : index
    %c0_147 = arith.constant 0 : index
    %127 = vector.load %arg9[%c0_144, %c5_145, %c9_146, %c0_147] : memref<2x18x32x32xf32, #tpu.memory_space<vmem>>, vector<2x4x16x32xf32>
    %c5_148 = arith.constant 5 : index
    %c0_149 = arith.constant 0 : index
    %c0_150 = arith.constant 0 : index
    %c0_151 = arith.constant 0 : index
    %128 = vector.load %arg4[%c5_148, %c0_149, %c0_150, %c0_151] : memref<9x1x1x32xf32, #tpu.memory_space<vmem>>, vector<1x1x1x32xf32>
    %129 = vector.shape_cast %128 : vector<1x1x1x32xf32> to vector<1x32xf32>
    %130 = vector.shape_cast %129 : vector<1x32xf32> to vector<1x1x1x32xf32>
    %131 = vector.broadcast %130 : vector<1x1x1x32xf32> to vector<2x4x16x32xf32>
    %132 = arith.mulf %127, %131 : vector<2x4x16x32xf32>
    %133 = arith.addf %126, %132 : vector<2x4x16x32xf32>
    %c0_152 = arith.constant 0 : index
    %c6_153 = arith.constant 6 : index
    %c7_154 = arith.constant 7 : index
    %c0_155 = arith.constant 0 : index
    %134 = vector.load %arg9[%c0_152, %c6_153, %c7_154, %c0_155] : memref<2x18x32x32xf32, #tpu.memory_space<vmem>>, vector<2x4x16x32xf32>
    %c6_156 = arith.constant 6 : index
    %c0_157 = arith.constant 0 : index
    %c0_158 = arith.constant 0 : index
    %c0_159 = arith.constant 0 : index
    %135 = vector.load %arg4[%c6_156, %c0_157, %c0_158, %c0_159] : memref<9x1x1x32xf32, #tpu.memory_space<vmem>>, vector<1x1x1x32xf32>
    %136 = vector.shape_cast %135 : vector<1x1x1x32xf32> to vector<1x32xf32>
    %137 = vector.shape_cast %136 : vector<1x32xf32> to vector<1x1x1x32xf32>
    %138 = vector.broadcast %137 : vector<1x1x1x32xf32> to vector<2x4x16x32xf32>
    %139 = arith.mulf %134, %138 : vector<2x4x16x32xf32>
    %140 = arith.addf %133, %139 : vector<2x4x16x32xf32>
    %c0_160 = arith.constant 0 : index
    %c6_161 = arith.constant 6 : index
    %c8_162 = arith.constant 8 : index
    %c0_163 = arith.constant 0 : index
    %141 = vector.load %arg9[%c0_160, %c6_161, %c8_162, %c0_163] : memref<2x18x32x32xf32, #tpu.memory_space<vmem>>, vector<2x4x16x32xf32>
    %c7_164 = arith.constant 7 : index
    %c0_165 = arith.constant 0 : index
    %c0_166 = arith.constant 0 : index
    %c0_167 = arith.constant 0 : index
    %142 = vector.load %arg4[%c7_164, %c0_165, %c0_166, %c0_167] : memref<9x1x1x32xf32, #tpu.memory_space<vmem>>, vector<1x1x1x32xf32>
    %143 = vector.shape_cast %142 : vector<1x1x1x32xf32> to vector<1x32xf32>
    %144 = vector.shape_cast %143 : vector<1x32xf32> to vector<1x1x1x32xf32>
    %145 = vector.broadcast %144 : vector<1x1x1x32xf32> to vector<2x4x16x32xf32>
    %146 = arith.mulf %141, %145 : vector<2x4x16x32xf32>
    %147 = arith.addf %140, %146 : vector<2x4x16x32xf32>
    %c0_168 = arith.constant 0 : index
    %c6_169 = arith.constant 6 : index
    %c9_170 = arith.constant 9 : index
    %c0_171 = arith.constant 0 : index
    %148 = vector.load %arg9[%c0_168, %c6_169, %c9_170, %c0_171] : memref<2x18x32x32xf32, #tpu.memory_space<vmem>>, vector<2x4x16x32xf32>
    %c8_172 = arith.constant 8 : index
    %c0_173 = arith.constant 0 : index
    %c0_174 = arith.constant 0 : index
    %c0_175 = arith.constant 0 : index
    %149 = vector.load %arg4[%c8_172, %c0_173, %c0_174, %c0_175] : memref<9x1x1x32xf32, #tpu.memory_space<vmem>>, vector<1x1x1x32xf32>
    %150 = vector.shape_cast %149 : vector<1x1x1x32xf32> to vector<1x32xf32>
    %151 = vector.shape_cast %150 : vector<1x32xf32> to vector<1x1x1x32xf32>
    %152 = vector.broadcast %151 : vector<1x1x1x32xf32> to vector<2x4x16x32xf32>
    %153 = arith.mulf %148, %152 : vector<2x4x16x32xf32>
    %154 = arith.addf %147, %153 : vector<2x4x16x32xf32>
    %c0_176 = arith.constant 0 : index
    %c0_177 = arith.constant 0 : index
    %c0_178 = arith.constant 0 : index
    %155 = vector.load %arg5[%c0_176, %c0_177, %c0_178] : memref<1x1x32xf32, #tpu.memory_space<vmem>>, vector<1x1x32xf32>
    %156 = vector.shape_cast %155 : vector<1x1x32xf32> to vector<1x1x1x32xf32>
    %157 = vector.broadcast %156 : vector<1x1x1x32xf32> to vector<2x4x16x32xf32>
    %158 = arith.addf %154, %157 : vector<2x4x16x32xf32>
    %cst_179 = arith.constant 0.000000e+00 : f32
    %159 = vector.broadcast %cst_179 : f32 to vector<2x4x16x32xf32>
    %160 = arith.maximumf %158, %159 : vector<2x4x16x32xf32>
    %161 = vector.shape_cast %160 : vector<2x4x16x32xf32> to vector<128x32xf32>
    %c0_180 = arith.constant 0 : index
    %c0_181 = arith.constant 0 : index
    %162 = vector.load %arg6[%c0_180, %c0_181] : memref<32x64xf32, #tpu.memory_space<vmem>>, vector<32x64xf32>
    %cst_182 = arith.constant dense<0.000000e+00> : vector<128x64xf32>
    %163 = tpu.matmul %161, %162, %cst_182 {dimension_numbers = #tpu.dot_dimension_numbers<[1], [0], [0], [1], [0, 0, 1, 1], [], []>} : vector<128x32xf32>, vector<32x64xf32>, vector<128x64xf32> -> vector<128x64xf32>
    %c0_183 = arith.constant 0 : index
    %c0_184 = arith.constant 0 : index
    %164 = vector.load %arg7[%c0_183, %c0_184] : memref<1x64xf32, #tpu.memory_space<vmem>>, vector<1x64xf32>
    %165 = vector.broadcast %164 : vector<1x64xf32> to vector<128x64xf32>
    %166 = arith.addf %163, %165 : vector<128x64xf32>
    %167 = vector.shape_cast %166 : vector<128x64xf32> to vector<2x4x16x64xf32>
    %c0_185 = arith.constant 0 : index
    %c4_186 = arith.constant 4 : index
    %c0_187 = arith.constant 0 : index
    %c0_188 = arith.constant 0 : index
    %168 = vector.load %arg8[%c0_185, %c4_186, %c0_187, %c0_188] : memref<2x16x16x64xf32, #tpu.memory_space<vmem>>, vector<2x4x16x64xf32>
    tpu.vector_store %arg8[%c0_185, %c4_186, %c0_187, %c0_188], %167 {strides = array<i32>} : memref<2x16x16x64xf32, #tpu.memory_space<vmem>>, vector<2x4x16x64xf32>,
    %c0_189 = arith.constant 0 : index
    %c8_190 = arith.constant 8 : index
    %c7_191 = arith.constant 7 : index
    %c0_192 = arith.constant 0 : index
    %169 = vector.load %arg9[%c0_189, %c8_190, %c7_191, %c0_192] : memref<2x18x32x32xf32, #tpu.memory_space<vmem>>, vector<2x4x16x32xf32>
    %c0_193 = arith.constant 0 : index
    %c0_194 = arith.constant 0 : index
    %c0_195 = arith.constant 0 : index
    %c0_196 = arith.constant 0 : index
    %170 = vector.load %arg4[%c0_193, %c0_194, %c0_195, %c0_196] : memref<9x1x1x32xf32, #tpu.memory_space<vmem>>, vector<1x1x1x32xf32>
    %171 = vector.shape_cast %170 : vector<1x1x1x32xf32> to vector<1x32xf32>
    %172 = vector.shape_cast %171 : vector<1x32xf32> to vector<1x1x1x32xf32>
    %173 = vector.broadcast %172 : vector<1x1x1x32xf32> to vector<2x4x16x32xf32>
    %174 = arith.mulf %169, %173 : vector<2x4x16x32xf32>
    %c0_197 = arith.constant 0 : index
    %c8_198 = arith.constant 8 : index
    %c8_199 = arith.constant 8 : index
    %c0_200 = arith.constant 0 : index
    %175 = vector.load %arg9[%c0_197, %c8_198, %c8_199, %c0_200] : memref<2x18x32x32xf32, #tpu.memory_space<vmem>>, vector<2x4x16x32xf32>
    %c1_201 = arith.constant 1 : index
    %c0_202 = arith.constant 0 : index
    %c0_203 = arith.constant 0 : index
    %c0_204 = arith.constant 0 : index
    %176 = vector.load %arg4[%c1_201, %c0_202, %c0_203, %c0_204] : memref<9x1x1x32xf32, #tpu.memory_space<vmem>>, vector<1x1x1x32xf32>
    %177 = vector.shape_cast %176 : vector<1x1x1x32xf32> to vector<1x32xf32>
    %178 = vector.shape_cast %177 : vector<1x32xf32> to vector<1x1x1x32xf32>
    %179 = vector.broadcast %178 : vector<1x1x1x32xf32> to vector<2x4x16x32xf32>
    %180 = arith.mulf %175, %179 : vector<2x4x16x32xf32>
    %181 = arith.addf %174, %180 : vector<2x4x16x32xf32>
    %c0_205 = arith.constant 0 : index
    %c8_206 = arith.constant 8 : index
    %c9_207 = arith.constant 9 : index
    %c0_208 = arith.constant 0 : index
    %182 = vector.load %arg9[%c0_205, %c8_206, %c9_207, %c0_208] : memref<2x18x32x32xf32, #tpu.memory_space<vmem>>, vector<2x4x16x32xf32>
    %c2_209 = arith.constant 2 : index
    %c0_210 = arith.constant 0 : index
    %c0_211 = arith.constant 0 : index
    %c0_212 = arith.constant 0 : index
    %183 = vector.load %arg4[%c2_209, %c0_210, %c0_211, %c0_212] : memref<9x1x1x32xf32, #tpu.memory_space<vmem>>, vector<1x1x1x32xf32>
    %184 = vector.shape_cast %183 : vector<1x1x1x32xf32> to vector<1x32xf32>
    %185 = vector.shape_cast %184 : vector<1x32xf32> to vector<1x1x1x32xf32>
    %186 = vector.broadcast %185 : vector<1x1x1x32xf32> to vector<2x4x16x32xf32>
    %187 = arith.mulf %182, %186 : vector<2x4x16x32xf32>
    %188 = arith.addf %181, %187 : vector<2x4x16x32xf32>
    %c0_213 = arith.constant 0 : index
    %c9_214 = arith.constant 9 : index
    %c7_215 = arith.constant 7 : index
    %c0_216 = arith.constant 0 : index
    %189 = vector.load %arg9[%c0_213, %c9_214, %c7_215, %c0_216] : memref<2x18x32x32xf32, #tpu.memory_space<vmem>>, vector<2x4x16x32xf32>
    %c3_217 = arith.constant 3 : index
    %c0_218 = arith.constant 0 : index
    %c0_219 = arith.constant 0 : index
    %c0_220 = arith.constant 0 : index
    %190 = vector.load %arg4[%c3_217, %c0_218, %c0_219, %c0_220] : memref<9x1x1x32xf32, #tpu.memory_space<vmem>>, vector<1x1x1x32xf32>
    %191 = vector.shape_cast %190 : vector<1x1x1x32xf32> to vector<1x32xf32>
    %192 = vector.shape_cast %191 : vector<1x32xf32> to vector<1x1x1x32xf32>
    %193 = vector.broadcast %192 : vector<1x1x1x32xf32> to vector<2x4x16x32xf32>
    %194 = arith.mulf %189, %193 : vector<2x4x16x32xf32>
    %195 = arith.addf %188, %194 : vector<2x4x16x32xf32>
    %c0_221 = arith.constant 0 : index
    %c9_222 = arith.constant 9 : index
    %c8_223 = arith.constant 8 : index
    %c0_224 = arith.constant 0 : index
    %196 = vector.load %arg9[%c0_221, %c9_222, %c8_223, %c0_224] : memref<2x18x32x32xf32, #tpu.memory_space<vmem>>, vector<2x4x16x32xf32>
    %c4_225 = arith.constant 4 : index
    %c0_226 = arith.constant 0 : index
    %c0_227 = arith.constant 0 : index
    %c0_228 = arith.constant 0 : index
    %197 = vector.load %arg4[%c4_225, %c0_226, %c0_227, %c0_228] : memref<9x1x1x32xf32, #tpu.memory_space<vmem>>, vector<1x1x1x32xf32>
    %198 = vector.shape_cast %197 : vector<1x1x1x32xf32> to vector<1x32xf32>
    %199 = vector.shape_cast %198 : vector<1x32xf32> to vector<1x1x1x32xf32>
    %200 = vector.broadcast %199 : vector<1x1x1x32xf32> to vector<2x4x16x32xf32>
    %201 = arith.mulf %196, %200 : vector<2x4x16x32xf32>
    %202 = arith.addf %195, %201 : vector<2x4x16x32xf32>
    %c0_229 = arith.constant 0 : index
    %c9_230 = arith.constant 9 : index
    %c9_231 = arith.constant 9 : index
    %c0_232 = arith.constant 0 : index
    %203 = vector.load %arg9[%c0_229, %c9_230, %c9_231, %c0_232] : memref<2x18x32x32xf32, #tpu.memory_space<vmem>>, vector<2x4x16x32xf32>
    %c5_233 = arith.constant 5 : index
    %c0_234 = arith.constant 0 : index
    %c0_235 = arith.constant 0 : index
    %c0_236 = arith.constant 0 : index
    %204 = vector.load %arg4[%c5_233, %c0_234, %c0_235, %c0_236] : memref<9x1x1x32xf32, #tpu.memory_space<vmem>>, vector<1x1x1x32xf32>
    %205 = vector.shape_cast %204 : vector<1x1x1x32xf32> to vector<1x32xf32>
    %206 = vector.shape_cast %205 : vector<1x32xf32> to vector<1x1x1x32xf32>
    %207 = vector.broadcast %206 : vector<1x1x1x32xf32> to vector<2x4x16x32xf32>
    %208 = arith.mulf %203, %207 : vector<2x4x16x32xf32>
    %209 = arith.addf %202, %208 : vector<2x4x16x32xf32>
    %c0_237 = arith.constant 0 : index
    %c10 = arith.constant 10 : index
    %c7_238 = arith.constant 7 : index
    %c0_239 = arith.constant 0 : index
    %210 = vector.load %arg9[%c0_237, %c10, %c7_238, %c0_239] : memref<2x18x32x32xf32, #tpu.memory_space<vmem>>, vector<2x4x16x32xf32>
    %c6_240 = arith.constant 6 : index
    %c0_241 = arith.constant 0 : index
    %c0_242 = arith.constant 0 : index
    %c0_243 = arith.constant 0 : index
    %211 = vector.load %arg4[%c6_240, %c0_241, %c0_242, %c0_243] : memref<9x1x1x32xf32, #tpu.memory_space<vmem>>, vector<1x1x1x32xf32>
    %212 = vector.shape_cast %211 : vector<1x1x1x32xf32> to vector<1x32xf32>
    %213 = vector.shape_cast %212 : vector<1x32xf32> to vector<1x1x1x32xf32>
    %214 = vector.broadcast %213 : vector<1x1x1x32xf32> to vector<2x4x16x32xf32>
    %215 = arith.mulf %210, %214 : vector<2x4x16x32xf32>
    %216 = arith.addf %209, %215 : vector<2x4x16x32xf32>
    %c0_244 = arith.constant 0 : index
    %c10_245 = arith.constant 10 : index
    %c8_246 = arith.constant 8 : index
    %c0_247 = arith.constant 0 : index
    %217 = vector.load %arg9[%c0_244, %c10_245, %c8_246, %c0_247] : memref<2x18x32x32xf32, #tpu.memory_space<vmem>>, vector<2x4x16x32xf32>
    %c7_248 = arith.constant 7 : index
    %c0_249 = arith.constant 0 : index
    %c0_250 = arith.constant 0 : index
    %c0_251 = arith.constant 0 : index
    %218 = vector.load %arg4[%c7_248, %c0_249, %c0_250, %c0_251] : memref<9x1x1x32xf32, #tpu.memory_space<vmem>>, vector<1x1x1x32xf32>
    %219 = vector.shape_cast %218 : vector<1x1x1x32xf32> to vector<1x32xf32>
    %220 = vector.shape_cast %219 : vector<1x32xf32> to vector<1x1x1x32xf32>
    %221 = vector.broadcast %220 : vector<1x1x1x32xf32> to vector<2x4x16x32xf32>
    %222 = arith.mulf %217, %221 : vector<2x4x16x32xf32>
    %223 = arith.addf %216, %222 : vector<2x4x16x32xf32>
    %c0_252 = arith.constant 0 : index
    %c10_253 = arith.constant 10 : index
    %c9_254 = arith.constant 9 : index
    %c0_255 = arith.constant 0 : index
    %224 = vector.load %arg9[%c0_252, %c10_253, %c9_254, %c0_255] : memref<2x18x32x32xf32, #tpu.memory_space<vmem>>, vector<2x4x16x32xf32>
    %c8_256 = arith.constant 8 : index
    %c0_257 = arith.constant 0 : index
    %c0_258 = arith.constant 0 : index
    %c0_259 = arith.constant 0 : index
    %225 = vector.load %arg4[%c8_256, %c0_257, %c0_258, %c0_259] : memref<9x1x1x32xf32, #tpu.memory_space<vmem>>, vector<1x1x1x32xf32>
    %226 = vector.shape_cast %225 : vector<1x1x1x32xf32> to vector<1x32xf32>
    %227 = vector.shape_cast %226 : vector<1x32xf32> to vector<1x1x1x32xf32>
    %228 = vector.broadcast %227 : vector<1x1x1x32xf32> to vector<2x4x16x32xf32>
    %229 = arith.mulf %224, %228 : vector<2x4x16x32xf32>
    %230 = arith.addf %223, %229 : vector<2x4x16x32xf32>
    %c0_260 = arith.constant 0 : index
    %c0_261 = arith.constant 0 : index
    %c0_262 = arith.constant 0 : index
    %231 = vector.load %arg5[%c0_260, %c0_261, %c0_262] : memref<1x1x32xf32, #tpu.memory_space<vmem>>, vector<1x1x32xf32>
    %232 = vector.shape_cast %231 : vector<1x1x32xf32> to vector<1x1x1x32xf32>
    %233 = vector.broadcast %232 : vector<1x1x1x32xf32> to vector<2x4x16x32xf32>
    %234 = arith.addf %230, %233 : vector<2x4x16x32xf32>
    %cst_263 = arith.constant 0.000000e+00 : f32
    %235 = vector.broadcast %cst_263 : f32 to vector<2x4x16x32xf32>
    %236 = arith.maximumf %234, %235 : vector<2x4x16x32xf32>
    %237 = vector.shape_cast %236 : vector<2x4x16x32xf32> to vector<128x32xf32>
    %c0_264 = arith.constant 0 : index
    %c0_265 = arith.constant 0 : index
    %238 = vector.load %arg6[%c0_264, %c0_265] : memref<32x64xf32, #tpu.memory_space<vmem>>, vector<32x64xf32>
    %cst_266 = arith.constant dense<0.000000e+00> : vector<128x64xf32>
    %239 = tpu.matmul %237, %238, %cst_266 {dimension_numbers = #tpu.dot_dimension_numbers<[1], [0], [0], [1], [0, 0, 1, 1], [], []>} : vector<128x32xf32>, vector<32x64xf32>, vector<128x64xf32> -> vector<128x64xf32>
    %c0_267 = arith.constant 0 : index
    %c0_268 = arith.constant 0 : index
    %240 = vector.load %arg7[%c0_267, %c0_268] : memref<1x64xf32, #tpu.memory_space<vmem>>, vector<1x64xf32>
    %241 = vector.broadcast %240 : vector<1x64xf32> to vector<128x64xf32>
    %242 = arith.addf %239, %241 : vector<128x64xf32>
    %243 = vector.shape_cast %242 : vector<128x64xf32> to vector<2x4x16x64xf32>
    %c0_269 = arith.constant 0 : index
    %c8_270 = arith.constant 8 : index
    %c0_271 = arith.constant 0 : index
    %c0_272 = arith.constant 0 : index
    %244 = vector.load %arg8[%c0_269, %c8_270, %c0_271, %c0_272] : memref<2x16x16x64xf32, #tpu.memory_space<vmem>>, vector<2x4x16x64xf32>
    tpu.vector_store %arg8[%c0_269, %c8_270, %c0_271, %c0_272], %243 {strides = array<i32>} : memref<2x16x16x64xf32, #tpu.memory_space<vmem>>, vector<2x4x16x64xf32>,
    %c0_273 = arith.constant 0 : index
    %c12 = arith.constant 12 : index
    %c7_274 = arith.constant 7 : index
    %c0_275 = arith.constant 0 : index
    %245 = vector.load %arg9[%c0_273, %c12, %c7_274, %c0_275] : memref<2x18x32x32xf32, #tpu.memory_space<vmem>>, vector<2x4x16x32xf32>
    %c0_276 = arith.constant 0 : index
    %c0_277 = arith.constant 0 : index
    %c0_278 = arith.constant 0 : index
    %c0_279 = arith.constant 0 : index
    %246 = vector.load %arg4[%c0_276, %c0_277, %c0_278, %c0_279] : memref<9x1x1x32xf32, #tpu.memory_space<vmem>>, vector<1x1x1x32xf32>
    %247 = vector.shape_cast %246 : vector<1x1x1x32xf32> to vector<1x32xf32>
    %248 = vector.shape_cast %247 : vector<1x32xf32> to vector<1x1x1x32xf32>
    %249 = vector.broadcast %248 : vector<1x1x1x32xf32> to vector<2x4x16x32xf32>
    %250 = arith.mulf %245, %249 : vector<2x4x16x32xf32>
    %c0_280 = arith.constant 0 : index
    %c12_281 = arith.constant 12 : index
    %c8_282 = arith.constant 8 : index
    %c0_283 = arith.constant 0 : index
    %251 = vector.load %arg9[%c0_280, %c12_281, %c8_282, %c0_283] : memref<2x18x32x32xf32, #tpu.memory_space<vmem>>, vector<2x4x16x32xf32>
    %c1_284 = arith.constant 1 : index
    %c0_285 = arith.constant 0 : index
    %c0_286 = arith.constant 0 : index
    %c0_287 = arith.constant 0 : index
    %252 = vector.load %arg4[%c1_284, %c0_285, %c0_286, %c0_287] : memref<9x1x1x32xf32, #tpu.memory_space<vmem>>, vector<1x1x1x32xf32>
    %253 = vector.shape_cast %252 : vector<1x1x1x32xf32> to vector<1x32xf32>
    %254 = vector.shape_cast %253 : vector<1x32xf32> to vector<1x1x1x32xf32>
    %255 = vector.broadcast %254 : vector<1x1x1x32xf32> to vector<2x4x16x32xf32>
    %256 = arith.mulf %251, %255 : vector<2x4x16x32xf32>
    %257 = arith.addf %250, %256 : vector<2x4x16x32xf32>
    %c0_288 = arith.constant 0 : index
    %c12_289 = arith.constant 12 : index
    %c9_290 = arith.constant 9 : index
    %c0_291 = arith.constant 0 : index
    %258 = vector.load %arg9[%c0_288, %c12_289, %c9_290, %c0_291] : memref<2x18x32x32xf32, #tpu.memory_space<vmem>>, vector<2x4x16x32xf32>
    %c2_292 = arith.constant 2 : index
    %c0_293 = arith.constant 0 : index
    %c0_294 = arith.constant 0 : index
    %c0_295 = arith.constant 0 : index
    %259 = vector.load %arg4[%c2_292, %c0_293, %c0_294, %c0_295] : memref<9x1x1x32xf32, #tpu.memory_space<vmem>>, vector<1x1x1x32xf32>
    %260 = vector.shape_cast %259 : vector<1x1x1x32xf32> to vector<1x32xf32>
    %261 = vector.shape_cast %260 : vector<1x32xf32> to vector<1x1x1x32xf32>
    %262 = vector.broadcast %261 : vector<1x1x1x32xf32> to vector<2x4x16x32xf32>
    %263 = arith.mulf %258, %262 : vector<2x4x16x32xf32>
    %264 = arith.addf %257, %263 : vector<2x4x16x32xf32>
    %c0_296 = arith.constant 0 : index
    %c13 = arith.constant 13 : index
    %c7_297 = arith.constant 7 : index
    %c0_298 = arith.constant 0 : index
    %265 = vector.load %arg9[%c0_296, %c13, %c7_297, %c0_298] : memref<2x18x32x32xf32, #tpu.memory_space<vmem>>, vector<2x4x16x32xf32>
    %c3_299 = arith.constant 3 : index
    %c0_300 = arith.constant 0 : index
    %c0_301 = arith.constant 0 : index
    %c0_302 = arith.constant 0 : index
    %266 = vector.load %arg4[%c3_299, %c0_300, %c0_301, %c0_302] : memref<9x1x1x32xf32, #tpu.memory_space<vmem>>, vector<1x1x1x32xf32>
    %267 = vector.shape_cast %266 : vector<1x1x1x32xf32> to vector<1x32xf32>
    %268 = vector.shape_cast %267 : vector<1x32xf32> to vector<1x1x1x32xf32>
    %269 = vector.broadcast %268 : vector<1x1x1x32xf32> to vector<2x4x16x32xf32>
    %270 = arith.mulf %265, %269 : vector<2x4x16x32xf32>
    %271 = arith.addf %264, %270 : vector<2x4x16x32xf32>
    %c0_303 = arith.constant 0 : index
    %c13_304 = arith.constant 13 : index
    %c8_305 = arith.constant 8 : index
    %c0_306 = arith.constant 0 : index
    %272 = vector.load %arg9[%c0_303, %c13_304, %c8_305, %c0_306] : memref<2x18x32x32xf32, #tpu.memory_space<vmem>>, vector<2x4x16x32xf32>
    %c4_307 = arith.constant 4 : index
    %c0_308 = arith.constant 0 : index
    %c0_309 = arith.constant 0 : index
    %c0_310 = arith.constant 0 : index
    %273 = vector.load %arg4[%c4_307, %c0_308, %c0_309, %c0_310] : memref<9x1x1x32xf32, #tpu.memory_space<vmem>>, vector<1x1x1x32xf32>
    %274 = vector.shape_cast %273 : vector<1x1x1x32xf32> to vector<1x32xf32>
    %275 = vector.shape_cast %274 : vector<1x32xf32> to vector<1x1x1x32xf32>
    %276 = vector.broadcast %275 : vector<1x1x1x32xf32> to vector<2x4x16x32xf32>
    %277 = arith.mulf %272, %276 : vector<2x4x16x32xf32>
    %278 = arith.addf %271, %277 : vector<2x4x16x32xf32>
    %c0_311 = arith.constant 0 : index
    %c13_312 = arith.constant 13 : index
    %c9_313 = arith.constant 9 : index
    %c0_314 = arith.constant 0 : index
    %279 = vector.load %arg9[%c0_311, %c13_312, %c9_313, %c0_314] : memref<2x18x32x32xf32, #tpu.memory_space<vmem>>, vector<2x4x16x32xf32>
    %c5_315 = arith.constant 5 : index
    %c0_316 = arith.constant 0 : index
    %c0_317 = arith.constant 0 : index
    %c0_318 = arith.constant 0 : index
    %280 = vector.load %arg4[%c5_315, %c0_316, %c0_317, %c0_318] : memref<9x1x1x32xf32, #tpu.memory_space<vmem>>, vector<1x1x1x32xf32>
    %281 = vector.shape_cast %280 : vector<1x1x1x32xf32> to vector<1x32xf32>
    %282 = vector.shape_cast %281 : vector<1x32xf32> to vector<1x1x1x32xf32>
    %283 = vector.broadcast %282 : vector<1x1x1x32xf32> to vector<2x4x16x32xf32>
    %284 = arith.mulf %279, %283 : vector<2x4x16x32xf32>
    %285 = arith.addf %278, %284 : vector<2x4x16x32xf32>
    %c0_319 = arith.constant 0 : index
    %c14 = arith.constant 14 : index
    %c7_320 = arith.constant 7 : index
    %c0_321 = arith.constant 0 : index
    %286 = vector.load %arg9[%c0_319, %c14, %c7_320, %c0_321] : memref<2x18x32x32xf32, #tpu.memory_space<vmem>>, vector<2x4x16x32xf32>
    %c6_322 = arith.constant 6 : index
    %c0_323 = arith.constant 0 : index
    %c0_324 = arith.constant 0 : index
    %c0_325 = arith.constant 0 : index
    %287 = vector.load %arg4[%c6_322, %c0_323, %c0_324, %c0_325] : memref<9x1x1x32xf32, #tpu.memory_space<vmem>>, vector<1x1x1x32xf32>
    %288 = vector.shape_cast %287 : vector<1x1x1x32xf32> to vector<1x32xf32>
    %289 = vector.shape_cast %288 : vector<1x32xf32> to vector<1x1x1x32xf32>
    %290 = vector.broadcast %289 : vector<1x1x1x32xf32> to vector<2x4x16x32xf32>
    %291 = arith.mulf %286, %290 : vector<2x4x16x32xf32>
    %292 = arith.addf %285, %291 : vector<2x4x16x32xf32>
    %c0_326 = arith.constant 0 : index
    %c14_327 = arith.constant 14 : index
    %c8_328 = arith.constant 8 : index
    %c0_329 = arith.constant 0 : index
    %293 = vector.load %arg9[%c0_326, %c14_327, %c8_328, %c0_329] : memref<2x18x32x32xf32, #tpu.memory_space<vmem>>, vector<2x4x16x32xf32>
    %c7_330 = arith.constant 7 : index
    %c0_331 = arith.constant 0 : index
    %c0_332 = arith.constant 0 : index
    %c0_333 = arith.constant 0 : index
    %294 = vector.load %arg4[%c7_330, %c0_331, %c0_332, %c0_333] : memref<9x1x1x32xf32, #tpu.memory_space<vmem>>, vector<1x1x1x32xf32>
    %295 = vector.shape_cast %294 : vector<1x1x1x32xf32> to vector<1x32xf32>
    %296 = vector.shape_cast %295 : vector<1x32xf32> to vector<1x1x1x32xf32>
    %297 = vector.broadcast %296 : vector<1x1x1x32xf32> to vector<2x4x16x32xf32>
    %298 = arith.mulf %293, %297 : vector<2x4x16x32xf32>
    %299 = arith.addf %292, %298 : vector<2x4x16x32xf32>
    %c0_334 = arith.constant 0 : index
    %c14_335 = arith.constant 14 : index
    %c9_336 = arith.constant 9 : index
    %c0_337 = arith.constant 0 : index
    %300 = vector.load %arg9[%c0_334, %c14_335, %c9_336, %c0_337] : memref<2x18x32x32xf32, #tpu.memory_space<vmem>>, vector<2x4x16x32xf32>
    %c8_338 = arith.constant 8 : index
    %c0_339 = arith.constant 0 : index
    %c0_340 = arith.constant 0 : index
    %c0_341 = arith.constant 0 : index
    %301 = vector.load %arg4[%c8_338, %c0_339, %c0_340, %c0_341] : memref<9x1x1x32xf32, #tpu.memory_space<vmem>>, vector<1x1x1x32xf32>
    %302 = vector.shape_cast %301 : vector<1x1x1x32xf32> to vector<1x32xf32>
    %303 = vector.shape_cast %302 : vector<1x32xf32> to vector<1x1x1x32xf32>
    %304 = vector.broadcast %303 : vector<1x1x1x32xf32> to vector<2x4x16x32xf32>
    %305 = arith.mulf %300, %304 : vector<2x4x16x32xf32>
    %306 = arith.addf %299, %305 : vector<2x4x16x32xf32>
    %c0_342 = arith.constant 0 : index
    %c0_343 = arith.constant 0 : index
    %c0_344 = arith.constant 0 : index
    %307 = vector.load %arg5[%c0_342, %c0_343, %c0_344] : memref<1x1x32xf32, #tpu.memory_space<vmem>>, vector<1x1x32xf32>
    %308 = vector.shape_cast %307 : vector<1x1x32xf32> to vector<1x1x1x32xf32>
    %309 = vector.broadcast %308 : vector<1x1x1x32xf32> to vector<2x4x16x32xf32>
    %310 = arith.addf %306, %309 : vector<2x4x16x32xf32>
    %cst_345 = arith.constant 0.000000e+00 : f32
    %311 = vector.broadcast %cst_345 : f32 to vector<2x4x16x32xf32>
    %312 = arith.maximumf %310, %311 : vector<2x4x16x32xf32>
    %313 = vector.shape_cast %312 : vector<2x4x16x32xf32> to vector<128x32xf32>
    %c0_346 = arith.constant 0 : index
    %c0_347 = arith.constant 0 : index
    %314 = vector.load %arg6[%c0_346, %c0_347] : memref<32x64xf32, #tpu.memory_space<vmem>>, vector<32x64xf32>
    %cst_348 = arith.constant dense<0.000000e+00> : vector<128x64xf32>
    %315 = tpu.matmul %313, %314, %cst_348 {dimension_numbers = #tpu.dot_dimension_numbers<[1], [0], [0], [1], [0, 0, 1, 1], [], []>} : vector<128x32xf32>, vector<32x64xf32>, vector<128x64xf32> -> vector<128x64xf32>
    %c0_349 = arith.constant 0 : index
    %c0_350 = arith.constant 0 : index
    %316 = vector.load %arg7[%c0_349, %c0_350] : memref<1x64xf32, #tpu.memory_space<vmem>>, vector<1x64xf32>
    %317 = vector.broadcast %316 : vector<1x64xf32> to vector<128x64xf32>
    %318 = arith.addf %315, %317 : vector<128x64xf32>
    %319 = vector.shape_cast %318 : vector<128x64xf32> to vector<2x4x16x64xf32>
    %c0_351 = arith.constant 0 : index
    %c12_352 = arith.constant 12 : index
    %c0_353 = arith.constant 0 : index
    %c0_354 = arith.constant 0 : index
    %320 = vector.load %arg8[%c0_351, %c12_352, %c0_353, %c0_354] : memref<2x16x16x64xf32, #tpu.memory_space<vmem>>, vector<2x4x16x64xf32>
    tpu.vector_store %arg8[%c0_351, %c12_352, %c0_353, %c0_354], %319 {strides = array<i32>} : memref<2x16x16x64xf32, #tpu.memory_space<vmem>>, vector<2x4x16x64xf32>,
    return
  }
  func.func @transform_0(%arg0: i32) -> (i32, i32, i32, i32) {
    %c0_i32 = arith.constant 0 : i32
    %c0_i32_0 = arith.constant 0 : i32
    %c0_i32_1 = arith.constant 0 : i32
    %c0_i32_2 = arith.constant 0 : i32
    return %arg0, %c0_i32, %c0_i32_0, %c0_i32_1 : i32, i32, i32, i32
  }
  func.func @transform_1(%arg0: i32) -> (i32, i32) {
    %c0_i32 = arith.constant 0 : i32
    %c0_i32_0 = arith.constant 0 : i32
    %c0_i32_1 = arith.constant 0 : i32
    return %c0_i32, %c0_i32_0 : i32, i32
  }
  func.func @transform_2(%arg0: i32) -> (i32, i32) {
    %c0_i32 = arith.constant 0 : i32
    %c0_i32_0 = arith.constant 0 : i32
    %c0_i32_1 = arith.constant 0 : i32
    return %c0_i32, %c0_i32_0 : i32, i32
  }
  func.func @transform_3(%arg0: i32) -> (i32, i32, i32, i32) {
    %c0_i32 = arith.constant 0 : i32
    %c0_i32_0 = arith.constant 0 : i32
    %c0_i32_1 = arith.constant 0 : i32
    %c0_i32_2 = arith.constant 0 : i32
    %c0_i32_3 = arith.constant 0 : i32
    return %c0_i32, %c0_i32_0, %c0_i32_1, %c0_i32_2 : i32, i32, i32, i32
  }
  func.func @transform_4(%arg0: i32) -> (i32, i32, i32) {
    %c0_i32 = arith.constant 0 : i32
    %c0_i32_0 = arith.constant 0 : i32
    %c0_i32_1 = arith.constant 0 : i32
    %c0_i32_2 = arith.constant 0 : i32
    return %c0_i32, %c0_i32_0, %c0_i32_1 : i32, i32, i32
  }
  func.func @transform_5(%arg0: i32) -> (i32, i32) {
    %c0_i32 = arith.constant 0 : i32
    %c0_i32_0 = arith.constant 0 : i32
    %c0_i32_1 = arith.constant 0 : i32
    return %c0_i32, %c0_i32_0 : i32, i32
  }
  func.func @transform_6(%arg0: i32) -> (i32, i32) {
    %c0_i32 = arith.constant 0 : i32
    %c0_i32_0 = arith.constant 0 : i32
    %c0_i32_1 = arith.constant 0 : i32
    return %c0_i32, %c0_i32_0 : i32, i32
  }
  func.func @transform_7(%arg0: i32) -> (i32, i32, i32, i32) {
    %c0_i32 = arith.constant 0 : i32
    %c0_i32_0 = arith.constant 0 : i32
    %c0_i32_1 = arith.constant 0 : i32
    %c0_i32_2 = arith.constant 0 : i32
    return %arg0, %c0_i32, %c0_i32_0, %c0_i32_1 : i32, i32, i32, i32
  }
}

</mosaic_0001>

<llo_original>
// kernel: tpu_custom_call.1
$region0: #{tpu_custom_call.1}
  #allocation0 [shape = 'u32[]', space=smem, size = 0x4, offset = 0x4, fixed_abs, tag = 'smem constant byte address 0x4 - core index']
  #allocation1 [shape = 'u32[144,128]{1,0:T(1,128)}', space=vmem, size = 0x12000, scoped, tag = 'internal scratch']
  #allocation2 [shape = 'f32[2,18,32,32]{3,2,1,0:T(8,128)}', space=vmem, size = 0x90000, scoped, tag = 'scratch operand']
  %s0 = inlined_call_operand.hbm [shape: f32[2,16,16,16], index: 0, kind: input, shape index: {}]
  %s1 = inlined_call_operand.hbm [shape: f32[16,32], index: 1, kind: input, shape index: {}]
  %s2 = inlined_call_operand.vmem [shape: f32[1,32], index: 2, kind: input, shape index: {}]
  %s3 = inlined_call_operand.hbm [shape: f32[9,1,1,32], index: 3, kind: input, shape index: {}]
  %s4 = inlined_call_operand.vmem [shape: f32[1,1,32], index: 4, kind: input, shape index: {}]
  %s5 = inlined_call_operand.hbm [shape: f32[32,64], index: 5, kind: input, shape index: {}]
  %s6 = inlined_call_operand.vmem [shape: f32[1,64], index: 6, kind: input, shape index: {}]
  %s7 = inlined_call_operand.hbm [shape: f32[2,16,16,64], index: 7, kind: output, shape index: {}]
  %s8 = sld [smem:[#allocation0]]
  $region54: #{tpu_custom_call.1} parent=0
    _
  %s10 = ssub.s32 1, %s8
  %s11 = scalar_select 0, %s10, %s8
  $region1: #{tpu_custom_call.1} parent=0
    #allocation3 [shape = 'u8[262144]{0}', space=vmem, size = 0x40000, scoped, tag = 'input window, operand 0, single buffered']
    #allocation4 [shape = 's32[1]{0}', space=sflag, size = 0x4, scoped, tag = 'scoped memory for tpu_custom_call.1']
    #allocation5 [shape = 's32[1]{0}', space=sflag, size = 0x4, scoped, tag = 'scoped memory for tpu_custom_call.1']
    #allocation6 [shape = 'u8[8192]{0}', space=vmem, size = 0x2000, scoped, tag = 'input window, operand 1, single buffered']
    #allocation7 [shape = 's32[1]{0}', space=sflag, size = 0x4, scoped, tag = 'scoped memory for tpu_custom_call.1']
    #allocation8 [shape = 'u8[4608]{0}', space=vmem, size = 0x1400, scoped, tag = 'input window, operand 3, single buffered']
    #allocation9 [shape = 'u8[16384]{0}', space=vmem, size = 0x4000, scoped, tag = 'input window, operand 5, single buffered']
    #allocation10 [shape = 's32[1]{0}', space=sflag, size = 0x4, scoped, tag = 'scoped memory for tpu_custom_call.1']
    #allocation11 [shape = 'u8[262144]{0}', space=vmem, size = 0x40000, scoped, tag = 'output window, operand 0, single buffered']
    %12 = vsyncpa [#allocation4], 0
    %13 = vsyncpa [#allocation7], 0
    %14 = vsyncpa [#allocation10], 0
    %15 = vsyncpa [#allocation5], 0
    // Predicated region
    $region2: #{tpu_custom_call.1} parent=1 // pred_check
      _
    $region3: #{tpu_custom_call.1} parent=1 // pred_check_branch
      %17 = sbr.rel (0) target = $region5
    $region4: #{tpu_custom_call.1} parent=1 // pred_region
      %s19 = ssub.s32 8192, 8192
      %20 = vsyncadd [#allocation4], %s19
      %s21 = sshll.u32 [#allocation3], 4
      %s22 = int_to_ptr.vmem [resolvable:$true] %s21
      %27 = dma.hbm_to_vmem [thread:$0]  %s0, 8192, %s22, [#allocation4], 128, 128, 8
    $region5: #{tpu_custom_call.1} parent=1 // pred_fallthru
      _
    // Predicated region
    $region6: #{tpu_custom_call.1} parent=1 // pred_check
      _
    $region7: #{tpu_custom_call.1} parent=1 // pred_check_branch
      %29 = sbr.rel (0) target = $region9
    $region8: #{tpu_custom_call.1} parent=1 // pred_region
      %s31 = ssub.s32 256, 256
      %32 = vsyncadd [#allocation7], %s31
      %s33 = sshll.u32 [#allocation6], 4
      %s34 = int_to_ptr.vmem [resolvable:$true] %s33
      %39 = dma.hbm_to_vmem [thread:$0]  %s1, 256, %s34, [#allocation7], 128, 128, 8
    $region9: #{tpu_custom_call.1} parent=1 // pred_fallthru
      _
    // Predicated region
    $region10: #{tpu_custom_call.1} parent=1 // pred_check
      _
    $region11: #{tpu_custom_call.1} parent=1 // pred_check_branch
      %41 = sbr.rel (0) target = $region13
    $region12: #{tpu_custom_call.1} parent=1 // pred_region
      _
    $region13: #{tpu_custom_call.1} parent=1 // pred_fallthru
      _
    // Predicated region
    $region14: #{tpu_custom_call.1} parent=1 // pred_check
      _
    $region15: #{tpu_custom_call.1} parent=1 // pred_check_branch
      %43 = sbr.rel (0) target = $region17
    $region16: #{tpu_custom_call.1} parent=1 // pred_region
      %s45 = ssub.s32 144, 144
      %46 = vsyncadd [#allocation7], %s45
      %s47 = sshll.u32 [#allocation8], 4
      %s48 = int_to_ptr.vmem [resolvable:$true] %s47
      %53 = dma.hbm_to_vmem [thread:$0]  %s3, 144, %s48, [#allocation7], 16, 16, 1
    $region17: #{tpu_custom_call.1} parent=1 // pred_fallthru
      _
    // Predicated region
    $region18: #{tpu_custom_call.1} parent=1 // pred_check
      _
    $region19: #{tpu_custom_call.1} parent=1 // pred_check_branch
      %55 = sbr.rel (0) target = $region21
    $region20: #{tpu_custom_call.1} parent=1 // pred_region
      _
    $region21: #{tpu_custom_call.1} parent=1 // pred_fallthru
      _
    // Predicated region
    $region22: #{tpu_custom_call.1} parent=1 // pred_check
      _
    $region23: #{tpu_custom_call.1} parent=1 // pred_check_branch
      %57 = sbr.rel (0) target = $region25
    $region24: #{tpu_custom_call.1} parent=1 // pred_region
      %s59 = ssub.s32 512, 512
      %60 = vsyncadd [#allocation10], %s59
      %s61 = sshll.u32 [#allocation9], 4
      %s62 = int_to_ptr.vmem [resolvable:$true] %s61
      %67 = dma.hbm_to_vmem [thread:$0]  %s5, 512, %s62, [#allocation10], 128, 128, 8
    $region25: #{tpu_custom_call.1} parent=1 // pred_fallthru
      _
    // Predicated region
    $region26: #{tpu_custom_call.1} parent=1 // pred_check
      _
    $region27: #{tpu_custom_call.1} parent=1 // pred_check_branch
      %69 = sbr.rel (0) target = $region29
    $region28: #{tpu_custom_call.1} parent=1 // pred_region
      _
    $region29: #{tpu_custom_call.1} parent=1 // pred_fallthru
      _
    // Predicated region
    $region30: #{tpu_custom_call.1} parent=1 // pred_check
      _
    $region31: #{tpu_custom_call.1} parent=1 // pred_check_branch
      %71 = sbr.rel (0) target = $region33
    $region32: #{tpu_custom_call.1} parent=1 // pred_region
      %72 = dma.done [#allocation4], 8192
    $region33: #{tpu_custom_call.1} parent=1 // pred_fallthru
      _
    // Predicated region
    $region34: #{tpu_custom_call.1} parent=1 // pred_check
      _
    $region35: #{tpu_custom_call.1} parent=1 // pred_check_branch
      %74 = sbr.rel (0) target = $region37
    $region36: #{tpu_custom_call.1} parent=1 // pred_region
      %75 = dma.done [#allocation7], 256
    $region37: #{tpu_custom_call.1} parent=1 // pred_fallthru
      _
    // Predicated region
    $region38: #{tpu_custom_call.1} parent=1 // pred_check
      _
    $region39: #{tpu_custom_call.1} parent=1 // pred_check_branch
      %77 = sbr.rel (0) target = $region41
    $region40: #{tpu_custom_call.1} parent=1 // pred_region
      %78 = dma.done [#allocation7], 144
    $region41: #{tpu_custom_call.1} parent=1 // pred_fallthru
      _
    // Predicated region
    $region42: #{tpu_custom_call.1} parent=1 // pred_check
      _
    $region43: #{tpu_custom_call.1} parent=1 // pred_check_branch
      %80 = sbr.rel (0) target = $region45
    $region44: #{tpu_custom_call.1} parent=1 // pred_region
      %81 = dma.done [#allocation10], 512
    $region45: #{tpu_custom_call.1} parent=1 // pred_fallthru
      _
    %v82 = vld [vmem:[#allocation3] sm:$0xff]
    %v83 = vld [vmem:[#allocation3 + $0x8] sm:$0xff]
    %v84 = vld [vmem:[#allocation3 + $0x10] sm:$0xff]
    %v85 = vld [vmem:[#allocation3 + $0x18] sm:$0xff]
    %v86 = vld [vmem:[#allocation3 + $0x20] sm:$0xff]
    %v87 = vld [vmem:[#allocation3 + $0x28] sm:$0xff]
    %v88 = vld [vmem:[#allocation3 + $0x30] sm:$0xff]
    %v89 = vld [vmem:[#allocation3 + $0x38] sm:$0xff]
    %v90 = vld [vmem:[#allocation3 + $0x40] sm:$0xff]
    %v91 = vld [vmem:[#allocation3 + $0x48] sm:$0xff]
    %v92 = vld [vmem:[#allocation3 + $0x50] sm:$0xff]
    %v93 = vld [vmem:[#allocation3 + $0x58] sm:$0xff]
    %v94 = vld [vmem:[#allocation3 + $0x60] sm:$0xff]
    %v95 = vld [vmem:[#allocation3 + $0x68] sm:$0xff]
    %v96 = vld [vmem:[#allocation3 + $0x70] sm:$0xff]
    %v97 = vld [vmem:[#allocation3 + $0x78] sm:$0xff]
    %v98 = vld [vmem:[#allocation3 + $0x80] sm:$0xff]
    %v99 = vld [vmem:[#allocation3 + $0x88] sm:$0xff]
    %v100 = vld [vmem:[#allocation3 + $0x90] sm:$0xff]
    %v101 = vld [vmem:[#allocation3 + $0x98] sm:$0xff]
    %v102 = vld [vmem:[#allocation3 + $0xa0] sm:$0xff]
    %v103 = vld [vmem:[#allocation3 + $0xa8] sm:$0xff]
    %v104 = vld [vmem:[#allocation3 + $0xb0] sm:$0xff]
    %v105 = vld [vmem:[#allocation3 + $0xb8] sm:$0xff]
    %v106 = vld [vmem:[#allocation3 + $0xc0] sm:$0xff]
    %v107 = vld [vmem:[#allocation3 + $0xc8] sm:$0xff]
    %v108 = vld [vmem:[#allocation3 + $0xd0] sm:$0xff]
    %v109 = vld [vmem:[#allocation3 + $0xd8] sm:$0xff]
    %v110 = vld [vmem:[#allocation3 + $0xe0] sm:$0xff]
    %v111 = vld [vmem:[#allocation3 + $0xe8] sm:$0xff]
    %v112 = vld [vmem:[#allocation3 + $0xf0] sm:$0xff]
    %v113 = vld [vmem:[#allocation3 + $0xf8] sm:$0xff]
    %v114 = vld [vmem:[#allocation3 + $0x100] sm:$0xff]
    %v115 = vld [vmem:[#allocation3 + $0x108] sm:$0xff]
    %v116 = vld [vmem:[#allocation3 + $0x110] sm:$0xff]
    %v117 = vld [vmem:[#allocation3 + $0x118] sm:$0xff]
    %v118 = vld [vmem:[#allocation3 + $0x120] sm:$0xff]
    %v119 = vld [vmem:[#allocation3 + $0x128] sm:$0xff]
    %v120 = vld [vmem:[#allocation3 + $0x130] sm:$0xff]
    %v121 = vld [vmem:[#allocation3 + $0x138] sm:$0xff]
    %v122 = vld [vmem:[#allocation3 + $0x140] sm:$0xff]
    %v123 = vld [vmem:[#allocation3 + $0x148] sm:$0xff]
    %v124 = vld [vmem:[#allocation3 + $0x150] sm:$0xff]
    %v125 = vld [vmem:[#allocation3 + $0x158] sm:$0xff]
    %v126 = vld [vmem:[#allocation3 + $0x160] sm:$0xff]
    %v127 = vld [vmem:[#allocation3 + $0x168] sm:$0xff]
    %v128 = vld [vmem:[#allocation3 + $0x170] sm:$0xff]
    %v129 = vld [vmem:[#allocation3 + $0x178] sm:$0xff]
    %v130 = vld [vmem:[#allocation3 + $0x180] sm:$0xff]
    %v131 = vld [vmem:[#allocation3 + $0x188] sm:$0xff]
    %v132 = vld [vmem:[#allocation3 + $0x190] sm:$0xff]
    %v133 = vld [vmem:[#allocation3 + $0x198] sm:$0xff]
    %v134 = vld [vmem:[#allocation3 + $0x1a0] sm:$0xff]
    %v135 = vld [vmem:[#allocation3 + $0x1a8] sm:$0xff]
    %v136 = vld [vmem:[#allocation3 + $0x1b0] sm:$0xff]
    %v137 = vld [vmem:[#allocation3 + $0x1b8] sm:$0xff]
    %v138 = vld [vmem:[#allocation3 + $0x1c0] sm:$0xff]
    %v139 = vld [vmem:[#allocation3 + $0x1c8] sm:$0xff]
    %v140 = vld [vmem:[#allocation3 + $0x1d0] sm:$0xff]
    %v141 = vld [vmem:[#allocation3 + $0x1d8] sm:$0xff]
    %v142 = vld [vmem:[#allocation3 + $0x1e0] sm:$0xff]
    %v143 = vld [vmem:[#allocation3 + $0x1e8] sm:$0xff]
    %v144 = vld [vmem:[#allocation3 + $0x1f0] sm:$0xff]
    %v145 = vld [vmem:[#allocation3 + $0x1f8] sm:$0xff]
    %v146 = vld [vmem:[#allocation6] sm:$0xff]
    %v147 = vld [vmem:[#allocation6 + $0x8] sm:$0xff]
    %v148 = vld [vmem:[%s2] sm:$0x1]
    %v150 = vlaneseq
    %v151 = vshrl.u32 %v150, 7
    %v152 = vsub.s32 0, %v151
    %v153 = vrot.slane %v148, %v152
    %vm155 = vcmask 130048
    %v157 = vsel %vm155, %v82, 0
    %v160 = vsel %vm155, %v83, 0
    %v163 = vsel %vm155, %v84, 0
    %v166 = vsel %vm155, %v85, 0
    %v169 = vsel %vm155, %v86, 0
    %v172 = vsel %vm155, %v87, 0
    %v175 = vsel %vm155, %v88, 0
    %v178 = vsel %vm155, %v89, 0
    %v181 = vsel %vm155, %v90, 0
    %v184 = vsel %vm155, %v91, 0
    %v187 = vsel %vm155, %v92, 0
    %v190 = vsel %vm155, %v93, 0
    %v193 = vsel %vm155, %v94, 0
    %v196 = vsel %vm155, %v95, 0
    %v199 = vsel %vm155, %v96, 0
    %v202 = vsel %vm155, %v97, 0
    %v205 = vsel %vm155, %v98, 0
    %v208 = vsel %vm155, %v99, 0
    %v211 = vsel %vm155, %v100, 0
    %v214 = vsel %vm155, %v101, 0
    %v217 = vsel %vm155, %v102, 0
    %v220 = vsel %vm155, %v103, 0
    %v223 = vsel %vm155, %v104, 0
    %v226 = vsel %vm155, %v105, 0
    %v229 = vsel %vm155, %v106, 0
    %v232 = vsel %vm155, %v107, 0
    %v235 = vsel %vm155, %v108, 0
    %v238 = vsel %vm155, %v109, 0
    %v241 = vsel %vm155, %v110, 0
    %v244 = vsel %vm155, %v111, 0
    %v247 = vsel %vm155, %v112, 0
    %v250 = vsel %vm155, %v113, 0
    %v253 = vsel %vm155, %v114, 0
    %v256 = vsel %vm155, %v115, 0
    %v259 = vsel %vm155, %v116, 0
    %v262 = vsel %vm155, %v117, 0
    %v265 = vsel %vm155, %v118, 0
    %v268 = vsel %vm155, %v119, 0
    %v271 = vsel %vm155, %v120, 0
    %v274 = vsel %vm155, %v121, 0
    %v277 = vsel %vm155, %v122, 0
    %v280 = vsel %vm155, %v123, 0
    %v283 = vsel %vm155, %v124, 0
    %v286 = vsel %vm155, %v125, 0
    %v289 = vsel %vm155, %v126, 0
    %v292 = vsel %vm155, %v127, 0
    %v295 = vsel %vm155, %v128, 0
    %v298 = vsel %vm155, %v129, 0
    %v301 = vsel %vm155, %v130, 0
    %v304 = vsel %vm155, %v131, 0
    %v307 = vsel %vm155, %v132, 0
    %v310 = vsel %vm155, %v133, 0
    %v313 = vsel %vm155, %v134, 0
    %v316 = vsel %vm155, %v135, 0
    %v319 = vsel %vm155, %v136, 0
    %v322 = vsel %vm155, %v137, 0
    %v325 = vsel %vm155, %v138, 0
    %v328 = vsel %vm155, %v139, 0
    %v331 = vsel %vm155, %v140, 0
    %v334 = vsel %vm155, %v141, 0
    %v337 = vsel %vm155, %v142, 0
    %v340 = vsel %vm155, %v143, 0
    %v343 = vsel %vm155, %v144, 0
    %v346 = vsel %vm155, %v145, 0
    %348 = vmatprep.subr.mxu0 0.0
    %349 = vmatpush1.msra.mxu0 0.0
    %350 = vmatprep.subr.mxu0 0.0
    %351 = vmatpush1.msra.mxu0 0.0
    %352 = vmatprep.subr.mxu0 0.0
    %353 = vmatpush1.msra.mxu0 0.0
    %354 = vmatprep.subr.mxu0 0.0
    %355 = vmatpush1.msra.mxu0 0.0
    %356 = vmatprep.subr.mxu0 0.0
    %357 = vmatpush1.msra.mxu0 0.0
    %358 = vmatprep.subr.mxu0 0.0
    %359 = vmatpush1.msra.mxu0 0.0
    %360 = vmatprep.subr.mxu0 0.0
    %361 = vmatpush1.msra.mxu0 0.0
    %362 = vmatprep.subr.mxu0 0.0
    %363 = vmatpush1.msra.mxu0 0.0
    %364 = vmatprep.subr.mxu0 0.0
    %365 = vmatpush1.msra.mxu0 0.0
    %366 = vmatprep.subr.mxu0 0.0
    %367 = vmatpush1.msra.mxu0 0.0
    %368 = vmatprep.subr.mxu0 0.0
    %369 = vmatpush1.msra.mxu0 0.0
    %370 = vmatprep.subr.mxu0 0.0
    %371 = vmatpush1.msra.mxu0 0.0
    %372 = vmatprep.subr.mxu0 0.0
    %373 = vmatpush1.msra.mxu0 0.0
    %374 = vmatprep.subr.mxu0 0.0
    %375 = vmatpush1.msra.mxu0 0.0
    %376 = vmatprep.subr.mxu0 0.0
    %377 = vmatpush1.msra.mxu0 %v147
    %378 = vmatprep.subr.mxu0 0.0
    %379 = vmatpush1.msra.mxu0 %v146
    %380 = vmatprep.subr.mxu0 0.0
    %381 = vmatpush2.msra.mxu0 0.0
    %382 = vmatprep.subr.mxu0 0.0
    %383 = vmatpush2.msra.mxu0 0.0
    %384 = vmatprep.subr.mxu0 0.0
    %385 = vmatpush2.msra.mxu0 0.0
    %386 = vmatprep.subr.mxu0 0.0
    %387 = vmatpush2.msra.mxu0 0.0
    %388 = vmatprep.subr.mxu0 0.0
    %389 = vmatpush2.msra.mxu0 0.0
    %390 = vmatprep.subr.mxu0 0.0
    %391 = vmatpush2.msra.mxu0 0.0
    %392 = vmatprep.subr.mxu0 0.0
    %393 = vmatpush2.msra.mxu0 0.0
    %394 = vmatprep.subr.mxu0 0.0
    %395 = vmatpush2.msra.mxu0 0.0
    %396 = vmatprep.subr.mxu0 0.0
    %397 = vmatpush2.msra.mxu0 0.0
    %398 = vmatprep.subr.mxu0 0.0
    %399 = vmatpush2.msra.mxu0 0.0
    %400 = vmatprep.subr.mxu0 0.0
    %401 = vmatpush2.msra.mxu0 0.0
    %402 = vmatprep.subr.mxu0 0.0
    %403 = vmatpush2.msra.mxu0 0.0
    %404 = vmatprep.subr.mxu0 0.0
    %405 = vmatpush2.msra.mxu0 0.0
    %406 = vmatprep.subr.mxu0 0.0
    %407 = vmatpush2.msra.mxu0 0.0
    %408 = vmatprep.subr.mxu0 0.0
    %409 = vmatpush2.msra.mxu0 0.0
    %410 = vmatprep.subr.mxu0 0.0
    %411 = vmatpush2.msra.mxu0 0.0
    %412 = vmatprep.mubr.f32.mxu0 0.0
    %413 = vmatmul.mubr.f32.gmra.mxu0 %v157
    %v414 = vpop.f32.mrf.mxu0
    %v415 = vadd.f32 %v153, %v414
    %v416 = vpop.f32.mrf.mxu0
    %417 = vmatprep.mubr.f32.mxu0 0.0
    %418 = vmatmul.mubr.f32.gmra.mxu0 %v160
    %v419 = vpop.f32.mrf.mxu0
    %v420 = vadd.f32 %v153, %v419
    %v421 = vpop.f32.mrf.mxu0
    %422 = vmatprep.mubr.f32.mxu0 0.0
    %423 = vmatmul.mubr.f32.gmra.mxu0 %v163
    %v424 = vpop.f32.mrf.mxu0
    %v425 = vadd.f32 %v153, %v424
    %v426 = vpop.f32.mrf.mxu0
    %427 = vmatprep.mubr.f32.mxu0 0.0
    %428 = vmatmul.mubr.f32.gmra.mxu0 %v166
    %v429 = vpop.f32.mrf.mxu0
    %v430 = vadd.f32 %v153, %v429
    %v431 = vpop.f32.mrf.mxu0
    %432 = vmatprep.mubr.f32.mxu0 0.0
    %433 = vmatmul.mubr.f32.gmra.mxu0 %v169
    %v434 = vpop.f32.mrf.mxu0
    %v435 = vadd.f32 %v153, %v434
    %v436 = vpop.f32.mrf.mxu0
    %437 = vmatprep.mubr.f32.mxu0 0.0
    %438 = vmatmul.mubr.f32.gmra.mxu0 %v172
    %v439 = vpop.f32.mrf.mxu0
    %v440 = vadd.f32 %v153, %v439
    %v441 = vpop.f32.mrf.mxu0
    %442 = vmatprep.mubr.f32.mxu0 0.0
    %443 = vmatmul.mubr.f32.gmra.mxu0 %v175
    %v444 = vpop.f32.mrf.mxu0
    %v445 = vadd.f32 %v153, %v444
    %v446 = vpop.f32.mrf.mxu0
    %447 = vmatprep.mubr.f32.mxu0 0.0
    %448 = vmatmul.mubr.f32.gmra.mxu0 %v178
    %v449 = vpop.f32.mrf.mxu0
    %v450 = vadd.f32 %v153, %v449
    %v451 = vpop.f32.mrf.mxu0
    %452 = vmatprep.mubr.f32.mxu0 0.0
    %453 = vmatmul.mubr.f32.gmra.mxu0 %v181
    %v454 = vpop.f32.mrf.mxu0
    %v455 = vadd.f32 %v153, %v454
    %v456 = vpop.f32.mrf.mxu0
    %457 = vmatprep.mubr.f32.mxu0 0.0
    %458 = vmatmul.mubr.f32.gmra.mxu0 %v184
    %v459 = vpop.f32.mrf.mxu0
    %v460 = vadd.f32 %v153, %v459
    %v461 = vpop.f32.mrf.mxu0
    %462 = vmatprep.mubr.f32.mxu0 0.0
    %463 = vmatmul.mubr.f32.gmra.mxu0 %v187
    %v464 = vpop.f32.mrf.mxu0
    %v465 = vadd.f32 %v153, %v464
    %v466 = vpop.f32.mrf.mxu0
    %467 = vmatprep.mubr.f32.mxu0 0.0
    %468 = vmatmul.mubr.f32.gmra.mxu0 %v190
    %v469 = vpop.f32.mrf.mxu0
    %v470 = vadd.f32 %v153, %v469
    %v471 = vpop.f32.mrf.mxu0
    %472 = vmatprep.mubr.f32.mxu0 0.0
    %473 = vmatmul.mubr.f32.gmra.mxu0 %v193
    %v474 = vpop.f32.mrf.mxu0
    %v475 = vadd.f32 %v153, %v474
    %v476 = vpop.f32.mrf.mxu0
    %477 = vmatprep.mubr.f32.mxu0 0.0
    %478 = vmatmul.mubr.f32.gmra.mxu0 %v196
    %v479 = vpop.f32.mrf.mxu0
    %v480 = vadd.f32 %v153, %v479
    %v481 = vpop.f32.mrf.mxu0
    %482 = vmatprep.mubr.f32.mxu0 0.0
    %483 = vmatmul.mubr.f32.gmra.mxu0 %v199
    %v484 = vpop.f32.mrf.mxu0
    %v485 = vadd.f32 %v153, %v484
    %v486 = vpop.f32.mrf.mxu0
    %487 = vmatprep.mubr.f32.mxu0 0.0
    %488 = vmatmul.mubr.f32.gmra.mxu0 %v202
    %v489 = vpop.f32.mrf.mxu0
    %v490 = vadd.f32 %v153, %v489
    %v491 = vpop.f32.mrf.mxu0
    %492 = vmatprep.mubr.f32.mxu0 0.0
    %493 = vmatmul.mubr.f32.gmra.mxu0 %v205
    %v494 = vpop.f32.mrf.mxu0
    %v495 = vadd.f32 %v153, %v494
    %v496 = vpop.f32.mrf.mxu0
    %497 = vmatprep.mubr.f32.mxu0 0.0
    %498 = vmatmul.mubr.f32.gmra.mxu0 %v208
    %v499 = vpop.f32.mrf.mxu0
    %v500 = vadd.f32 %v153, %v499
    %v501 = vpop.f32.mrf.mxu0
    %502 = vmatprep.mubr.f32.mxu0 0.0
    %503 = vmatmul.mubr.f32.gmra.mxu0 %v211
    %v504 = vpop.f32.mrf.mxu0
    %v505 = vadd.f32 %v153, %v504
    %v506 = vpop.f32.mrf.mxu0
    %507 = vmatprep.mubr.f32.mxu0 0.0
    %508 = vmatmul.mubr.f32.gmra.mxu0 %v214
    %v509 = vpop.f32.mrf.mxu0
    %v510 = vadd.f32 %v153, %v509
    %v511 = vpop.f32.mrf.mxu0
    %512 = vmatprep.mubr.f32.mxu0 0.0
    %513 = vmatmul.mubr.f32.gmra.mxu0 %v217
    %v514 = vpop.f32.mrf.mxu0
    %v515 = vadd.f32 %v153, %v514
    %v516 = vpop.f32.mrf.mxu0
    %517 = vmatprep.mubr.f32.mxu0 0.0
    %518 = vmatmul.mubr.f32.gmra.mxu0 %v220
    %v519 = vpop.f32.mrf.mxu0
    %v520 = vadd.f32 %v153, %v519
    %v521 = vpop.f32.mrf.mxu0
    %522 = vmatprep.mubr.f32.mxu0 0.0
    %523 = vmatmul.mubr.f32.gmra.mxu0 %v223
    %v524 = vpop.f32.mrf.mxu0
    %v525 = vadd.f32 %v153, %v524
    %v526 = vpop.f32.mrf.mxu0
    %527 = vmatprep.mubr.f32.mxu0 0.0
    %528 = vmatmul.mubr.f32.gmra.mxu0 %v226
    %v529 = vpop.f32.mrf.mxu0
    %v530 = vadd.f32 %v153, %v529
    %v531 = vpop.f32.mrf.mxu0
    %532 = vmatprep.mubr.f32.mxu0 0.0
    %533 = vmatmul.mubr.f32.gmra.mxu0 %v229
    %v534 = vpop.f32.mrf.mxu0
    %v535 = vadd.f32 %v153, %v534
    %v536 = vpop.f32.mrf.mxu0
    %537 = vmatprep.mubr.f32.mxu0 0.0
    %538 = vmatmul.mubr.f32.gmra.mxu0 %v232
    %v539 = vpop.f32.mrf.mxu0
    %v540 = vadd.f32 %v153, %v539
    %v541 = vpop.f32.mrf.mxu0
    %542 = vmatprep.mubr.f32.mxu0 0.0
    %543 = vmatmul.mubr.f32.gmra.mxu0 %v235
    %v544 = vpop.f32.mrf.mxu0
    %v545 = vadd.f32 %v153, %v544
    %v546 = vpop.f32.mrf.mxu0
    %547 = vmatprep.mubr.f32.mxu0 0.0
    %548 = vmatmul.mubr.f32.gmra.mxu0 %v238
    %v549 = vpop.f32.mrf.mxu0
    %v550 = vadd.f32 %v153, %v549
    %v551 = vpop.f32.mrf.mxu0
    %552 = vmatprep.mubr.f32.mxu0 0.0
    %553 = vmatmul.mubr.f32.gmra.mxu0 %v241
    %v554 = vpop.f32.mrf.mxu0
    %v555 = vadd.f32 %v153, %v554
    %v556 = vpop.f32.mrf.mxu0
    %557 = vmatprep.mubr.f32.mxu0 0.0
    %558 = vmatmul.mubr.f32.gmra.mxu0 %v244
    %v559 = vpop.f32.mrf.mxu0
    %v560 = vadd.f32 %v153, %v559
    %v561 = vpop.f32.mrf.mxu0
    %562 = vmatprep.mubr.f32.mxu0 0.0
    %563 = vmatmul.mubr.f32.gmra.mxu0 %v247
    %v564 = vpop.f32.mrf.mxu0
    %v565 = vadd.f32 %v153, %v564
    %v566 = vpop.f32.mrf.mxu0
    %567 = vmatprep.mubr.f32.mxu0 0.0
    %568 = vmatmul.mubr.f32.gmra.mxu0 %v250
    %v569 = vpop.f32.mrf.mxu0
    %v570 = vadd.f32 %v153, %v569
    %v571 = vpop.f32.mrf.mxu0
    %572 = vmatprep.mubr.f32.mxu0 0.0
    %573 = vmatmul.mubr.f32.gmra.mxu0 %v253
    %v574 = vpop.f32.mrf.mxu0
    %v575 = vadd.f32 %v153, %v574
    %v576 = vpop.f32.mrf.mxu0
    %577 = vmatprep.mubr.f32.mxu0 0.0
    %578 = vmatmul.mubr.f32.gmra.mxu0 %v256
    %v579 = vpop.f32.mrf.mxu0
    %v580 = vadd.f32 %v153, %v579
    %v581 = vpop.f32.mrf.mxu0
    %582 = vmatprep.mubr.f32.mxu0 0.0
    %583 = vmatmul.mubr.f32.gmra.mxu0 %v259
    %v584 = vpop.f32.mrf.mxu0
    %v585 = vadd.f32 %v153, %v584
    %v586 = vpop.f32.mrf.mxu0
    %587 = vmatprep.mubr.f32.mxu0 0.0
    %588 = vmatmul.mubr.f32.gmra.mxu0 %v262
    %v589 = vpop.f32.mrf.mxu0
    %v590 = vadd.f32 %v153, %v589
    %v591 = vpop.f32.mrf.mxu0
    %592 = vmatprep.mubr.f32.mxu0 0.0
    %593 = vmatmul.mubr.f32.gmra.mxu0 %v265
    %v594 = vpop.f32.mrf.mxu0
    %v595 = vadd.f32 %v153, %v594
    %v596 = vpop.f32.mrf.mxu0
    %597 = vmatprep.mubr.f32.mxu0 0.0
    %598 = vmatmul.mubr.f32.gmra.mxu0 %v268
    %v599 = vpop.f32.mrf.mxu0
    %v600 = vadd.f32 %v153, %v599
    %v601 = vpop.f32.mrf.mxu0
    %602 = vmatprep.mubr.f32.mxu0 0.0
    %603 = vmatmul.mubr.f32.gmra.mxu0 %v271
    %v604 = vpop.f32.mrf.mxu0
    %v605 = vadd.f32 %v153, %v604
    %v606 = vpop.f32.mrf.mxu0
    %607 = vmatprep.mubr.f32.mxu0 0.0
    %608 = vmatmul.mubr.f32.gmra.mxu0 %v274
    %v609 = vpop.f32.mrf.mxu0
    %v610 = vadd.f32 %v153, %v609
    %v611 = vpop.f32.mrf.mxu0
    %612 = vmatprep.mubr.f32.mxu0 0.0
    %613 = vmatmul.mubr.f32.gmra.mxu0 %v277
    %v614 = vpop.f32.mrf.mxu0
    %v615 = vadd.f32 %v153, %v614
    %v616 = vpop.f32.mrf.mxu0
    %617 = vmatprep.mubr.f32.mxu0 0.0
    %618 = vmatmul.mubr.f32.gmra.mxu0 %v280
    %v619 = vpop.f32.mrf.mxu0
    %v620 = vadd.f32 %v153, %v619
    %v621 = vpop.f32.mrf.mxu0
    %622 = vmatprep.mubr.f32.mxu0 0.0
    %623 = vmatmul.mubr.f32.gmra.mxu0 %v283
    %v624 = vpop.f32.mrf.mxu0
    %v625 = vadd.f32 %v153, %v624
    %v626 = vpop.f32.mrf.mxu0
    %627 = vmatprep.mubr.f32.mxu0 0.0
    %628 = vmatmul.mubr.f32.gmra.mxu0 %v286
    %v629 = vpop.f32.mrf.mxu0
    %v630 = vadd.f32 %v153, %v629
    %v631 = vpop.f32.mrf.mxu0
    %632 = vmatprep.mubr.f32.mxu0 0.0
    %633 = vmatmul.mubr.f32.gmra.mxu0 %v289
    %v634 = vpop.f32.mrf.mxu0
    %v635 = vadd.f32 %v153, %v634
    %v636 = vpop.f32.mrf.mxu0
    %637 = vmatprep.mubr.f32.mxu0 0.0
    %638 = vmatmul.mubr.f32.gmra.mxu0 %v292
    %v639 = vpop.f32.mrf.mxu0
    %v640 = vadd.f32 %v153, %v639
    %v641 = vpop.f32.mrf.mxu0
    %642 = vmatprep.mubr.f32.mxu0 0.0
    %643 = vmatmul.mubr.f32.gmra.mxu0 %v295
    %v644 = vpop.f32.mrf.mxu0
    %v645 = vadd.f32 %v153, %v644
    %v646 = vpop.f32.mrf.mxu0
    %647 = vmatprep.mubr.f32.mxu0 0.0
    %648 = vmatmul.mubr.f32.gmra.mxu0 %v298
    %v649 = vpop.f32.mrf.mxu0
    %v650 = vadd.f32 %v153, %v649
    %v651 = vpop.f32.mrf.mxu0
    %652 = vmatprep.mubr.f32.mxu0 0.0
    %653 = vmatmul.mubr.f32.gmra.mxu0 %v301
    %v654 = vpop.f32.mrf.mxu0
    %v655 = vadd.f32 %v153, %v654
    %v656 = vpop.f32.mrf.mxu0
    %657 = vmatprep.mubr.f32.mxu0 0.0
    %658 = vmatmul.mubr.f32.gmra.mxu0 %v304
    %v659 = vpop.f32.mrf.mxu0
    %v660 = vadd.f32 %v153, %v659
    %v661 = vpop.f32.mrf.mxu0
    %662 = vmatprep.mubr.f32.mxu0 0.0
    %663 = vmatmul.mubr.f32.gmra.mxu0 %v307
    %v664 = vpop.f32.mrf.mxu0
    %v665 = vadd.f32 %v153, %v664
    %v666 = vpop.f32.mrf.mxu0
    %667 = vmatprep.mubr.f32.mxu0 0.0
    %668 = vmatmul.mubr.f32.gmra.mxu0 %v310
    %v669 = vpop.f32.mrf.mxu0
    %v670 = vadd.f32 %v153, %v669
    %v671 = vpop.f32.mrf.mxu0
    %672 = vmatprep.mubr.f32.mxu0 0.0
    %673 = vmatmul.mubr.f32.gmra.mxu0 %v313
    %v674 = vpop.f32.mrf.mxu0
    %v675 = vadd.f32 %v153, %v674
    %v676 = vpop.f32.mrf.mxu0
    %677 = vmatprep.mubr.f32.mxu0 0.0
    %678 = vmatmul.mubr.f32.gmra.mxu0 %v316
    %v679 = vpop.f32.mrf.mxu0
    %v680 = vadd.f32 %v153, %v679
    %v681 = vpop.f32.mrf.mxu0
    %682 = vmatprep.mubr.f32.mxu0 0.0
    %683 = vmatmul.mubr.f32.gmra.mxu0 %v319
    %v684 = vpop.f32.mrf.mxu0
    %v685 = vadd.f32 %v153, %v684
    %v686 = vpop.f32.mrf.mxu0
    %687 = vmatprep.mubr.f32.mxu0 0.0
    %688 = vmatmul.mubr.f32.gmra.mxu0 %v322
    %v689 = vpop.f32.mrf.mxu0
    %v690 = vadd.f32 %v153, %v689
    %v691 = vpop.f32.mrf.mxu0
    %692 = vmatprep.mubr.f32.mxu0 0.0
    %693 = vmatmul.mubr.f32.gmra.mxu0 %v325
    %v694 = vpop.f32.mrf.mxu0
    %v695 = vadd.f32 %v153, %v694
    %v696 = vpop.f32.mrf.mxu0
    %697 = vmatprep.mubr.f32.mxu0 0.0
    %698 = vmatmul.mubr.f32.gmra.mxu0 %v328
    %v699 = vpop.f32.mrf.mxu0
    %v700 = vadd.f32 %v153, %v699
    %v701 = vpop.f32.mrf.mxu0
    %702 = vmatprep.mubr.f32.mxu0 0.0
    %703 = vmatmul.mubr.f32.gmra.mxu0 %v331
    %v704 = vpop.f32.mrf.mxu0
    %v705 = vadd.f32 %v153, %v704
    %v706 = vpop.f32.mrf.mxu0
    %707 = vmatprep.mubr.f32.mxu0 0.0
    %708 = vmatmul.mubr.f32.gmra.mxu0 %v334
    %v709 = vpop.f32.mrf.mxu0
    %v710 = vadd.f32 %v153, %v709
    %v711 = vpop.f32.mrf.mxu0
    %712 = vmatprep.mubr.f32.mxu0 0.0
    %713 = vmatmul.mubr.f32.gmra.mxu0 %v337
    %v714 = vpop.f32.mrf.mxu0
    %v715 = vadd.f32 %v153, %v714
    %v716 = vpop.f32.mrf.mxu0
    %717 = vmatprep.mubr.f32.mxu0 0.0
    %718 = vmatmul.mubr.f32.gmra.mxu0 %v340
    %v719 = vpop.f32.mrf.mxu0
    %v720 = vadd.f32 %v153, %v719
    %v721 = vpop.f32.mrf.mxu0
    %722 = vmatprep.mubr.f32.mxu0 0.0
    %723 = vmatmul.mubr.f32.gmra.mxu0 %v343
    %v724 = vpop.f32.mrf.mxu0
    %v725 = vadd.f32 %v153, %v724
    %v726 = vpop.f32.mrf.mxu0
    %727 = vmatprep.mubr.f32.mxu0 0.0
    %728 = vmatmul.mubr.f32.gmra.mxu0 %v346
    %v729 = vpop.f32.mrf.mxu0
    %v730 = vadd.f32 %v153, %v729
    %v731 = vpop.f32.mrf.mxu0
    %732 = vdwg.mxu0
    %v733 = vmax.f32 %v415, 0.0
    %v734 = vmax.f32 %v420, 0.0
    %v735 = vmax.f32 %v425, 0.0
    %v736 = vmax.f32 %v430, 0.0
    %v737 = vmax.f32 %v435, 0.0
    %v738 = vmax.f32 %v440, 0.0
    %v739 = vmax.f32 %v445, 0.0
    %v740 = vmax.f32 %v450, 0.0
    %v741 = vmax.f32 %v455, 0.0
    %v742 = vmax.f32 %v460, 0.0
    %v743 = vmax.f32 %v465, 0.0
    %v744 = vmax.f32 %v470, 0.0
    %v745 = vmax.f32 %v475, 0.0
    %v746 = vmax.f32 %v480, 0.0
    %v747 = vmax.f32 %v485, 0.0
    %v748 = vmax.f32 %v490, 0.0
    %v749 = vmax.f32 %v495, 0.0
    %v750 = vmax.f32 %v500, 0.0
    %v751 = vmax.f32 %v505, 0.0
    %v752 = vmax.f32 %v510, 0.0
    %v753 = vmax.f32 %v515, 0.0
    %v754 = vmax.f32 %v520, 0.0
    %v755 = vmax.f32 %v525, 0.0
    %v756 = vmax.f32 %v530, 0.0
    %v757 = vmax.f32 %v535, 0.0
    %v758 = vmax.f32 %v540, 0.0
    %v759 = vmax.f32 %v545, 0.0
    %v760 = vmax.f32 %v550, 0.0
    %v761 = vmax.f32 %v555, 0.0
    %v762 = vmax.f32 %v560, 0.0
    %v763 = vmax.f32 %v565, 0.0
    %v764 = vmax.f32 %v570, 0.0
    %v765 = vmax.f32 %v575, 0.0
    %v766 = vmax.f32 %v580, 0.0
    %v767 = vmax.f32 %v585, 0.0
    %v768 = vmax.f32 %v590, 0.0
    %v769 = vmax.f32 %v595, 0.0
    %v770 = vmax.f32 %v600, 0.0
    %v771 = vmax.f32 %v605, 0.0
    %v772 = vmax.f32 %v610, 0.0
    %v773 = vmax.f32 %v615, 0.0
    %v774 = vmax.f32 %v620, 0.0
    %v775 = vmax.f32 %v625, 0.0
    %v776 = vmax.f32 %v630, 0.0
    %v777 = vmax.f32 %v635, 0.0
    %v778 = vmax.f32 %v640, 0.0
    %v779 = vmax.f32 %v645, 0.0
    %v780 = vmax.f32 %v650, 0.0
    %v781 = vmax.f32 %v655, 0.0
    %v782 = vmax.f32 %v660, 0.0
    %v783 = vmax.f32 %v665, 0.0
    %v784 = vmax.f32 %v670, 0.0
    %v785 = vmax.f32 %v675, 0.0
    %v786 = vmax.f32 %v680, 0.0
    %v787 = vmax.f32 %v685, 0.0
    %v788 = vmax.f32 %v690, 0.0
    %v789 = vmax.f32 %v695, 0.0
    %v790 = vmax.f32 %v700, 0.0
    %v791 = vmax.f32 %v705, 0.0
    %v792 = vmax.f32 %v710, 0.0
    %v793 = vmax.f32 %v715, 0.0
    %v794 = vmax.f32 %v720, 0.0
    %v795 = vmax.f32 %v725, 0.0
    %v796 = vmax.f32 %v730, 0.0
    %vm797 = vcmask 261120
    %798 = vst.msk [vmem:[#allocation2] sm:$0xff] %vm797, 0.0
    %799 = vst.msk [vmem:[#allocation2 + $0x8] sm:$0xff] %vm797, 0.0
    %800 = vst.msk [vmem:[#allocation2 + $0x10] sm:$0xff] %vm797, 0.0
    %801 = vst.msk [vmem:[#allocation2 + $0x18] sm:$0xff] %vm797, 0.0
    %802 = vst.msk [vmem:[#allocation2 + $0x240] sm:$0xff] %vm797, 0.0
    %803 = vst.msk [vmem:[#allocation2 + $0x248] sm:$0xff] %vm797, 0.0
    %804 = vst.msk [vmem:[#allocation2 + $0x250] sm:$0xff] %vm797, 0.0
    %805 = vst.msk [vmem:[#allocation2 + $0x258] sm:$0xff] %vm797, 0.0
    %s806 = scalar_lea.vmem [#allocation2], 544
    %807 = vst.msk [vmem:[%s806] sm:$0xff] %vm797, 0.0
    %808 = vst.msk [vmem:[%s806 + $0x8] sm:$0xff] %vm797, 0.0
    %809 = vst.msk [vmem:[%s806 + $0x10] sm:$0xff] %vm797, 0.0
    %810 = vst.msk [vmem:[%s806 + $0x18] sm:$0xff] %vm797, 0.0
    %811 = vst.msk [vmem:[%s806 + $0x240] sm:$0xff] %vm797, 0.0
    %812 = vst.msk [vmem:[%s806 + $0x248] sm:$0xff] %vm797, 0.0
    %813 = vst.msk [vmem:[%s806 + $0x250] sm:$0xff] %vm797, 0.0
    %814 = vst.msk [vmem:[%s806 + $0x258] sm:$0xff] %vm797, 0.0
    %s815 = scalar_lea.vmem [#allocation2], 32
    %vm816 = vcmask 253952
    %817 = vst.msk [vmem:[%s815 + $0x7] sm:$0x1] %vm816, 0.0
    %818 = vst.msk [vmem:[%s815 + $0x27] sm:$0x1] %vm816, 0.0
    %819 = vst.msk [vmem:[%s815 + $0x47] sm:$0x1] %vm816, 0.0
    %820 = vst.msk [vmem:[%s815 + $0x67] sm:$0x1] %vm816, 0.0
    %821 = vst.msk [vmem:[%s815 + $0x87] sm:$0x1] %vm816, 0.0
    %822 = vst.msk [vmem:[%s815 + $0xa7] sm:$0x1] %vm816, 0.0
    %823 = vst.msk [vmem:[%s815 + $0xc7] sm:$0x1] %vm816, 0.0
    %824 = vst.msk [vmem:[%s815 + $0xe7] sm:$0x1] %vm816, 0.0
    %825 = vst.msk [vmem:[%s815 + $0x107] sm:$0x1] %vm816, 0.0
    %826 = vst.msk [vmem:[%s815 + $0x127] sm:$0x1] %vm816, 0.0
    %827 = vst.msk [vmem:[%s815 + $0x147] sm:$0x1] %vm816, 0.0
    %828 = vst.msk [vmem:[%s815 + $0x167] sm:$0x1] %vm816, 0.0
    %829 = vst.msk [vmem:[%s815 + $0x187] sm:$0x1] %vm816, 0.0
    %830 = vst.msk [vmem:[%s815 + $0x1a7] sm:$0x1] %vm816, 0.0
    %831 = vst.msk [vmem:[%s815 + $0x1c7] sm:$0x1] %vm816, 0.0
    %832 = vst.msk [vmem:[%s815 + $0x1e7] sm:$0x1] %vm816, 0.0
    %833 = vst.msk [vmem:[%s815 + $0x247] sm:$0x1] %vm816, 0.0
    %834 = vst.msk [vmem:[%s815 + $0x267] sm:$0x1] %vm816, 0.0
    %835 = vst.msk [vmem:[%s815 + $0x287] sm:$0x1] %vm816, 0.0
    %836 = vst.msk [vmem:[%s815 + $0x2a7] sm:$0x1] %vm816, 0.0
    %837 = vst.msk [vmem:[%s815 + $0x2c7] sm:$0x1] %vm816, 0.0
    %838 = vst.msk [vmem:[%s815 + $0x2e7] sm:$0x1] %vm816, 0.0
    %839 = vst.msk [vmem:[%s815 + $0x307] sm:$0x1] %vm816, 0.0
    %840 = vst.msk [vmem:[%s815 + $0x327] sm:$0x1] %vm816, 0.0
    %841 = vst.msk [vmem:[%s815 + $0x347] sm:$0x1] %vm816, 0.0
    %842 = vst.msk [vmem:[%s815 + $0x367] sm:$0x1] %vm816, 0.0
    %843 = vst.msk [vmem:[%s815 + $0x387] sm:$0x1] %vm816, 0.0
    %844 = vst.msk [vmem:[%s815 + $0x3a7] sm:$0x1] %vm816, 0.0
    %845 = vst.msk [vmem:[%s815 + $0x3c7] sm:$0x1] %vm816, 0.0
    %846 = vst.msk [vmem:[%s815 + $0x3e7] sm:$0x1] %vm816, 0.0
    %847 = vst.msk [vmem:[%s815 + $0x407] sm:$0x1] %vm816, 0.0
    %848 = vst.msk [vmem:[%s815 + $0x427] sm:$0x1] %vm816, 0.0
    %849 = vst.msk [vmem:[%s815 + $0x18] sm:$0x1] %vm816, 0.0
    %850 = vst.msk [vmem:[%s815 + $0x38] sm:$0x1] %vm816, 0.0
    %851 = vst.msk [vmem:[%s815 + $0x58] sm:$0x1] %vm816, 0.0
    %852 = vst.msk [vmem:[%s815 + $0x78] sm:$0x1] %vm816, 0.0
    %853 = vst.msk [vmem:[%s815 + $0x98] sm:$0x1] %vm816, 0.0
    %854 = vst.msk [vmem:[%s815 + $0xb8] sm:$0x1] %vm816, 0.0
    %855 = vst.msk [vmem:[%s815 + $0xd8] sm:$0x1] %vm816, 0.0
    %856 = vst.msk [vmem:[%s815 + $0xf8] sm:$0x1] %vm816, 0.0
    %857 = vst.msk [vmem:[%s815 + $0x118] sm:$0x1] %vm816, 0.0
    %858 = vst.msk [vmem:[%s815 + $0x138] sm:$0x1] %vm816, 0.0
    %859 = vst.msk [vmem:[%s815 + $0x158] sm:$0x1] %vm816, 0.0
    %860 = vst.msk [vmem:[%s815 + $0x178] sm:$0x1] %vm816, 0.0
    %861 = vst.msk [vmem:[%s815 + $0x198] sm:$0x1] %vm816, 0.0
    %862 = vst.msk [vmem:[%s815 + $0x1b8] sm:$0x1] %vm816, 0.0
    %863 = vst.msk [vmem:[%s815 + $0x1d8] sm:$0x1] %vm816, 0.0
    %864 = vst.msk [vmem:[%s815 + $0x1f8] sm:$0x1] %vm816, 0.0
    %865 = vst.msk [vmem:[%s815 + $0x258] sm:$0x1] %vm816, 0.0
    %866 = vst.msk [vmem:[%s815 + $0x278] sm:$0x1] %vm816, 0.0
    %867 = vst.msk [vmem:[%s815 + $0x298] sm:$0x1] %vm816, 0.0
    %868 = vst.msk [vmem:[%s815 + $0x2b8] sm:$0x1] %vm816, 0.0
    %869 = vst.msk [vmem:[%s815 + $0x2d8] sm:$0x1] %vm816, 0.0
    %870 = vst.msk [vmem:[%s815 + $0x2f8] sm:$0x1] %vm816, 0.0
    %871 = vst.msk [vmem:[%s815 + $0x318] sm:$0x1] %vm816, 0.0
    %872 = vst.msk [vmem:[%s815 + $0x338] sm:$0x1] %vm816, 0.0
    %873 = vst.msk [vmem:[%s815 + $0x358] sm:$0x1] %vm816, 0.0
    %874 = vst.msk [vmem:[%s815 + $0x378] sm:$0x1] %vm816, 0.0
    %875 = vst.msk [vmem:[%s815 + $0x398] sm:$0x1] %vm816, 0.0
    %876 = vst.msk [vmem:[%s815 + $0x3b8] sm:$0x1] %vm816, 0.0
    %877 = vst.msk [vmem:[%s815 + $0x3d8] sm:$0x1] %vm816, 0.0
    %878 = vst.msk [vmem:[%s815 + $0x3f8] sm:$0x1] %vm816, 0.0
    %879 = vst.msk [vmem:[%s815 + $0x418] sm:$0x1] %vm816, 0.0
    %880 = vst.msk [vmem:[%s815 + $0x438] sm:$0x1] %vm816, 0.0
    %881 = vst.msk [vmem:[%s815 + $0x8] sm:$0xff] %vm797, %v733
    %882 = vst.msk [vmem:[%s815 + $0x10] sm:$0xff] %vm797, %v734
    %883 = vst.msk [vmem:[%s815 + $0x28] sm:$0xff] %vm797, %v735
    %884 = vst.msk [vmem:[%s815 + $0x30] sm:$0xff] %vm797, %v736
    %885 = vst.msk [vmem:[%s815 + $0x48] sm:$0xff] %vm797, %v737
    %886 = vst.msk [vmem:[%s815 + $0x50] sm:$0xff] %vm797, %v738
    %887 = vst.msk [vmem:[%s815 + $0x68] sm:$0xff] %vm797, %v739
    %888 = vst.msk [vmem:[%s815 + $0x70] sm:$0xff] %vm797, %v740
    %889 = vst.msk [vmem:[%s815 + $0x88] sm:$0xff] %vm797, %v741
    %890 = vst.msk [vmem:[%s815 + $0x90] sm:$0xff] %vm797, %v742
    %891 = vst.msk [vmem:[%s815 + $0xa8] sm:$0xff] %vm797, %v743
    %892 = vst.msk [vmem:[%s815 + $0xb0] sm:$0xff] %vm797, %v744
    %893 = vst.msk [vmem:[%s815 + $0xc8] sm:$0xff] %vm797, %v745
    %894 = vst.msk [vmem:[%s815 + $0xd0] sm:$0xff] %vm797, %v746
    %895 = vst.msk [vmem:[%s815 + $0xe8] sm:$0xff] %vm797, %v747
    %896 = vst.msk [vmem:[%s815 + $0xf0] sm:$0xff] %vm797, %v748
    %897 = vst.msk [vmem:[%s815 + $0x108] sm:$0xff] %vm797, %v749
    %898 = vst.msk [vmem:[%s815 + $0x110] sm:$0xff] %vm797, %v750
    %899 = vst.msk [vmem:[%s815 + $0x128] sm:$0xff] %vm797, %v751
    %900 = vst.msk [vmem:[%s815 + $0x130] sm:$0xff] %vm797, %v752
    %901 = vst.msk [vmem:[%s815 + $0x148] sm:$0xff] %vm797, %v753
    %902 = vst.msk [vmem:[%s815 + $0x150] sm:$0xff] %vm797, %v754
    %903 = vst.msk [vmem:[%s815 + $0x168] sm:$0xff] %vm797, %v755
    %904 = vst.msk [vmem:[%s815 + $0x170] sm:$0xff] %vm797, %v756
    %905 = vst.msk [vmem:[%s815 + $0x188] sm:$0xff] %vm797, %v757
    %906 = vst.msk [vmem:[%s815 + $0x190] sm:$0xff] %vm797, %v758
    %907 = vst.msk [vmem:[%s815 + $0x1a8] sm:$0xff] %vm797, %v759
    %908 = vst.msk [vmem:[%s815 + $0x1b0] sm:$0xff] %vm797, %v760
    %909 = vst.msk [vmem:[%s815 + $0x1c8] sm:$0xff] %vm797, %v761
    %910 = vst.msk [vmem:[%s815 + $0x1d0] sm:$0xff] %vm797, %v762
    %911 = vst.msk [vmem:[%s815 + $0x1e8] sm:$0xff] %vm797, %v763
    %912 = vst.msk [vmem:[%s815 + $0x1f0] sm:$0xff] %vm797, %v764
    %913 = vst.msk [vmem:[%s815 + $0x248] sm:$0xff] %vm797, %v765
    %914 = vst.msk [vmem:[%s815 + $0x250] sm:$0xff] %vm797, %v766
    %915 = vst.msk [vmem:[%s815 + $0x268] sm:$0xff] %vm797, %v767
    %916 = vst.msk [vmem:[%s815 + $0x270] sm:$0xff] %vm797, %v768
    %917 = vst.msk [vmem:[%s815 + $0x288] sm:$0xff] %vm797, %v769
    %918 = vst.msk [vmem:[%s815 + $0x290] sm:$0xff] %vm797, %v770
    %919 = vst.msk [vmem:[%s815 + $0x2a8] sm:$0xff] %vm797, %v771
    %920 = vst.msk [vmem:[%s815 + $0x2b0] sm:$0xff] %vm797, %v772
    %921 = vst.msk [vmem:[%s815 + $0x2c8] sm:$0xff] %vm797, %v773
    %922 = vst.msk [vmem:[%s815 + $0x2d0] sm:$0xff] %vm797, %v774
    %923 = vst.msk [vmem:[%s815 + $0x2e8] sm:$0xff] %vm797, %v775
    %924 = vst.msk [vmem:[%s815 + $0x2f0] sm:$0xff] %vm797, %v776
    %925 = vst.msk [vmem:[%s815 + $0x308] sm:$0xff] %vm797, %v777
    %926 = vst.msk [vmem:[%s815 + $0x310] sm:$0xff] %vm797, %v778
    %927 = vst.msk [vmem:[%s815 + $0x328] sm:$0xff] %vm797, %v779
    %928 = vst.msk [vmem:[%s815 + $0x330] sm:$0xff] %vm797, %v780
    %929 = vst.msk [vmem:[%s815 + $0x348] sm:$0xff] %vm797, %v781
    %930 = vst.msk [vmem:[%s815 + $0x350] sm:$0xff] %vm797, %v782
    %931 = vst.msk [vmem:[%s815 + $0x368] sm:$0xff] %vm797, %v783
    %932 = vst.msk [vmem:[%s815 + $0x370] sm:$0xff] %vm797, %v784
    %933 = vst.msk [vmem:[%s815 + $0x388] sm:$0xff] %vm797, %v785
    %934 = vst.msk [vmem:[%s815 + $0x390] sm:$0xff] %vm797, %v786
    %935 = vst.msk [vmem:[%s815 + $0x3a8] sm:$0xff] %vm797, %v787
    %936 = vst.msk [vmem:[%s815 + $0x3b0] sm:$0xff] %vm797, %v788
    %937 = vst.msk [vmem:[%s815 + $0x3c8] sm:$0xff] %vm797, %v789
    %938 = vst.msk [vmem:[%s815 + $0x3d0] sm:$0xff] %vm797, %v790
    %939 = vst.msk [vmem:[%s815 + $0x3e8] sm:$0xff] %vm797, %v791
    %940 = vst.msk [vmem:[%s815 + $0x3f0] sm:$0xff] %vm797, %v792
    %941 = vst.msk [vmem:[%s815 + $0x408] sm:$0xff] %vm797, %v793
    %942 = vst.msk [vmem:[%s815 + $0x410] sm:$0xff] %vm797, %v794
    %943 = vst.msk [vmem:[%s815 + $0x428] sm:$0xff] %vm797, %v795
    %944 = vst.msk [vmem:[%s815 + $0x430] sm:$0xff] %vm797, %v796
    %v945 = vld [vmem:[#allocation2 + $0x7] sm:$0xff]
    %v946 = vld [vmem:[#allocation2 + $0xf] sm:$0xff]
    %v947 = vld [vmem:[#allocation2 + $0x27] sm:$0xff]
    %v948 = vld [vmem:[#allocation2 + $0x2f] sm:$0xff]
    %v949 = vld [vmem:[#allocation2 + $0x47] sm:$0xff]
    %v950 = vld [vmem:[#allocation2 + $0x4f] sm:$0xff]
    %v951 = vld [vmem:[#allocation2 + $0x67] sm:$0xff]
    %v952 = vld [vmem:[#allocation2 + $0x6f] sm:$0xff]
    %v953 = vld [vmem:[#allocation2 + $0x247] sm:$0xff]
    %v954 = vld [vmem:[#allocation2 + $0x24f] sm:$0xff]
    %v955 = vld [vmem:[#allocation2 + $0x267] sm:$0xff]
    %v956 = vld [vmem:[#allocation2 + $0x26f] sm:$0xff]
    %v957 = vld [vmem:[#allocation2 + $0x287] sm:$0xff]
    %v958 = vld [vmem:[#allocation2 + $0x28f] sm:$0xff]
    %v959 = vld [vmem:[#allocation2 + $0x2a7] sm:$0xff]
    %v960 = vld [vmem:[#allocation2 + $0x2af] sm:$0xff]
    %v961 = vld [vmem:[#allocation8] sm:$0x1]
    %v963 = vlaneseq
    %v964 = vshrl.u32 %v963, 7
    %v965 = vsub.s32 0, %v964
    %v966 = vrot.slane %v961, %v965
    %v968 = vmul.f32 %v945, %v966
    %v969 = vmul.f32 %v946, %v966
    %v970 = vmul.f32 %v947, %v966
    %v971 = vmul.f32 %v948, %v966
    %v972 = vmul.f32 %v949, %v966
    %v973 = vmul.f32 %v950, %v966
    %v974 = vmul.f32 %v951, %v966
    %v975 = vmul.f32 %v952, %v966
    %v976 = vmul.f32 %v953, %v966
    %v977 = vmul.f32 %v954, %v966
    %v978 = vmul.f32 %v955, %v966
    %v979 = vmul.f32 %v956, %v966
    %v980 = vmul.f32 %v957, %v966
    %v981 = vmul.f32 %v958, %v966
    %v982 = vmul.f32 %v959, %v966
    %v983 = vmul.f32 %v960, %v966
    %v984 = vld [vmem:[#allocation2 + $0x8] sm:$0xff]
    %v985 = vld [vmem:[#allocation2 + $0x10] sm:$0xff]
    %v986 = vld [vmem:[#allocation2 + $0x28] sm:$0xff]
    %v987 = vld [vmem:[#allocation2 + $0x30] sm:$0xff]
    %v988 = vld [vmem:[#allocation2 + $0x48] sm:$0xff]
    %v989 = vld [vmem:[#allocation2 + $0x50] sm:$0xff]
    %v990 = vld [vmem:[#allocation2 + $0x68] sm:$0xff]
    %v991 = vld [vmem:[#allocation2 + $0x70] sm:$0xff]
    %v992 = vld [vmem:[#allocation2 + $0x248] sm:$0xff]
    %v993 = vld [vmem:[#allocation2 + $0x250] sm:$0xff]
    %v994 = vld [vmem:[#allocation2 + $0x268] sm:$0xff]
    %v995 = vld [vmem:[#allocation2 + $0x270] sm:$0xff]
    %v996 = vld [vmem:[#allocation2 + $0x288] sm:$0xff]
    %v997 = vld [vmem:[#allocation2 + $0x290] sm:$0xff]
    %v998 = vld [vmem:[#allocation2 + $0x2a8] sm:$0xff]
    %v999 = vld [vmem:[#allocation2 + $0x2b0] sm:$0xff]
    %s1000 = scalar_lea.vmem [#allocation8], 1
    %v1001 = vld [vmem:[%s1000] sm:$0x1]
    %v1003 = vlaneseq
    %v1004 = vshrl.u32 %v1003, 7
    %v1005 = vsub.s32 0, %v1004
    %v1006 = vrot.slane %v1001, %v1005
    %v1008 = vmul.f32 %v984, %v1006
    %v1009 = vmul.f32 %v985, %v1006
    %v1010 = vmul.f32 %v986, %v1006
    %v1011 = vmul.f32 %v987, %v1006
    %v1012 = vmul.f32 %v988, %v1006
    %v1013 = vmul.f32 %v989, %v1006
    %v1014 = vmul.f32 %v990, %v1006
    %v1015 = vmul.f32 %v991, %v1006
    %v1016 = vmul.f32 %v992, %v1006
    %v1017 = vmul.f32 %v993, %v1006
    %v1018 = vmul.f32 %v994, %v1006
    %v1019 = vmul.f32 %v995, %v1006
    %v1020 = vmul.f32 %v996, %v1006
    %v1021 = vmul.f32 %v997, %v1006
    %v1022 = vmul.f32 %v998, %v1006
    %v1023 = vmul.f32 %v999, %v1006
    %v1024 = vadd.f32 %v968, %v1008
    %v1025 = vadd.f32 %v969, %v1009
    %v1026 = vadd.f32 %v970, %v1010
    %v1027 = vadd.f32 %v971, %v1011
    %v1028 = vadd.f32 %v972, %v1012
    %v1029 = vadd.f32 %v973, %v1013
    %v1030 = vadd.f32 %v974, %v1014
    %v1031 = vadd.f32 %v975, %v1015
    %v1032 = vadd.f32 %v976, %v1016
    %v1033 = vadd.f32 %v977, %v1017
    %v1034 = vadd.f32 %v978, %v1018
    %v1035 = vadd.f32 %v979, %v1019
    %v1036 = vadd.f32 %v980, %v1020
    %v1037 = vadd.f32 %v981, %v1021
    %v1038 = vadd.f32 %v982, %v1022
    %v1039 = vadd.f32 %v983, %v1023
    %v1040 = vld [vmem:[#allocation2 + $0x9] sm:$0xff]
    %v1041 = vld [vmem:[#allocation2 + $0x11] sm:$0xff]
    %v1042 = vld [vmem:[#allocation2 + $0x29] sm:$0xff]
    %v1043 = vld [vmem:[#allocation2 + $0x31] sm:$0xff]
    %v1044 = vld [vmem:[#allocation2 + $0x49] sm:$0xff]
    %v1045 = vld [vmem:[#allocation2 + $0x51] sm:$0xff]
    %v1046 = vld [vmem:[#allocation2 + $0x69] sm:$0xff]
    %v1047 = vld [vmem:[#allocation2 + $0x71] sm:$0xff]
    %v1048 = vld [vmem:[#allocation2 + $0x249] sm:$0xff]
    %v1049 = vld [vmem:[#allocation2 + $0x251] sm:$0xff]
    %v1050 = vld [vmem:[#allocation2 + $0x269] sm:$0xff]
    %v1051 = vld [vmem:[#allocation2 + $0x271] sm:$0xff]
    %v1052 = vld [vmem:[#allocation2 + $0x289] sm:$0xff]
    %v1053 = vld [vmem:[#allocation2 + $0x291] sm:$0xff]
    %v1054 = vld [vmem:[#allocation2 + $0x2a9] sm:$0xff]
    %v1055 = vld [vmem:[#allocation2 + $0x2b1] sm:$0xff]
    %s1056 = scalar_lea.vmem [#allocation8], 2
    %v1057 = vld [vmem:[%s1056] sm:$0x1]
    %v1059 = vlaneseq
    %v1060 = vshrl.u32 %v1059, 7
    %v1061 = vsub.s32 0, %v1060
    %v1062 = vrot.slane %v1057, %v1061
    %v1064 = vmul.f32 %v1040, %v1062
    %v1065 = vmul.f32 %v1041, %v1062
    %v1066 = vmul.f32 %v1042, %v1062
    %v1067 = vmul.f32 %v1043, %v1062
    %v1068 = vmul.f32 %v1044, %v1062
    %v1069 = vmul.f32 %v1045, %v1062
    %v1070 = vmul.f32 %v1046, %v1062
    %v1071 = vmul.f32 %v1047, %v1062
    %v1072 = vmul.f32 %v1048, %v1062
    %v1073 = vmul.f32 %v1049, %v1062
    %v1074 = vmul.f32 %v1050, %v1062
    %v1075 = vmul.f32 %v1051, %v1062
    %v1076 = vmul.f32 %v1052, %v1062
    %v1077 = vmul.f32 %v1053, %v1062
    %v1078 = vmul.f32 %v1054, %v1062
    %v1079 = vmul.f32 %v1055, %v1062
    %v1080 = vadd.f32 %v1024, %v1064
    %v1081 = vadd.f32 %v1025, %v1065
    %v1082 = vadd.f32 %v1026, %v1066
    %v1083 = vadd.f32 %v1027, %v1067
    %v1084 = vadd.f32 %v1028, %v1068
    %v1085 = vadd.f32 %v1029, %v1069
    %v1086 = vadd.f32 %v1030, %v1070
    %v1087 = vadd.f32 %v1031, %v1071
    %v1088 = vadd.f32 %v1032, %v1072
    %v1089 = vadd.f32 %v1033, %v1073
    %v1090 = vadd.f32 %v1034, %v1074
    %v1091 = vadd.f32 %v1035, %v1075
    %v1092 = vadd.f32 %v1036, %v1076
    %v1093 = vadd.f32 %v1037, %v1077
    %v1094 = vadd.f32 %v1038, %v1078
    %v1095 = vadd.f32 %v1039, %v1079
    %v1096 = vld [vmem:[%s815 + $0x7] sm:$0xff]
    %v1097 = vld [vmem:[%s815 + $0xf] sm:$0xff]
    %v1098 = vld [vmem:[%s815 + $0x27] sm:$0xff]
    %v1099 = vld [vmem:[%s815 + $0x2f] sm:$0xff]
    %v1100 = vld [vmem:[%s815 + $0x47] sm:$0xff]
    %v1101 = vld [vmem:[%s815 + $0x4f] sm:$0xff]
    %v1102 = vld [vmem:[%s815 + $0x67] sm:$0xff]
    %v1103 = vld [vmem:[%s815 + $0x6f] sm:$0xff]
    %v1104 = vld [vmem:[%s815 + $0x247] sm:$0xff]
    %v1105 = vld [vmem:[%s815 + $0x24f] sm:$0xff]
    %v1106 = vld [vmem:[%s815 + $0x267] sm:$0xff]
    %v1107 = vld [vmem:[%s815 + $0x26f] sm:$0xff]
    %v1108 = vld [vmem:[%s815 + $0x287] sm:$0xff]
    %v1109 = vld [vmem:[%s815 + $0x28f] sm:$0xff]
    %v1110 = vld [vmem:[%s815 + $0x2a7] sm:$0xff]
    %v1111 = vld [vmem:[%s815 + $0x2af] sm:$0xff]
    %s1112 = scalar_lea.vmem [#allocation8], 3
    %v1113 = vld [vmem:[%s1112] sm:$0x1]
    %v1115 = vlaneseq
    %v1116 = vshrl.u32 %v1115, 7
    %v1117 = vsub.s32 0, %v1116
    %v1118 = vrot.slane %v1113, %v1117
    %v1120 = vmul.f32 %v1096, %v1118
    %v1121 = vmul.f32 %v1097, %v1118
    %v1122 = vmul.f32 %v1098, %v1118
    %v1123 = vmul.f32 %v1099, %v1118
    %v1124 = vmul.f32 %v1100, %v1118
    %v1125 = vmul.f32 %v1101, %v1118
    %v1126 = vmul.f32 %v1102, %v1118
    %v1127 = vmul.f32 %v1103, %v1118
    %v1128 = vmul.f32 %v1104, %v1118
    %v1129 = vmul.f32 %v1105, %v1118
    %v1130 = vmul.f32 %v1106, %v1118
    %v1131 = vmul.f32 %v1107, %v1118
    %v1132 = vmul.f32 %v1108, %v1118
    %v1133 = vmul.f32 %v1109, %v1118
    %v1134 = vmul.f32 %v1110, %v1118
    %v1135 = vmul.f32 %v1111, %v1118
    %v1136 = vadd.f32 %v1080, %v1120
    %v1137 = vadd.f32 %v1081, %v1121
    %v1138 = vadd.f32 %v1082, %v1122
    %v1139 = vadd.f32 %v1083, %v1123
    %v1140 = vadd.f32 %v1084, %v1124
    %v1141 = vadd.f32 %v1085, %v1125
    %v1142 = vadd.f32 %v1086, %v1126
    %v1143 = vadd.f32 %v1087, %v1127
    %v1144 = vadd.f32 %v1088, %v1128
    %v1145 = vadd.f32 %v1089, %v1129
    %v1146 = vadd.f32 %v1090, %v1130
    %v1147 = vadd.f32 %v1091, %v1131
    %v1148 = vadd.f32 %v1092, %v1132
    %v1149 = vadd.f32 %v1093, %v1133
    %v1150 = vadd.f32 %v1094, %v1134
    %v1151 = vadd.f32 %v1095, %v1135
    %v1152 = vld [vmem:[%s815 + $0x8] sm:$0xff]
    %v1153 = vld [vmem:[%s815 + $0x10] sm:$0xff]
    %v1154 = vld [vmem:[%s815 + $0x28] sm:$0xff]
    %v1155 = vld [vmem:[%s815 + $0x30] sm:$0xff]
    %v1156 = vld [vmem:[%s815 + $0x48] sm:$0xff]
    %v1157 = vld [vmem:[%s815 + $0x50] sm:$0xff]
    %v1158 = vld [vmem:[%s815 + $0x68] sm:$0xff]
    %v1159 = vld [vmem:[%s815 + $0x70] sm:$0xff]
    %v1160 = vld [vmem:[%s815 + $0x248] sm:$0xff]
    %v1161 = vld [vmem:[%s815 + $0x250] sm:$0xff]
    %v1162 = vld [vmem:[%s815 + $0x268] sm:$0xff]
    %v1163 = vld [vmem:[%s815 + $0x270] sm:$0xff]
    %v1164 = vld [vmem:[%s815 + $0x288] sm:$0xff]
    %v1165 = vld [vmem:[%s815 + $0x290] sm:$0xff]
    %v1166 = vld [vmem:[%s815 + $0x2a8] sm:$0xff]
    %v1167 = vld [vmem:[%s815 + $0x2b0] sm:$0xff]
    %s1168 = scalar_lea.vmem [#allocation8], 4
    %v1169 = vld [vmem:[%s1168] sm:$0x1]
    %v1171 = vlaneseq
    %v1172 = vshrl.u32 %v1171, 7
    %v1173 = vsub.s32 0, %v1172
    %v1174 = vrot.slane %v1169, %v1173
    %v1176 = vmul.f32 %v1152, %v1174
    %v1177 = vmul.f32 %v1153, %v1174
    %v1178 = vmul.f32 %v1154, %v1174
    %v1179 = vmul.f32 %v1155, %v1174
    %v1180 = vmul.f32 %v1156, %v1174
    %v1181 = vmul.f32 %v1157, %v1174
    %v1182 = vmul.f32 %v1158, %v1174
    %v1183 = vmul.f32 %v1159, %v1174
    %v1184 = vmul.f32 %v1160, %v1174
    %v1185 = vmul.f32 %v1161, %v1174
    %v1186 = vmul.f32 %v1162, %v1174
    %v1187 = vmul.f32 %v1163, %v1174
    %v1188 = vmul.f32 %v1164, %v1174
    %v1189 = vmul.f32 %v1165, %v1174
    %v1190 = vmul.f32 %v1166, %v1174
    %v1191 = vmul.f32 %v1167, %v1174
    %v1192 = vadd.f32 %v1136, %v1176
    %v1193 = vadd.f32 %v1137, %v1177
    %v1194 = vadd.f32 %v1138, %v1178
    %v1195 = vadd.f32 %v1139, %v1179
    %v1196 = vadd.f32 %v1140, %v1180
    %v1197 = vadd.f32 %v1141, %v1181
    %v1198 = vadd.f32 %v1142, %v1182
    %v1199 = vadd.f32 %v1143, %v1183
    %v1200 = vadd.f32 %v1144, %v1184
    %v1201 = vadd.f32 %v1145, %v1185
    %v1202 = vadd.f32 %v1146, %v1186
    %v1203 = vadd.f32 %v1147, %v1187
    %v1204 = vadd.f32 %v1148, %v1188
    %v1205 = vadd.f32 %v1149, %v1189
    %v1206 = vadd.f32 %v1150, %v1190
    %v1207 = vadd.f32 %v1151, %v1191
    %v1208 = vld [vmem:[%s815 + $0x9] sm:$0xff]
    %v1209 = vld [vmem:[%s815 + $0x11] sm:$0xff]
    %v1210 = vld [vmem:[%s815 + $0x29] sm:$0xff]
    %v1211 = vld [vmem:[%s815 + $0x31] sm:$0xff]
    %v1212 = vld [vmem:[%s815 + $0x49] sm:$0xff]
    %v1213 = vld [vmem:[%s815 + $0x51] sm:$0xff]
    %v1214 = vld [vmem:[%s815 + $0x69] sm:$0xff]
    %v1215 = vld [vmem:[%s815 + $0x71] sm:$0xff]
    %v1216 = vld [vmem:[%s815 + $0x249] sm:$0xff]
    %v1217 = vld [vmem:[%s815 + $0x251] sm:$0xff]
    %v1218 = vld [vmem:[%s815 + $0x269] sm:$0xff]
    %v1219 = vld [vmem:[%s815 + $0x271] sm:$0xff]
    %v1220 = vld [vmem:[%s815 + $0x289] sm:$0xff]
    %v1221 = vld [vmem:[%s815 + $0x291] sm:$0xff]
    %v1222 = vld [vmem:[%s815 + $0x2a9] sm:$0xff]
    %v1223 = vld [vmem:[%s815 + $0x2b1] sm:$0xff]
    %s1224 = scalar_lea.vmem [#allocation8], 5
    %v1225 = vld [vmem:[%s1224] sm:$0x1]
    %v1227 = vlaneseq
    %v1228 = vshrl.u32 %v1227, 7
    %v1229 = vsub.s32 0, %v1228
    %v1230 = vrot.slane %v1225, %v1229
    %v1232 = vmul.f32 %v1208, %v1230
    %v1233 = vmul.f32 %v1209, %v1230
    %v1234 = vmul.f32 %v1210, %v1230
    %v1235 = vmul.f32 %v1211, %v1230
    %v1236 = vmul.f32 %v1212, %v1230
    %v1237 = vmul.f32 %v1213, %v1230
    %v1238 = vmul.f32 %v1214, %v1230
    %v1239 = vmul.f32 %v1215, %v1230
    %v1240 = vmul.f32 %v1216, %v1230
    %v1241 = vmul.f32 %v1217, %v1230
    %v1242 = vmul.f32 %v1218, %v1230
    %v1243 = vmul.f32 %v1219, %v1230
    %v1244 = vmul.f32 %v1220, %v1230
    %v1245 = vmul.f32 %v1221, %v1230
    %v1246 = vmul.f32 %v1222, %v1230
    %v1247 = vmul.f32 %v1223, %v1230
    %v1248 = vadd.f32 %v1192, %v1232
    %v1249 = vadd.f32 %v1193, %v1233
    %v1250 = vadd.f32 %v1194, %v1234
    %v1251 = vadd.f32 %v1195, %v1235
    %v1252 = vadd.f32 %v1196, %v1236
    %v1253 = vadd.f32 %v1197, %v1237
    %v1254 = vadd.f32 %v1198, %v1238
    %v1255 = vadd.f32 %v1199, %v1239
    %v1256 = vadd.f32 %v1200, %v1240
    %v1257 = vadd.f32 %v1201, %v1241
    %v1258 = vadd.f32 %v1202, %v1242
    %v1259 = vadd.f32 %v1203, %v1243
    %v1260 = vadd.f32 %v1204, %v1244
    %v1261 = vadd.f32 %v1205, %v1245
    %v1262 = vadd.f32 %v1206, %v1246
    %v1263 = vadd.f32 %v1207, %v1247
    %s1264 = scalar_lea.vmem [#allocation2], 64
    %v1265 = vld [vmem:[%s1264 + $0x7] sm:$0xff]
    %v1266 = vld [vmem:[%s1264 + $0xf] sm:$0xff]
    %v1267 = vld [vmem:[%s1264 + $0x27] sm:$0xff]
    %v1268 = vld [vmem:[%s1264 + $0x2f] sm:$0xff]
    %v1269 = vld [vmem:[%s1264 + $0x47] sm:$0xff]
    %v1270 = vld [vmem:[%s1264 + $0x4f] sm:$0xff]
    %v1271 = vld [vmem:[%s1264 + $0x67] sm:$0xff]
    %v1272 = vld [vmem:[%s1264 + $0x6f] sm:$0xff]
    %v1273 = vld [vmem:[%s1264 + $0x247] sm:$0xff]
    %v1274 = vld [vmem:[%s1264 + $0x24f] sm:$0xff]
    %v1275 = vld [vmem:[%s1264 + $0x267] sm:$0xff]
    %v1276 = vld [vmem:[%s1264 + $0x26f] sm:$0xff]
    %v1277 = vld [vmem:[%s1264 + $0x287] sm:$0xff]
    %v1278 = vld [vmem:[%s1264 + $0x28f] sm:$0xff]
    %v1279 = vld [vmem:[%s1264 + $0x2a7] sm:$0xff]
    %v1280 = vld [vmem:[%s1264 + $0x2af] sm:$0xff]
    %s1281 = scalar_lea.vmem [#allocation8], 6
    %v1282 = vld [vmem:[%s1281] sm:$0x1]
    %v1284 = vlaneseq
    %v1285 = vshrl.u32 %v1284, 7
    %v1286 = vsub.s32 0, %v1285
    %v1287 = vrot.slane %v1282, %v1286
    %v1289 = vmul.f32 %v1265, %v1287
    %v1290 = vmul.f32 %v1266, %v1287
    %v1291 = vmul.f32 %v1267, %v1287
    %v1292 = vmul.f32 %v1268, %v1287
    %v1293 = vmul.f32 %v1269, %v1287
    %v1294 = vmul.f32 %v1270, %v1287
    %v1295 = vmul.f32 %v1271, %v1287
    %v1296 = vmul.f32 %v1272, %v1287
    %v1297 = vmul.f32 %v1273, %v1287
    %v1298 = vmul.f32 %v1274, %v1287
    %v1299 = vmul.f32 %v1275, %v1287
    %v1300 = vmul.f32 %v1276, %v1287
    %v1301 = vmul.f32 %v1277, %v1287
    %v1302 = vmul.f32 %v1278, %v1287
    %v1303 = vmul.f32 %v1279, %v1287
    %v1304 = vmul.f32 %v1280, %v1287
    %v1305 = vadd.f32 %v1248, %v1289
    %v1306 = vadd.f32 %v1249, %v1290
    %v1307 = vadd.f32 %v1250, %v1291
    %v1308 = vadd.f32 %v1251, %v1292
    %v1309 = vadd.f32 %v1252, %v1293
    %v1310 = vadd.f32 %v1253, %v1294
    %v1311 = vadd.f32 %v1254, %v1295
    %v1312 = vadd.f32 %v1255, %v1296
    %v1313 = vadd.f32 %v1256, %v1297
    %v1314 = vadd.f32 %v1257, %v1298
    %v1315 = vadd.f32 %v1258, %v1299
    %v1316 = vadd.f32 %v1259, %v1300
    %v1317 = vadd.f32 %v1260, %v1301
    %v1318 = vadd.f32 %v1261, %v1302
    %v1319 = vadd.f32 %v1262, %v1303
    %v1320 = vadd.f32 %v1263, %v1304
    %v1321 = vld [vmem:[%s1264 + $0x8] sm:$0xff]
    %v1322 = vld [vmem:[%s1264 + $0x10] sm:$0xff]
    %v1323 = vld [vmem:[%s1264 + $0x28] sm:$0xff]
    %v1324 = vld [vmem:[%s1264 + $0x30] sm:$0xff]
    %v1325 = vld [vmem:[%s1264 + $0x48] sm:$0xff]
    %v1326 = vld [vmem:[%s1264 + $0x50] sm:$0xff]
    %v1327 = vld [vmem:[%s1264 + $0x68] sm:$0xff]
    %v1328 = vld [vmem:[%s1264 + $0x70] sm:$0xff]
    %v1329 = vld [vmem:[%s1264 + $0x248] sm:$0xff]
    %v1330 = vld [vmem:[%s1264 + $0x250] sm:$0xff]
    %v1331 = vld [vmem:[%s1264 + $0x268] sm:$0xff]
    %v1332 = vld [vmem:[%s1264 + $0x270] sm:$0xff]
    %v1333 = vld [vmem:[%s1264 + $0x288] sm:$0xff]
    %v1334 = vld [vmem:[%s1264 + $0x290] sm:$0xff]
    %v1335 = vld [vmem:[%s1264 + $0x2a8] sm:$0xff]
    %v1336 = vld [vmem:[%s1264 + $0x2b0] sm:$0xff]
    %s1337 = scalar_lea.vmem [#allocation8], 7
    %v1338 = vld [vmem:[%s1337] sm:$0x1]
    %v1340 = vlaneseq
    %v1341 = vshrl.u32 %v1340, 7
    %v1342 = vsub.s32 0, %v1341
    %v1343 = vrot.slane %v1338, %v1342
    %v1345 = vmul.f32 %v1321, %v1343
    %v1346 = vmul.f32 %v1322, %v1343
    %v1347 = vmul.f32 %v1323, %v1343
    %v1348 = vmul.f32 %v1324, %v1343
    %v1349 = vmul.f32 %v1325, %v1343
    %v1350 = vmul.f32 %v1326, %v1343
    %v1351 = vmul.f32 %v1327, %v1343
    %v1352 = vmul.f32 %v1328, %v1343
    %v1353 = vmul.f32 %v1329, %v1343
    %v1354 = vmul.f32 %v1330, %v1343
    %v1355 = vmul.f32 %v1331, %v1343
    %v1356 = vmul.f32 %v1332, %v1343
    %v1357 = vmul.f32 %v1333, %v1343
    %v1358 = vmul.f32 %v1334, %v1343
    %v1359 = vmul.f32 %v1335, %v1343
    %v1360 = vmul.f32 %v1336, %v1343
    %v1361 = vadd.f32 %v1305, %v1345
    %v1362 = vadd.f32 %v1306, %v1346
    %v1363 = vadd.f32 %v1307, %v1347
    %v1364 = vadd.f32 %v1308, %v1348
    %v1365 = vadd.f32 %v1309, %v1349
    %v1366 = vadd.f32 %v1310, %v1350
    %v1367 = vadd.f32 %v1311, %v1351
    %v1368 = vadd.f32 %v1312, %v1352
    %v1369 = vadd.f32 %v1313, %v1353
    %v1370 = vadd.f32 %v1314, %v1354
    %v1371 = vadd.f32 %v1315, %v1355
    %v1372 = vadd.f32 %v1316, %v1356
    %v1373 = vadd.f32 %v1317, %v1357
    %v1374 = vadd.f32 %v1318, %v1358
    %v1375 = vadd.f32 %v1319, %v1359
    %v1376 = vadd.f32 %v1320, %v1360
    %v1377 = vld [vmem:[%s1264 + $0x9] sm:$0xff]
    %v1378 = vld [vmem:[%s1264 + $0x11] sm:$0xff]
    %v1379 = vld [vmem:[%s1264 + $0x29] sm:$0xff]
    %v1380 = vld [vmem:[%s1264 + $0x31] sm:$0xff]
    %v1381 = vld [vmem:[%s1264 + $0x49] sm:$0xff]
    %v1382 = vld [vmem:[%s1264 + $0x51] sm:$0xff]
    %v1383 = vld [vmem:[%s1264 + $0x69] sm:$0xff]
    %v1384 = vld [vmem:[%s1264 + $0x71] sm:$0xff]
    %v1385 = vld [vmem:[%s1264 + $0x249] sm:$0xff]
    %v1386 = vld [vmem:[%s1264 + $0x251] sm:$0xff]
    %v1387 = vld [vmem:[%s1264 + $0x269] sm:$0xff]
    %v1388 = vld [vmem:[%s1264 + $0x271] sm:$0xff]
    %v1389 = vld [vmem:[%s1264 + $0x289] sm:$0xff]
    %v1390 = vld [vmem:[%s1264 + $0x291] sm:$0xff]
    %v1391 = vld [vmem:[%s1264 + $0x2a9] sm:$0xff]
    %v1392 = vld [vmem:[%s1264 + $0x2b1] sm:$0xff]
    %s1393 = scalar_lea.vmem [#allocation8], 8
    %v1394 = vld [vmem:[%s1393] sm:$0x1]
    %v1396 = vlaneseq
    %v1397 = vshrl.u32 %v1396, 7
    %v1398 = vsub.s32 0, %v1397
    %v1399 = vrot.slane %v1394, %v1398
    %v1401 = vmul.f32 %v1377, %v1399
    %v1402 = vmul.f32 %v1378, %v1399
    %v1403 = vmul.f32 %v1379, %v1399
    %v1404 = vmul.f32 %v1380, %v1399
    %v1405 = vmul.f32 %v1381, %v1399
    %v1406 = vmul.f32 %v1382, %v1399
    %v1407 = vmul.f32 %v1383, %v1399
    %v1408 = vmul.f32 %v1384, %v1399
    %v1409 = vmul.f32 %v1385, %v1399
    %v1410 = vmul.f32 %v1386, %v1399
    %v1411 = vmul.f32 %v1387, %v1399
    %v1412 = vmul.f32 %v1388, %v1399
    %v1413 = vmul.f32 %v1389, %v1399
    %v1414 = vmul.f32 %v1390, %v1399
    %v1415 = vmul.f32 %v1391, %v1399
    %v1416 = vmul.f32 %v1392, %v1399
    %v1417 = vadd.f32 %v1361, %v1401
    %v1418 = vadd.f32 %v1362, %v1402
    %v1419 = vadd.f32 %v1363, %v1403
    %v1420 = vadd.f32 %v1364, %v1404
    %v1421 = vadd.f32 %v1365, %v1405
    %v1422 = vadd.f32 %v1366, %v1406
    %v1423 = vadd.f32 %v1367, %v1407
    %v1424 = vadd.f32 %v1368, %v1408
    %v1425 = vadd.f32 %v1369, %v1409
    %v1426 = vadd.f32 %v1370, %v1410
    %v1427 = vadd.f32 %v1371, %v1411
    %v1428 = vadd.f32 %v1372, %v1412
    %v1429 = vadd.f32 %v1373, %v1413
    %v1430 = vadd.f32 %v1374, %v1414
    %v1431 = vadd.f32 %v1375, %v1415
    %v1432 = vadd.f32 %v1376, %v1416
    %v1433 = vld [vmem:[%s4] sm:$0x1]
    %v1435 = vlaneseq
    %v1436 = vshrl.u32 %v1435, 7
    %v1437 = vsub.s32 0, %v1436
    %v1438 = vrot.slane %v1433, %v1437
    %v1440 = vadd.f32 %v1417, %v1438
    %v1441 = vadd.f32 %v1418, %v1438
    %v1442 = vadd.f32 %v1419, %v1438
    %v1443 = vadd.f32 %v1420, %v1438
    %v1444 = vadd.f32 %v1421, %v1438
    %v1445 = vadd.f32 %v1422, %v1438
    %v1446 = vadd.f32 %v1423, %v1438
    %v1447 = vadd.f32 %v1424, %v1438
    %v1448 = vadd.f32 %v1425, %v1438
    %v1449 = vadd.f32 %v1426, %v1438
    %v1450 = vadd.f32 %v1427, %v1438
    %v1451 = vadd.f32 %v1428, %v1438
    %v1452 = vadd.f32 %v1429, %v1438
    %v1453 = vadd.f32 %v1430, %v1438
    %v1454 = vadd.f32 %v1431, %v1438
    %v1455 = vadd.f32 %v1432, %v1438
    %v1456 = vmax.f32 %v1440, 0.0
    %v1457 = vmax.f32 %v1441, 0.0
    %v1458 = vmax.f32 %v1442, 0.0
    %v1459 = vmax.f32 %v1443, 0.0
    %v1460 = vmax.f32 %v1444, 0.0
    %v1461 = vmax.f32 %v1445, 0.0
    %v1462 = vmax.f32 %v1446, 0.0
    %v1463 = vmax.f32 %v1447, 0.0
    %v1464 = vmax.f32 %v1448, 0.0
    %v1465 = vmax.f32 %v1449, 0.0
    %v1466 = vmax.f32 %v1450, 0.0
    %v1467 = vmax.f32 %v1451, 0.0
    %v1468 = vmax.f32 %v1452, 0.0
    %v1469 = vmax.f32 %v1453, 0.0
    %v1470 = vmax.f32 %v1454, 0.0
    %v1471 = vmax.f32 %v1455, 0.0
    %v1472 = vld [vmem:[#allocation9] sm:$0xff]
    %v1473 = vld [vmem:[#allocation9 + $0x8] sm:$0xff]
    %v1474 = vld [vmem:[#allocation9 + $0x10] sm:$0xff]
    %v1475 = vld [vmem:[#allocation9 + $0x18] sm:$0xff]
    %v1476 = vld [vmem:[%s6] sm:$0x1]
    %v1478 = vlaneseq
    %v1479 = vshrl.u32 %v1478, 7
    %v1480 = vsub.s32 0, %v1479
    %v1481 = vrot.slane %v1476, %v1480
    %v1484 = vsel %vm797, %v1456, 0
    %v1487 = vsel %vm797, %v1457, 0
    %v1490 = vsel %vm797, %v1458, 0
    %v1493 = vsel %vm797, %v1459, 0
    %v1496 = vsel %vm797, %v1460, 0
    %v1499 = vsel %vm797, %v1461, 0
    %v1502 = vsel %vm797, %v1462, 0
    %v1505 = vsel %vm797, %v1463, 0
    %v1508 = vsel %vm797, %v1464, 0
    %v1511 = vsel %vm797, %v1465, 0
    %v1514 = vsel %vm797, %v1466, 0
    %v1517 = vsel %vm797, %v1467, 0
    %v1520 = vsel %vm797, %v1468, 0
    %v1523 = vsel %vm797, %v1469, 0
    %v1526 = vsel %vm797, %v1470, 0
    %v1529 = vsel %vm797, %v1471, 0
    %1531 = vmatprep.subr.mxu0 0.0
    %1532 = vmatpush1.msra.mxu0 0.0
    %1533 = vmatprep.subr.mxu0 0.0
    %1534 = vmatpush1.msra.mxu0 0.0
    %1535 = vmatprep.subr.mxu0 0.0
    %1536 = vmatpush1.msra.mxu0 0.0
    %1537 = vmatprep.subr.mxu0 0.0
    %1538 = vmatpush1.msra.mxu0 0.0
    %1539 = vmatprep.subr.mxu0 0.0
    %1540 = vmatpush1.msra.mxu0 0.0
    %1541 = vmatprep.subr.mxu0 0.0
    %1542 = vmatpush1.msra.mxu0 0.0
    %1543 = vmatprep.subr.mxu0 0.0
    %1544 = vmatpush1.msra.mxu0 0.0
    %1545 = vmatprep.subr.mxu0 0.0
    %1546 = vmatpush1.msra.mxu0 0.0
    %1547 = vmatprep.subr.mxu0 0.0
    %1548 = vmatpush1.msra.mxu0 0.0
    %1549 = vmatprep.subr.mxu0 0.0
    %1550 = vmatpush1.msra.mxu0 0.0
    %1551 = vmatprep.subr.mxu0 0.0
    %1552 = vmatpush1.msra.mxu0 0.0
    %1553 = vmatprep.subr.mxu0 0.0
    %1554 = vmatpush1.msra.mxu0 0.0
    %1555 = vmatprep.subr.mxu0 0.0
    %1556 = vmatpush1.msra.mxu0 %v1475
    %1557 = vmatprep.subr.mxu0 0.0
    %1558 = vmatpush1.msra.mxu0 %v1474
    %1559 = vmatprep.subr.mxu0 0.0
    %1560 = vmatpush1.msra.mxu0 %v1473
    %1561 = vmatprep.subr.mxu0 0.0
    %1562 = vmatpush1.msra.mxu0 %v1472
    %1563 = vmatprep.subr.mxu0 0.0
    %1564 = vmatpush2.msra.mxu0 0.0
    %1565 = vmatprep.subr.mxu0 0.0
    %1566 = vmatpush2.msra.mxu0 0.0
    %1567 = vmatprep.subr.mxu0 0.0
    %1568 = vmatpush2.msra.mxu0 0.0
    %1569 = vmatprep.subr.mxu0 0.0
    %1570 = vmatpush2.msra.mxu0 0.0
    %1571 = vmatprep.subr.mxu0 0.0
    %1572 = vmatpush2.msra.mxu0 0.0
    %1573 = vmatprep.subr.mxu0 0.0
    %1574 = vmatpush2.msra.mxu0 0.0
    %1575 = vmatprep.subr.mxu0 0.0
    %1576 = vmatpush2.msra.mxu0 0.0
    %1577 = vmatprep.subr.mxu0 0.0
    %1578 = vmatpush2.msra.mxu0 0.0
    %1579 = vmatprep.subr.mxu0 0.0
    %1580 = vmatpush2.msra.mxu0 0.0
    %1581 = vmatprep.subr.mxu0 0.0
    %1582 = vmatpush2.msra.mxu0 0.0
    %1583 = vmatprep.subr.mxu0 0.0
    %1584 = vmatpush2.msra.mxu0 0.0
    %1585 = vmatprep.subr.mxu0 0.0
    %1586 = vmatpush2.msra.mxu0 0.0
    %1587 = vmatprep.subr.mxu0 0.0
    %1588 = vmatpush2.msra.mxu0 0.0
    %1589 = vmatprep.subr.mxu0 0.0
    %1590 = vmatpush2.msra.mxu0 0.0
    %1591 = vmatprep.subr.mxu0 0.0
    %1592 = vmatpush2.msra.mxu0 0.0
    %1593 = vmatprep.subr.mxu0 0.0
    %1594 = vmatpush2.msra.mxu0 0.0
    %1595 = vmatprep.mubr.f32.mxu0 0.0
    %1596 = vmatmul.mubr.f32.gmra.mxu0 %v1484
    %v1597 = vpop.f32.mrf.mxu0
    %v1598 = vadd.f32 %v1481, %v1597
    %v1599 = vpop.f32.mrf.mxu0
    %1600 = vmatprep.mubr.f32.mxu0 0.0
    %1601 = vmatmul.mubr.f32.gmra.mxu0 %v1487
    %v1602 = vpop.f32.mrf.mxu0
    %v1603 = vadd.f32 %v1481, %v1602
    %v1604 = vpop.f32.mrf.mxu0
    %1605 = vmatprep.mubr.f32.mxu0 0.0
    %1606 = vmatmul.mubr.f32.gmra.mxu0 %v1490
    %v1607 = vpop.f32.mrf.mxu0
    %v1608 = vadd.f32 %v1481, %v1607
    %v1609 = vpop.f32.mrf.mxu0
    %1610 = vmatprep.mubr.f32.mxu0 0.0
    %1611 = vmatmul.mubr.f32.gmra.mxu0 %v1493
    %v1612 = vpop.f32.mrf.mxu0
    %v1613 = vadd.f32 %v1481, %v1612
    %v1614 = vpop.f32.mrf.mxu0
    %1615 = vmatprep.mubr.f32.mxu0 0.0
    %1616 = vmatmul.mubr.f32.gmra.mxu0 %v1496
    %v1617 = vpop.f32.mrf.mxu0
    %v1618 = vadd.f32 %v1481, %v1617
    %v1619 = vpop.f32.mrf.mxu0
    %1620 = vmatprep.mubr.f32.mxu0 0.0
    %1621 = vmatmul.mubr.f32.gmra.mxu0 %v1499
    %v1622 = vpop.f32.mrf.mxu0
    %v1623 = vadd.f32 %v1481, %v1622
    %v1624 = vpop.f32.mrf.mxu0
    %1625 = vmatprep.mubr.f32.mxu0 0.0
    %1626 = vmatmul.mubr.f32.gmra.mxu0 %v1502
    %v1627 = vpop.f32.mrf.mxu0
    %v1628 = vadd.f32 %v1481, %v1627
    %v1629 = vpop.f32.mrf.mxu0
    %1630 = vmatprep.mubr.f32.mxu0 0.0
    %1631 = vmatmul.mubr.f32.gmra.mxu0 %v1505
    %v1632 = vpop.f32.mrf.mxu0
    %v1633 = vadd.f32 %v1481, %v1632
    %v1634 = vpop.f32.mrf.mxu0
    %1635 = vmatprep.mubr.f32.mxu0 0.0
    %1636 = vmatmul.mubr.f32.gmra.mxu0 %v1508
    %v1637 = vpop.f32.mrf.mxu0
    %v1638 = vadd.f32 %v1481, %v1637
    %v1639 = vpop.f32.mrf.mxu0
    %1640 = vmatprep.mubr.f32.mxu0 0.0
    %1641 = vmatmul.mubr.f32.gmra.mxu0 %v1511
    %v1642 = vpop.f32.mrf.mxu0
    %v1643 = vadd.f32 %v1481, %v1642
    %v1644 = vpop.f32.mrf.mxu0
    %1645 = vmatprep.mubr.f32.mxu0 0.0
    %1646 = vmatmul.mubr.f32.gmra.mxu0 %v1514
    %v1647 = vpop.f32.mrf.mxu0
    %v1648 = vadd.f32 %v1481, %v1647
    %v1649 = vpop.f32.mrf.mxu0
    %1650 = vmatprep.mubr.f32.mxu0 0.0
    %1651 = vmatmul.mubr.f32.gmra.mxu0 %v1517
    %v1652 = vpop.f32.mrf.mxu0
    %v1653 = vadd.f32 %v1481, %v1652
    %v1654 = vpop.f32.mrf.mxu0
    %1655 = vmatprep.mubr.f32.mxu0 0.0
    %1656 = vmatmul.mubr.f32.gmra.mxu0 %v1520
    %v1657 = vpop.f32.mrf.mxu0
    %v1658 = vadd.f32 %v1481, %v1657
    %v1659 = vpop.f32.mrf.mxu0
    %1660 = vmatprep.mubr.f32.mxu0 0.0
    %1661 = vmatmul.mubr.f32.gmra.mxu0 %v1523
    %v1662 = vpop.f32.mrf.mxu0
    %v1663 = vadd.f32 %v1481, %v1662
    %v1664 = vpop.f32.mrf.mxu0
    %1665 = vmatprep.mubr.f32.mxu0 0.0
    %1666 = vmatmul.mubr.f32.gmra.mxu0 %v1526
    %v1667 = vpop.f32.mrf.mxu0
    %v1668 = vadd.f32 %v1481, %v1667
    %v1669 = vpop.f32.mrf.mxu0
    %1670 = vmatprep.mubr.f32.mxu0 0.0
    %1671 = vmatmul.mubr.f32.gmra.mxu0 %v1529
    %v1672 = vpop.f32.mrf.mxu0
    %v1673 = vadd.f32 %v1481, %v1672
    %v1674 = vpop.f32.mrf.mxu0
    %1675 = vdwg.mxu0
    %vm1676 = vcmask 523264
    %1677 = vst.msk [vmem:[#allocation11] sm:$0xff] %vm1676, %v1598
    %1678 = vst.msk [vmem:[#allocation11 + $0x8] sm:$0xff] %vm1676, %v1603
    %1679 = vst.msk [vmem:[#allocation11 + $0x10] sm:$0xff] %vm1676, %v1608
    %1680 = vst.msk [vmem:[#allocation11 + $0x18] sm:$0xff] %vm1676, %v1613
    %1681 = vst.msk [vmem:[#allocation11 + $0x20] sm:$0xff] %vm1676, %v1618
    %1682 = vst.msk [vmem:[#allocation11 + $0x28] sm:$0xff] %vm1676, %v1623
    %1683 = vst.msk [vmem:[#allocation11 + $0x30] sm:$0xff] %vm1676, %v1628
    %1684 = vst.msk [vmem:[#allocation11 + $0x38] sm:$0xff] %vm1676, %v1633
    %1685 = vst.msk [vmem:[#allocation11 + $0x100] sm:$0xff] %vm1676, %v1638
    %1686 = vst.msk [vmem:[#allocation11 + $0x108] sm:$0xff] %vm1676, %v1643
    %1687 = vst.msk [vmem:[#allocation11 + $0x110] sm:$0xff] %vm1676, %v1648
    %1688 = vst.msk [vmem:[#allocation11 + $0x118] sm:$0xff] %vm1676, %v1653
    %1689 = vst.msk [vmem:[#allocation11 + $0x120] sm:$0xff] %vm1676, %v1658
    %1690 = vst.msk [vmem:[#allocation11 + $0x128] sm:$0xff] %vm1676, %v1663
    %1691 = vst.msk [vmem:[#allocation11 + $0x130] sm:$0xff] %vm1676, %v1668
    %1692 = vst.msk [vmem:[#allocation11 + $0x138] sm:$0xff] %vm1676, %v1673
    %s1693 = scalar_lea.vmem [#allocation2], 128
    %v1694 = vld [vmem:[%s1693 + $0x7] sm:$0xff]
    %v1695 = vld [vmem:[%s1693 + $0xf] sm:$0xff]
    %v1696 = vld [vmem:[%s1693 + $0x27] sm:$0xff]
    %v1697 = vld [vmem:[%s1693 + $0x2f] sm:$0xff]
    %v1698 = vld [vmem:[%s1693 + $0x47] sm:$0xff]
    %v1699 = vld [vmem:[%s1693 + $0x4f] sm:$0xff]
    %v1700 = vld [vmem:[%s1693 + $0x67] sm:$0xff]
    %v1701 = vld [vmem:[%s1693 + $0x6f] sm:$0xff]
    %v1702 = vld [vmem:[%s1693 + $0x247] sm:$0xff]
    %v1703 = vld [vmem:[%s1693 + $0x24f] sm:$0xff]
    %v1704 = vld [vmem:[%s1693 + $0x267] sm:$0xff]
    %v1705 = vld [vmem:[%s1693 + $0x26f] sm:$0xff]
    %v1706 = vld [vmem:[%s1693 + $0x287] sm:$0xff]
    %v1707 = vld [vmem:[%s1693 + $0x28f] sm:$0xff]
    %v1708 = vld [vmem:[%s1693 + $0x2a7] sm:$0xff]
    %v1709 = vld [vmem:[%s1693 + $0x2af] sm:$0xff]
    %v1710 = vld [vmem:[#allocation8] sm:$0x1]
    %v1712 = vlaneseq
    %v1713 = vshrl.u32 %v1712, 7
    %v1714 = vsub.s32 0, %v1713
    %v1715 = vrot.slane %v1710, %v1714
    %v1717 = vmul.f32 %v1694, %v1715
    %v1718 = vmul.f32 %v1695, %v1715
    %v1719 = vmul.f32 %v1696, %v1715
    %v1720 = vmul.f32 %v1697, %v1715
    %v1721 = vmul.f32 %v1698, %v1715
    %v1722 = vmul.f32 %v1699, %v1715
    %v1723 = vmul.f32 %v1700, %v1715
    %v1724 = vmul.f32 %v1701, %v1715
    %v1725 = vmul.f32 %v1702, %v1715
    %v1726 = vmul.f32 %v1703, %v1715
    %v1727 = vmul.f32 %v1704, %v1715
    %v1728 = vmul.f32 %v1705, %v1715
    %v1729 = vmul.f32 %v1706, %v1715
    %v1730 = vmul.f32 %v1707, %v1715
    %v1731 = vmul.f32 %v1708, %v1715
    %v1732 = vmul.f32 %v1709, %v1715
    %v1733 = vld [vmem:[%s1693 + $0x8] sm:$0xff]
    %v1734 = vld [vmem:[%s1693 + $0x10] sm:$0xff]
    %v1735 = vld [vmem:[%s1693 + $0x28] sm:$0xff]
    %v1736 = vld [vmem:[%s1693 + $0x30] sm:$0xff]
    %v1737 = vld [vmem:[%s1693 + $0x48] sm:$0xff]
    %v1738 = vld [vmem:[%s1693 + $0x50] sm:$0xff]
    %v1739 = vld [vmem:[%s1693 + $0x68] sm:$0xff]
    %v1740 = vld [vmem:[%s1693 + $0x70] sm:$0xff]
    %v1741 = vld [vmem:[%s1693 + $0x248] sm:$0xff]
    %v1742 = vld [vmem:[%s1693 + $0x250] sm:$0xff]
    %v1743 = vld [vmem:[%s1693 + $0x268] sm:$0xff]
    %v1744 = vld [vmem:[%s1693 + $0x270] sm:$0xff]
    %v1745 = vld [vmem:[%s1693 + $0x288] sm:$0xff]
    %v1746 = vld [vmem:[%s1693 + $0x290] sm:$0xff]
    %v1747 = vld [vmem:[%s1693 + $0x2a8] sm:$0xff]
    %v1748 = vld [vmem:[%s1693 + $0x2b0] sm:$0xff]
    %v1749 = vld [vmem:[%s1000] sm:$0x1]
    %v1751 = vlaneseq
    %v1752 = vshrl.u32 %v1751, 7
    %v1753 = vsub.s32 0, %v1752
    %v1754 = vrot.slane %v1749, %v1753
    %v1756 = vmul.f32 %v1733, %v1754
    %v1757 = vmul.f32 %v1734, %v1754
    %v1758 = vmul.f32 %v1735, %v1754
    %v1759 = vmul.f32 %v1736, %v1754
    %v1760 = vmul.f32 %v1737, %v1754
    %v1761 = vmul.f32 %v1738, %v1754
    %v1762 = vmul.f32 %v1739, %v1754
    %v1763 = vmul.f32 %v1740, %v1754
    %v1764 = vmul.f32 %v1741, %v1754
    %v1765 = vmul.f32 %v1742, %v1754
    %v1766 = vmul.f32 %v1743, %v1754
    %v1767 = vmul.f32 %v1744, %v1754
    %v1768 = vmul.f32 %v1745, %v1754
    %v1769 = vmul.f32 %v1746, %v1754
    %v1770 = vmul.f32 %v1747, %v1754
    %v1771 = vmul.f32 %v1748, %v1754
    %v1772 = vadd.f32 %v1717, %v1756
    %v1773 = vadd.f32 %v1718, %v1757
    %v1774 = vadd.f32 %v1719, %v1758
    %v1775 = vadd.f32 %v1720, %v1759
    %v1776 = vadd.f32 %v1721, %v1760
    %v1777 = vadd.f32 %v1722, %v1761
    %v1778 = vadd.f32 %v1723, %v1762
    %v1779 = vadd.f32 %v1724, %v1763
    %v1780 = vadd.f32 %v1725, %v1764
    %v1781 = vadd.f32 %v1726, %v1765
    %v1782 = vadd.f32 %v1727, %v1766
    %v1783 = vadd.f32 %v1728, %v1767
    %v1784 = vadd.f32 %v1729, %v1768
    %v1785 = vadd.f32 %v1730, %v1769
    %v1786 = vadd.f32 %v1731, %v1770
    %v1787 = vadd.f32 %v1732, %v1771
    %v1788 = vld [vmem:[%s1693 + $0x9] sm:$0xff]
    %v1789 = vld [vmem:[%s1693 + $0x11] sm:$0xff]
    %v1790 = vld [vmem:[%s1693 + $0x29] sm:$0xff]
    %v1791 = vld [vmem:[%s1693 + $0x31] sm:$0xff]
    %v1792 = vld [vmem:[%s1693 + $0x49] sm:$0xff]
    %v1793 = vld [vmem:[%s1693 + $0x51] sm:$0xff]
    %v1794 = vld [vmem:[%s1693 + $0x69] sm:$0xff]
    %v1795 = vld [vmem:[%s1693 + $0x71] sm:$0xff]
    %v1796 = vld [vmem:[%s1693 + $0x249] sm:$0xff]
    %v1797 = vld [vmem:[%s1693 + $0x251] sm:$0xff]
    %v1798 = vld [vmem:[%s1693 + $0x269] sm:$0xff]
    %v1799 = vld [vmem:[%s1693 + $0x271] sm:$0xff]
    %v1800 = vld [vmem:[%s1693 + $0x289] sm:$0xff]
    %v1801 = vld [vmem:[%s1693 + $0x291] sm:$0xff]
    %v1802 = vld [vmem:[%s1693 + $0x2a9] sm:$0xff]
    %v1803 = vld [vmem:[%s1693 + $0x2b1] sm:$0xff]
    %v1804 = vld [vmem:[%s1056] sm:$0x1]
    %v1806 = vlaneseq
    %v1807 = vshrl.u32 %v1806, 7
    %v1808 = vsub.s32 0, %v1807
    %v1809 = vrot.slane %v1804, %v1808
    %v1811 = vmul.f32 %v1788, %v1809
    %v1812 = vmul.f32 %v1789, %v1809
    %v1813 = vmul.f32 %v1790, %v1809
    %v1814 = vmul.f32 %v1791, %v1809
    %v1815 = vmul.f32 %v1792, %v1809
    %v1816 = vmul.f32 %v1793, %v1809
    %v1817 = vmul.f32 %v1794, %v1809
    %v1818 = vmul.f32 %v1795, %v1809
    %v1819 = vmul.f32 %v1796, %v1809
    %v1820 = vmul.f32 %v1797, %v1809
    %v1821 = vmul.f32 %v1798, %v1809
    %v1822 = vmul.f32 %v1799, %v1809
    %v1823 = vmul.f32 %v1800, %v1809
    %v1824 = vmul.f32 %v1801, %v1809
    %v1825 = vmul.f32 %v1802, %v1809
    %v1826 = vmul.f32 %v1803, %v1809
    %v1827 = vadd.f32 %v1772, %v1811
    %v1828 = vadd.f32 %v1773, %v1812
    %v1829 = vadd.f32 %v1774, %v1813
    %v1830 = vadd.f32 %v1775, %v1814
    %v1831 = vadd.f32 %v1776, %v1815
    %v1832 = vadd.f32 %v1777, %v1816
    %v1833 = vadd.f32 %v1778, %v1817
    %v1834 = vadd.f32 %v1779, %v1818
    %v1835 = vadd.f32 %v1780, %v1819
    %v1836 = vadd.f32 %v1781, %v1820
    %v1837 = vadd.f32 %v1782, %v1821
    %v1838 = vadd.f32 %v1783, %v1822
    %v1839 = vadd.f32 %v1784, %v1823
    %v1840 = vadd.f32 %v1785, %v1824
    %v1841 = vadd.f32 %v1786, %v1825
    %v1842 = vadd.f32 %v1787, %v1826
    %s1843 = scalar_lea.vmem [#allocation2], 160
    %v1844 = vld [vmem:[%s1843 + $0x7] sm:$0xff]
    %v1845 = vld [vmem:[%s1843 + $0xf] sm:$0xff]
    %v1846 = vld [vmem:[%s1843 + $0x27] sm:$0xff]
    %v1847 = vld [vmem:[%s1843 + $0x2f] sm:$0xff]
    %v1848 = vld [vmem:[%s1843 + $0x47] sm:$0xff]
    %v1849 = vld [vmem:[%s1843 + $0x4f] sm:$0xff]
    %v1850 = vld [vmem:[%s1843 + $0x67] sm:$0xff]
    %v1851 = vld [vmem:[%s1843 + $0x6f] sm:$0xff]
    %v1852 = vld [vmem:[%s1843 + $0x247] sm:$0xff]
    %v1853 = vld [vmem:[%s1843 + $0x24f] sm:$0xff]
    %v1854 = vld [vmem:[%s1843 + $0x267] sm:$0xff]
    %v1855 = vld [vmem:[%s1843 + $0x26f] sm:$0xff]
    %v1856 = vld [vmem:[%s1843 + $0x287] sm:$0xff]
    %v1857 = vld [vmem:[%s1843 + $0x28f] sm:$0xff]
    %v1858 = vld [vmem:[%s1843 + $0x2a7] sm:$0xff]
    %v1859 = vld [vmem:[%s1843 + $0x2af] sm:$0xff]
    %v1860 = vld [vmem:[%s1112] sm:$0x1]
    %v1862 = vlaneseq
    %v1863 = vshrl.u32 %v1862, 7
    %v1864 = vsub.s32 0, %v1863
    %v1865 = vrot.slane %v1860, %v1864
    %v1867 = vmul.f32 %v1844, %v1865
    %v1868 = vmul.f32 %v1845, %v1865
    %v1869 = vmul.f32 %v1846, %v1865
    %v1870 = vmul.f32 %v1847, %v1865
    %v1871 = vmul.f32 %v1848, %v1865
    %v1872 = vmul.f32 %v1849, %v1865
    %v1873 = vmul.f32 %v1850, %v1865
    %v1874 = vmul.f32 %v1851, %v1865
    %v1875 = vmul.f32 %v1852, %v1865
    %v1876 = vmul.f32 %v1853, %v1865
    %v1877 = vmul.f32 %v1854, %v1865
    %v1878 = vmul.f32 %v1855, %v1865
    %v1879 = vmul.f32 %v1856, %v1865
    %v1880 = vmul.f32 %v1857, %v1865
    %v1881 = vmul.f32 %v1858, %v1865
    %v1882 = vmul.f32 %v1859, %v1865
    %v1883 = vadd.f32 %v1827, %v1867
    %v1884 = vadd.f32 %v1828, %v1868
    %v1885 = vadd.f32 %v1829, %v1869
    %v1886 = vadd.f32 %v1830, %v1870
    %v1887 = vadd.f32 %v1831, %v1871
    %v1888 = vadd.f32 %v1832, %v1872
    %v1889 = vadd.f32 %v1833, %v1873
    %v1890 = vadd.f32 %v1834, %v1874
    %v1891 = vadd.f32 %v1835, %v1875
    %v1892 = vadd.f32 %v1836, %v1876
    %v1893 = vadd.f32 %v1837, %v1877
    %v1894 = vadd.f32 %v1838, %v1878
    %v1895 = vadd.f32 %v1839, %v1879
    %v1896 = vadd.f32 %v1840, %v1880
    %v1897 = vadd.f32 %v1841, %v1881
    %v1898 = vadd.f32 %v1842, %v1882
    %v1899 = vld [vmem:[%s1843 + $0x8] sm:$0xff]
    %v1900 = vld [vmem:[%s1843 + $0x10] sm:$0xff]
    %v1901 = vld [vmem:[%s1843 + $0x28] sm:$0xff]
    %v1902 = vld [vmem:[%s1843 + $0x30] sm:$0xff]
    %v1903 = vld [vmem:[%s1843 + $0x48] sm:$0xff]
    %v1904 = vld [vmem:[%s1843 + $0x50] sm:$0xff]
    %v1905 = vld [vmem:[%s1843 + $0x68] sm:$0xff]
    %v1906 = vld [vmem:[%s1843 + $0x70] sm:$0xff]
    %v1907 = vld [vmem:[%s1843 + $0x248] sm:$0xff]
    %v1908 = vld [vmem:[%s1843 + $0x250] sm:$0xff]
    %v1909 = vld [vmem:[%s1843 + $0x268] sm:$0xff]
    %v1910 = vld [vmem:[%s1843 + $0x270] sm:$0xff]
    %v1911 = vld [vmem:[%s1843 + $0x288] sm:$0xff]
    %v1912 = vld [vmem:[%s1843 + $0x290] sm:$0xff]
    %v1913 = vld [vmem:[%s1843 + $0x2a8] sm:$0xff]
    %v1914 = vld [vmem:[%s1843 + $0x2b0] sm:$0xff]
    %v1915 = vld [vmem:[%s1168] sm:$0x1]
    %v1917 = vlaneseq
    %v1918 = vshrl.u32 %v1917, 7
    %v1919 = vsub.s32 0, %v1918
    %v1920 = vrot.slane %v1915, %v1919
    %v1922 = vmul.f32 %v1899, %v1920
    %v1923 = vmul.f32 %v1900, %v1920
    %v1924 = vmul.f32 %v1901, %v1920
    %v1925 = vmul.f32 %v1902, %v1920
    %v1926 = vmul.f32 %v1903, %v1920
    %v1927 = vmul.f32 %v1904, %v1920
    %v1928 = vmul.f32 %v1905, %v1920
    %v1929 = vmul.f32 %v1906, %v1920
    %v1930 = vmul.f32 %v1907, %v1920
    %v1931 = vmul.f32 %v1908, %v1920
    %v1932 = vmul.f32 %v1909, %v1920
    %v1933 = vmul.f32 %v1910, %v1920
    %v1934 = vmul.f32 %v1911, %v1920
    %v1935 = vmul.f32 %v1912, %v1920
    %v1936 = vmul.f32 %v1913, %v1920
    %v1937 = vmul.f32 %v1914, %v1920
    %v1938 = vadd.f32 %v1883, %v1922
    %v1939 = vadd.f32 %v1884, %v1923
    %v1940 = vadd.f32 %v1885, %v1924
    %v1941 = vadd.f32 %v1886, %v1925
    %v1942 = vadd.f32 %v1887, %v1926
    %v1943 = vadd.f32 %v1888, %v1927
    %v1944 = vadd.f32 %v1889, %v1928
    %v1945 = vadd.f32 %v1890, %v1929
    %v1946 = vadd.f32 %v1891, %v1930
    %v1947 = vadd.f32 %v1892, %v1931
    %v1948 = vadd.f32 %v1893, %v1932
    %v1949 = vadd.f32 %v1894, %v1933
    %v1950 = vadd.f32 %v1895, %v1934
    %v1951 = vadd.f32 %v1896, %v1935
    %v1952 = vadd.f32 %v1897, %v1936
    %v1953 = vadd.f32 %v1898, %v1937
    %v1954 = vld [vmem:[%s1843 + $0x9] sm:$0xff]
    %v1955 = vld [vmem:[%s1843 + $0x11] sm:$0xff]
    %v1956 = vld [vmem:[%s1843 + $0x29] sm:$0xff]
    %v1957 = vld [vmem:[%s1843 + $0x31] sm:$0xff]
    %v1958 = vld [vmem:[%s1843 + $0x49] sm:$0xff]
    %v1959 = vld [vmem:[%s1843 + $0x51] sm:$0xff]
    %v1960 = vld [vmem:[%s1843 + $0x69] sm:$0xff]
    %v1961 = vld [vmem:[%s1843 + $0x71] sm:$0xff]
    %v1962 = vld [vmem:[%s1843 + $0x249] sm:$0xff]
    %v1963 = vld [vmem:[%s1843 + $0x251] sm:$0xff]
    %v1964 = vld [vmem:[%s1843 + $0x269] sm:$0xff]
    %v1965 = vld [vmem:[%s1843 + $0x271] sm:$0xff]
    %v1966 = vld [vmem:[%s1843 + $0x289] sm:$0xff]
    %v1967 = vld [vmem:[%s1843 + $0x291] sm:$0xff]
    %v1968 = vld [vmem:[%s1843 + $0x2a9] sm:$0xff]
    %v1969 = vld [vmem:[%s1843 + $0x2b1] sm:$0xff]
    %v1970 = vld [vmem:[%s1224] sm:$0x1]
    %v1972 = vlaneseq
    %v1973 = vshrl.u32 %v1972, 7
    %v1974 = vsub.s32 0, %v1973
    %v1975 = vrot.slane %v1970, %v1974
    %v1977 = vmul.f32 %v1954, %v1975
    %v1978 = vmul.f32 %v1955, %v1975
    %v1979 = vmul.f32 %v1956, %v1975
    %v1980 = vmul.f32 %v1957, %v1975
    %v1981 = vmul.f32 %v1958, %v1975
    %v1982 = vmul.f32 %v1959, %v1975
    %v1983 = vmul.f32 %v1960, %v1975
    %v1984 = vmul.f32 %v1961, %v1975
    %v1985 = vmul.f32 %v1962, %v1975
    %v1986 = vmul.f32 %v1963, %v1975
    %v1987 = vmul.f32 %v1964, %v1975
    %v1988 = vmul.f32 %v1965, %v1975
    %v1989 = vmul.f32 %v1966, %v1975
    %v1990 = vmul.f32 %v1967, %v1975
    %v1991 = vmul.f32 %v1968, %v1975
    %v1992 = vmul.f32 %v1969, %v1975
    %v1993 = vadd.f32 %v1938, %v1977
    %v1994 = vadd.f32 %v1939, %v1978
    %v1995 = vadd.f32 %v1940, %v1979
    %v1996 = vadd.f32 %v1941, %v1980
    %v1997 = vadd.f32 %v1942, %v1981
    %v1998 = vadd.f32 %v1943, %v1982
    %v1999 = vadd.f32 %v1944, %v1983
    %v2000 = vadd.f32 %v1945, %v1984
    %v2001 = vadd.f32 %v1946, %v1985
    %v2002 = vadd.f32 %v1947, %v1986
    %v2003 = vadd.f32 %v1948, %v1987
    %v2004 = vadd.f32 %v1949, %v1988
    %v2005 = vadd.f32 %v1950, %v1989
    %v2006 = vadd.f32 %v1951, %v1990
    %v2007 = vadd.f32 %v1952, %v1991
    %v2008 = vadd.f32 %v1953, %v1992
    %s2009 = scalar_lea.vmem [#allocation2], 192
    %v2010 = vld [vmem:[%s2009 + $0x7] sm:$0xff]
    %v2011 = vld [vmem:[%s2009 + $0xf] sm:$0xff]
    %v2012 = vld [vmem:[%s2009 + $0x27] sm:$0xff]
    %v2013 = vld [vmem:[%s2009 + $0x2f] sm:$0xff]
    %v2014 = vld [vmem:[%s2009 + $0x47] sm:$0xff]
    %v2015 = vld [vmem:[%s2009 + $0x4f] sm:$0xff]
    %v2016 = vld [vmem:[%s2009 + $0x67] sm:$0xff]
    %v2017 = vld [vmem:[%s2009 + $0x6f] sm:$0xff]
    %v2018 = vld [vmem:[%s2009 + $0x247] sm:$0xff]
    %v2019 = vld [vmem:[%s2009 + $0x24f] sm:$0xff]
    %v2020 = vld [vmem:[%s2009 + $0x267] sm:$0xff]
    %v2021 = vld [vmem:[%s2009 + $0x26f] sm:$0xff]
    %v2022 = vld [vmem:[%s2009 + $0x287] sm:$0xff]
    %v2023 = vld [vmem:[%s2009 + $0x28f] sm:$0xff]
    %v2024 = vld [vmem:[%s2009 + $0x2a7] sm:$0xff]
    %v2025 = vld [vmem:[%s2009 + $0x2af] sm:$0xff]
    %v2026 = vld [vmem:[%s1281] sm:$0x1]
    %v2028 = vlaneseq
    %v2029 = vshrl.u32 %v2028, 7
    %v2030 = vsub.s32 0, %v2029
    %v2031 = vrot.slane %v2026, %v2030
    %v2033 = vmul.f32 %v2010, %v2031
    %v2034 = vmul.f32 %v2011, %v2031
    %v2035 = vmul.f32 %v2012, %v2031
    %v2036 = vmul.f32 %v2013, %v2031
    %v2037 = vmul.f32 %v2014, %v2031
    %v2038 = vmul.f32 %v2015, %v2031
    %v2039 = vmul.f32 %v2016, %v2031
    %v2040 = vmul.f32 %v2017, %v2031
    %v2041 = vmul.f32 %v2018, %v2031
    %v2042 = vmul.f32 %v2019, %v2031
    %v2043 = vmul.f32 %v2020, %v2031
    %v2044 = vmul.f32 %v2021, %v2031
    %v2045 = vmul.f32 %v2022, %v2031
    %v2046 = vmul.f32 %v2023, %v2031
    %v2047 = vmul.f32 %v2024, %v2031
    %v2048 = vmul.f32 %v2025, %v2031
    %v2049 = vadd.f32 %v1993, %v2033
    %v2050 = vadd.f32 %v1994, %v2034
    %v2051 = vadd.f32 %v1995, %v2035
    %v2052 = vadd.f32 %v1996, %v2036
    %v2053 = vadd.f32 %v1997, %v2037
    %v2054 = vadd.f32 %v1998, %v2038
    %v2055 = vadd.f32 %v1999, %v2039
    %v2056 = vadd.f32 %v2000, %v2040
    %v2057 = vadd.f32 %v2001, %v2041
    %v2058 = vadd.f32 %v2002, %v2042
    %v2059 = vadd.f32 %v2003, %v2043
    %v2060 = vadd.f32 %v2004, %v2044
    %v2061 = vadd.f32 %v2005, %v2045
    %v2062 = vadd.f32 %v2006, %v2046
    %v2063 = vadd.f32 %v2007, %v2047
    %v2064 = vadd.f32 %v2008, %v2048
    %v2065 = vld [vmem:[%s2009 + $0x8] sm:$0xff]
    %v2066 = vld [vmem:[%s2009 + $0x10] sm:$0xff]
    %v2067 = vld [vmem:[%s2009 + $0x28] sm:$0xff]
    %v2068 = vld [vmem:[%s2009 + $0x30] sm:$0xff]
    %v2069 = vld [vmem:[%s2009 + $0x48] sm:$0xff]
    %v2070 = vld [vmem:[%s2009 + $0x50] sm:$0xff]
    %v2071 = vld [vmem:[%s2009 + $0x68] sm:$0xff]
    %v2072 = vld [vmem:[%s2009 + $0x70] sm:$0xff]
    %v2073 = vld [vmem:[%s2009 + $0x248] sm:$0xff]
    %v2074 = vld [vmem:[%s2009 + $0x250] sm:$0xff]
    %v2075 = vld [vmem:[%s2009 + $0x268] sm:$0xff]
    %v2076 = vld [vmem:[%s2009 + $0x270] sm:$0xff]
    %v2077 = vld [vmem:[%s2009 + $0x288] sm:$0xff]
    %v2078 = vld [vmem:[%s2009 + $0x290] sm:$0xff]
    %v2079 = vld [vmem:[%s2009 + $0x2a8] sm:$0xff]
    %v2080 = vld [vmem:[%s2009 + $0x2b0] sm:$0xff]
    %v2081 = vld [vmem:[%s1337] sm:$0x1]
    %v2083 = vlaneseq
    %v2084 = vshrl.u32 %v2083, 7
    %v2085 = vsub.s32 0, %v2084
    %v2086 = vrot.slane %v2081, %v2085
    %v2088 = vmul.f32 %v2065, %v2086
    %v2089 = vmul.f32 %v2066, %v2086
    %v2090 = vmul.f32 %v2067, %v2086
    %v2091 = vmul.f32 %v2068, %v2086
    %v2092 = vmul.f32 %v2069, %v2086
    %v2093 = vmul.f32 %v2070, %v2086
    %v2094 = vmul.f32 %v2071, %v2086
    %v2095 = vmul.f32 %v2072, %v2086
    %v2096 = vmul.f32 %v2073, %v2086
    %v2097 = vmul.f32 %v2074, %v2086
    %v2098 = vmul.f32 %v2075, %v2086
    %v2099 = vmul.f32 %v2076, %v2086
    %v2100 = vmul.f32 %v2077, %v2086
    %v2101 = vmul.f32 %v2078, %v2086
    %v2102 = vmul.f32 %v2079, %v2086
    %v2103 = vmul.f32 %v2080, %v2086
    %v2104 = vadd.f32 %v2049, %v2088
    %v2105 = vadd.f32 %v2050, %v2089
    %v2106 = vadd.f32 %v2051, %v2090
    %v2107 = vadd.f32 %v2052, %v2091
    %v2108 = vadd.f32 %v2053, %v2092
    %v2109 = vadd.f32 %v2054, %v2093
    %v2110 = vadd.f32 %v2055, %v2094
    %v2111 = vadd.f32 %v2056, %v2095
    %v2112 = vadd.f32 %v2057, %v2096
    %v2113 = vadd.f32 %v2058, %v2097
    %v2114 = vadd.f32 %v2059, %v2098
    %v2115 = vadd.f32 %v2060, %v2099
    %v2116 = vadd.f32 %v2061, %v2100
    %v2117 = vadd.f32 %v2062, %v2101
    %v2118 = vadd.f32 %v2063, %v2102
    %v2119 = vadd.f32 %v2064, %v2103
    %v2120 = vld [vmem:[%s2009 + $0x9] sm:$0xff]
    %v2121 = vld [vmem:[%s2009 + $0x11] sm:$0xff]
    %v2122 = vld [vmem:[%s2009 + $0x29] sm:$0xff]
    %v2123 = vld [vmem:[%s2009 + $0x31] sm:$0xff]
    %v2124 = vld [vmem:[%s2009 + $0x49] sm:$0xff]
    %v2125 = vld [vmem:[%s2009 + $0x51] sm:$0xff]
    %v2126 = vld [vmem:[%s2009 + $0x69] sm:$0xff]
    %v2127 = vld [vmem:[%s2009 + $0x71] sm:$0xff]
    %v2128 = vld [vmem:[%s2009 + $0x249] sm:$0xff]
    %v2129 = vld [vmem:[%s2009 + $0x251] sm:$0xff]
    %v2130 = vld [vmem:[%s2009 + $0x269] sm:$0xff]
    %v2131 = vld [vmem:[%s2009 + $0x271] sm:$0xff]
    %v2132 = vld [vmem:[%s2009 + $0x289] sm:$0xff]
    %v2133 = vld [vmem:[%s2009 + $0x291] sm:$0xff]
    %v2134 = vld [vmem:[%s2009 + $0x2a9] sm:$0xff]
    %v2135 = vld [vmem:[%s2009 + $0x2b1] sm:$0xff]
    %v2136 = vld [vmem:[%s1393] sm:$0x1]
    %v2138 = vlaneseq
    %v2139 = vshrl.u32 %v2138, 7
    %v2140 = vsub.s32 0, %v2139
    %v2141 = vrot.slane %v2136, %v2140
    %v2143 = vmul.f32 %v2120, %v2141
    %v2144 = vmul.f32 %v2121, %v2141
    %v2145 = vmul.f32 %v2122, %v2141
    %v2146 = vmul.f32 %v2123, %v2141
    %v2147 = vmul.f32 %v2124, %v2141
    %v2148 = vmul.f32 %v2125, %v2141
    %v2149 = vmul.f32 %v2126, %v2141
    %v2150 = vmul.f32 %v2127, %v2141
    %v2151 = vmul.f32 %v2128, %v2141
    %v2152 = vmul.f32 %v2129, %v2141
    %v2153 = vmul.f32 %v2130, %v2141
    %v2154 = vmul.f32 %v2131, %v2141
    %v2155 = vmul.f32 %v2132, %v2141
    %v2156 = vmul.f32 %v2133, %v2141
    %v2157 = vmul.f32 %v2134, %v2141
    %v2158 = vmul.f32 %v2135, %v2141
    %v2159 = vadd.f32 %v2104, %v2143
    %v2160 = vadd.f32 %v2105, %v2144
    %v2161 = vadd.f32 %v2106, %v2145
    %v2162 = vadd.f32 %v2107, %v2146
    %v2163 = vadd.f32 %v2108, %v2147
    %v2164 = vadd.f32 %v2109, %v2148
    %v2165 = vadd.f32 %v2110, %v2149
    %v2166 = vadd.f32 %v2111, %v2150
    %v2167 = vadd.f32 %v2112, %v2151
    %v2168 = vadd.f32 %v2113, %v2152
    %v2169 = vadd.f32 %v2114, %v2153
    %v2170 = vadd.f32 %v2115, %v2154
    %v2171 = vadd.f32 %v2116, %v2155
    %v2172 = vadd.f32 %v2117, %v2156
    %v2173 = vadd.f32 %v2118, %v2157
    %v2174 = vadd.f32 %v2119, %v2158
    %v2175 = vld [vmem:[%s4] sm:$0x1]
    %v2177 = vlaneseq
    %v2178 = vshrl.u32 %v2177, 7
    %v2179 = vsub.s32 0, %v2178
    %v2180 = vrot.slane %v2175, %v2179
    %v2182 = vadd.f32 %v2159, %v2180
    %v2183 = vadd.f32 %v2160, %v2180
    %v2184 = vadd.f32 %v2161, %v2180
    %v2185 = vadd.f32 %v2162, %v2180
    %v2186 = vadd.f32 %v2163, %v2180
    %v2187 = vadd.f32 %v2164, %v2180
    %v2188 = vadd.f32 %v2165, %v2180
    %v2189 = vadd.f32 %v2166, %v2180
    %v2190 = vadd.f32 %v2167, %v2180
    %v2191 = vadd.f32 %v2168, %v2180
    %v2192 = vadd.f32 %v2169, %v2180
    %v2193 = vadd.f32 %v2170, %v2180
    %v2194 = vadd.f32 %v2171, %v2180
    %v2195 = vadd.f32 %v2172, %v2180
    %v2196 = vadd.f32 %v2173, %v2180
    %v2197 = vadd.f32 %v2174, %v2180
    %v2198 = vmax.f32 %v2182, 0.0
    %v2199 = vmax.f32 %v2183, 0.0
    %v2200 = vmax.f32 %v2184, 0.0
    %v2201 = vmax.f32 %v2185, 0.0
    %v2202 = vmax.f32 %v2186, 0.0
    %v2203 = vmax.f32 %v2187, 0.0
    %v2204 = vmax.f32 %v2188, 0.0
    %v2205 = vmax.f32 %v2189, 0.0
    %v2206 = vmax.f32 %v2190, 0.0
    %v2207 = vmax.f32 %v2191, 0.0
    %v2208 = vmax.f32 %v2192, 0.0
    %v2209 = vmax.f32 %v2193, 0.0
    %v2210 = vmax.f32 %v2194, 0.0
    %v2211 = vmax.f32 %v2195, 0.0
    %v2212 = vmax.f32 %v2196, 0.0
    %v2213 = vmax.f32 %v2197, 0.0
    %v2214 = vld [vmem:[#allocation9] sm:$0xff]
    %v2215 = vld [vmem:[#allocation9 + $0x8] sm:$0xff]
    %v2216 = vld [vmem:[#allocation9 + $0x10] sm:$0xff]
    %v2217 = vld [vmem:[#allocation9 + $0x18] sm:$0xff]
    %v2218 = vld [vmem:[%s6] sm:$0x1]
    %v2220 = vlaneseq
    %v2221 = vshrl.u32 %v2220, 7
    %v2222 = vsub.s32 0, %v2221
    %v2223 = vrot.slane %v2218, %v2222
    %v2226 = vsel %vm797, %v2198, 0
    %v2229 = vsel %vm797, %v2199, 0
    %v2232 = vsel %vm797, %v2200, 0
    %v2235 = vsel %vm797, %v2201, 0
    %v2238 = vsel %vm797, %v2202, 0
    %v2241 = vsel %vm797, %v2203, 0
    %v2244 = vsel %vm797, %v2204, 0
    %v2247 = vsel %vm797, %v2205, 0
    %v2250 = vsel %vm797, %v2206, 0
    %v2253 = vsel %vm797, %v2207, 0
    %v2256 = vsel %vm797, %v2208, 0
    %v2259 = vsel %vm797, %v2209, 0
    %v2262 = vsel %vm797, %v2210, 0
    %v2265 = vsel %vm797, %v2211, 0
    %v2268 = vsel %vm797, %v2212, 0
    %v2271 = vsel %vm797, %v2213, 0
    %2273 = vmatprep.subr.mxu0 0.0
    %2274 = vmatpush1.msra.mxu0 0.0
    %2275 = vmatprep.subr.mxu0 0.0
    %2276 = vmatpush1.msra.mxu0 0.0
    %2277 = vmatprep.subr.mxu0 0.0
    %2278 = vmatpush1.msra.mxu0 0.0
    %2279 = vmatprep.subr.mxu0 0.0
    %2280 = vmatpush1.msra.mxu0 0.0
    %2281 = vmatprep.subr.mxu0 0.0
    %2282 = vmatpush1.msra.mxu0 0.0
    %2283 = vmatprep.subr.mxu0 0.0
    %2284 = vmatpush1.msra.mxu0 0.0
    %2285 = vmatprep.subr.mxu0 0.0
    %2286 = vmatpush1.msra.mxu0 0.0
    %2287 = vmatprep.subr.mxu0 0.0
    %2288 = vmatpush1.msra.mxu0 0.0
    %2289 = vmatprep.subr.mxu0 0.0
    %2290 = vmatpush1.msra.mxu0 0.0
    %2291 = vmatprep.subr.mxu0 0.0
    %2292 = vmatpush1.msra.mxu0 0.0
    %2293 = vmatprep.subr.mxu0 0.0
    %2294 = vmatpush1.msra.mxu0 0.0
    %2295 = vmatprep.subr.mxu0 0.0
    %2296 = vmatpush1.msra.mxu0 0.0
    %2297 = vmatprep.subr.mxu0 0.0
    %2298 = vmatpush1.msra.mxu0 %v2217
    %2299 = vmatprep.subr.mxu0 0.0
    %2300 = vmatpush1.msra.mxu0 %v2216
    %2301 = vmatprep.subr.mxu0 0.0
    %2302 = vmatpush1.msra.mxu0 %v2215
    %2303 = vmatprep.subr.mxu0 0.0
    %2304 = vmatpush1.msra.mxu0 %v2214
    %2305 = vmatprep.subr.mxu0 0.0
    %2306 = vmatpush2.msra.mxu0 0.0
    %2307 = vmatprep.subr.mxu0 0.0
    %2308 = vmatpush2.msra.mxu0 0.0
    %2309 = vmatprep.subr.mxu0 0.0
    %2310 = vmatpush2.msra.mxu0 0.0
    %2311 = vmatprep.subr.mxu0 0.0
    %2312 = vmatpush2.msra.mxu0 0.0
    %2313 = vmatprep.subr.mxu0 0.0
    %2314 = vmatpush2.msra.mxu0 0.0
    %2315 = vmatprep.subr.mxu0 0.0
    %2316 = vmatpush2.msra.mxu0 0.0
    %2317 = vmatprep.subr.mxu0 0.0
    %2318 = vmatpush2.msra.mxu0 0.0
    %2319 = vmatprep.subr.mxu0 0.0
    %2320 = vmatpush2.msra.mxu0 0.0
    %2321 = vmatprep.subr.mxu0 0.0
    %2322 = vmatpush2.msra.mxu0 0.0
    %2323 = vmatprep.subr.mxu0 0.0
    %2324 = vmatpush2.msra.mxu0 0.0
    %2325 = vmatprep.subr.mxu0 0.0
    %2326 = vmatpush2.msra.mxu0 0.0
    %2327 = vmatprep.subr.mxu0 0.0
    %2328 = vmatpush2.msra.mxu0 0.0
    %2329 = vmatprep.subr.mxu0 0.0
    %2330 = vmatpush2.msra.mxu0 0.0
    %2331 = vmatprep.subr.mxu0 0.0
    %2332 = vmatpush2.msra.mxu0 0.0
    %2333 = vmatprep.subr.mxu0 0.0
    %2334 = vmatpush2.msra.mxu0 0.0
    %2335 = vmatprep.subr.mxu0 0.0
    %2336 = vmatpush2.msra.mxu0 0.0
    %2337 = vmatprep.mubr.f32.mxu0 0.0
    %2338 = vmatmul.mubr.f32.gmra.mxu0 %v2226
    %v2339 = vpop.f32.mrf.mxu0
    %v2340 = vadd.f32 %v2223, %v2339
    %v2341 = vpop.f32.mrf.mxu0
    %2342 = vmatprep.mubr.f32.mxu0 0.0
    %2343 = vmatmul.mubr.f32.gmra.mxu0 %v2229
    %v2344 = vpop.f32.mrf.mxu0
    %v2345 = vadd.f32 %v2223, %v2344
    %v2346 = vpop.f32.mrf.mxu0
    %2347 = vmatprep.mubr.f32.mxu0 0.0
    %2348 = vmatmul.mubr.f32.gmra.mxu0 %v2232
    %v2349 = vpop.f32.mrf.mxu0
    %v2350 = vadd.f32 %v2223, %v2349
    %v2351 = vpop.f32.mrf.mxu0
    %2352 = vmatprep.mubr.f32.mxu0 0.0
    %2353 = vmatmul.mubr.f32.gmra.mxu0 %v2235
    %v2354 = vpop.f32.mrf.mxu0
    %v2355 = vadd.f32 %v2223, %v2354
    %v2356 = vpop.f32.mrf.mxu0
    %2357 = vmatprep.mubr.f32.mxu0 0.0
    %2358 = vmatmul.mubr.f32.gmra.mxu0 %v2238
    %v2359 = vpop.f32.mrf.mxu0
    %v2360 = vadd.f32 %v2223, %v2359
    %v2361 = vpop.f32.mrf.mxu0
    %2362 = vmatprep.mubr.f32.mxu0 0.0
    %2363 = vmatmul.mubr.f32.gmra.mxu0 %v2241
    %v2364 = vpop.f32.mrf.mxu0
    %v2365 = vadd.f32 %v2223, %v2364
    %v2366 = vpop.f32.mrf.mxu0
    %2367 = vmatprep.mubr.f32.mxu0 0.0
    %2368 = vmatmul.mubr.f32.gmra.mxu0 %v2244
    %v2369 = vpop.f32.mrf.mxu0
    %v2370 = vadd.f32 %v2223, %v2369
    %v2371 = vpop.f32.mrf.mxu0
    %2372 = vmatprep.mubr.f32.mxu0 0.0
    %2373 = vmatmul.mubr.f32.gmra.mxu0 %v2247
    %v2374 = vpop.f32.mrf.mxu0
    %v2375 = vadd.f32 %v2223, %v2374
    %v2376 = vpop.f32.mrf.mxu0
    %2377 = vmatprep.mubr.f32.mxu0 0.0
    %2378 = vmatmul.mubr.f32.gmra.mxu0 %v2250
    %v2379 = vpop.f32.mrf.mxu0
    %v2380 = vadd.f32 %v2223, %v2379
    %v2381 = vpop.f32.mrf.mxu0
    %2382 = vmatprep.mubr.f32.mxu0 0.0
    %2383 = vmatmul.mubr.f32.gmra.mxu0 %v2253
    %v2384 = vpop.f32.mrf.mxu0
    %v2385 = vadd.f32 %v2223, %v2384
    %v2386 = vpop.f32.mrf.mxu0
    %2387 = vmatprep.mubr.f32.mxu0 0.0
    %2388 = vmatmul.mubr.f32.gmra.mxu0 %v2256
    %v2389 = vpop.f32.mrf.mxu0
    %v2390 = vadd.f32 %v2223, %v2389
    %v2391 = vpop.f32.mrf.mxu0
    %2392 = vmatprep.mubr.f32.mxu0 0.0
    %2393 = vmatmul.mubr.f32.gmra.mxu0 %v2259
    %v2394 = vpop.f32.mrf.mxu0
    %v2395 = vadd.f32 %v2223, %v2394
    %v2396 = vpop.f32.mrf.mxu0
    %2397 = vmatprep.mubr.f32.mxu0 0.0
    %2398 = vmatmul.mubr.f32.gmra.mxu0 %v2262
    %v2399 = vpop.f32.mrf.mxu0
    %v2400 = vadd.f32 %v2223, %v2399
    %v2401 = vpop.f32.mrf.mxu0
    %2402 = vmatprep.mubr.f32.mxu0 0.0
    %2403 = vmatmul.mubr.f32.gmra.mxu0 %v2265
    %v2404 = vpop.f32.mrf.mxu0
    %v2405 = vadd.f32 %v2223, %v2404
    %v2406 = vpop.f32.mrf.mxu0
    %2407 = vmatprep.mubr.f32.mxu0 0.0
    %2408 = vmatmul.mubr.f32.gmra.mxu0 %v2268
    %v2409 = vpop.f32.mrf.mxu0
    %v2410 = vadd.f32 %v2223, %v2409
    %v2411 = vpop.f32.mrf.mxu0
    %2412 = vmatprep.mubr.f32.mxu0 0.0
    %2413 = vmatmul.mubr.f32.gmra.mxu0 %v2271
    %v2414 = vpop.f32.mrf.mxu0
    %v2415 = vadd.f32 %v2223, %v2414
    %v2416 = vpop.f32.mrf.mxu0
    %2417 = vdwg.mxu0
    %s2418 = scalar_lea.vmem [#allocation11], 64
    %2419 = vst.msk [vmem:[%s2418] sm:$0xff] %vm1676, %v2340
    %2420 = vst.msk [vmem:[%s2418 + $0x8] sm:$0xff] %vm1676, %v2345
    %2421 = vst.msk [vmem:[%s2418 + $0x10] sm:$0xff] %vm1676, %v2350
    %2422 = vst.msk [vmem:[%s2418 + $0x18] sm:$0xff] %vm1676, %v2355
    %2423 = vst.msk [vmem:[%s2418 + $0x20] sm:$0xff] %vm1676, %v2360
    %2424 = vst.msk [vmem:[%s2418 + $0x28] sm:$0xff] %vm1676, %v2365
    %2425 = vst.msk [vmem:[%s2418 + $0x30] sm:$0xff] %vm1676, %v2370
    %2426 = vst.msk [vmem:[%s2418 + $0x38] sm:$0xff] %vm1676, %v2375
    %2427 = vst.msk [vmem:[%s2418 + $0x100] sm:$0xff] %vm1676, %v2380
    %2428 = vst.msk [vmem:[%s2418 + $0x108] sm:$0xff] %vm1676, %v2385
    %2429 = vst.msk [vmem:[%s2418 + $0x110] sm:$0xff] %vm1676, %v2390
    %2430 = vst.msk [vmem:[%s2418 + $0x118] sm:$0xff] %vm1676, %v2395
    %2431 = vst.msk [vmem:[%s2418 + $0x120] sm:$0xff] %vm1676, %v2400
    %2432 = vst.msk [vmem:[%s2418 + $0x128] sm:$0xff] %vm1676, %v2405
    %2433 = vst.msk [vmem:[%s2418 + $0x130] sm:$0xff] %vm1676, %v2410
    %2434 = vst.msk [vmem:[%s2418 + $0x138] sm:$0xff] %vm1676, %v2415
    %s2435 = scalar_lea.vmem [#allocation2], 256
    %v2436 = vld [vmem:[%s2435 + $0x7] sm:$0xff]
    %v2437 = vld [vmem:[%s2435 + $0xf] sm:$0xff]
    %v2438 = vld [vmem:[%s2435 + $0x27] sm:$0xff]
    %v2439 = vld [vmem:[%s2435 + $0x2f] sm:$0xff]
    %v2440 = vld [vmem:[%s2435 + $0x47] sm:$0xff]
    %v2441 = vld [vmem:[%s2435 + $0x4f] sm:$0xff]
    %v2442 = vld [vmem:[%s2435 + $0x67] sm:$0xff]
    %v2443 = vld [vmem:[%s2435 + $0x6f] sm:$0xff]
    %v2444 = vld [vmem:[%s2435 + $0x247] sm:$0xff]
    %v2445 = vld [vmem:[%s2435 + $0x24f] sm:$0xff]
    %v2446 = vld [vmem:[%s2435 + $0x267] sm:$0xff]
    %v2447 = vld [vmem:[%s2435 + $0x26f] sm:$0xff]
    %v2448 = vld [vmem:[%s2435 + $0x287] sm:$0xff]
    %v2449 = vld [vmem:[%s2435 + $0x28f] sm:$0xff]
    %v2450 = vld [vmem:[%s2435 + $0x2a7] sm:$0xff]
    %v2451 = vld [vmem:[%s2435 + $0x2af] sm:$0xff]
    %v2452 = vld [vmem:[#allocation8] sm:$0x1]
    %v2454 = vlaneseq
    %v2455 = vshrl.u32 %v2454, 7
    %v2456 = vsub.s32 0, %v2455
    %v2457 = vrot.slane %v2452, %v2456
    %v2459 = vmul.f32 %v2436, %v2457
    %v2460 = vmul.f32 %v2437, %v2457
    %v2461 = vmul.f32 %v2438, %v2457
    %v2462 = vmul.f32 %v2439, %v2457
    %v2463 = vmul.f32 %v2440, %v2457
    %v2464 = vmul.f32 %v2441, %v2457
    %v2465 = vmul.f32 %v2442, %v2457
    %v2466 = vmul.f32 %v2443, %v2457
    %v2467 = vmul.f32 %v2444, %v2457
    %v2468 = vmul.f32 %v2445, %v2457
    %v2469 = vmul.f32 %v2446, %v2457
    %v2470 = vmul.f32 %v2447, %v2457
    %v2471 = vmul.f32 %v2448, %v2457
    %v2472 = vmul.f32 %v2449, %v2457
    %v2473 = vmul.f32 %v2450, %v2457
    %v2474 = vmul.f32 %v2451, %v2457
    %v2475 = vld [vmem:[%s2435 + $0x8] sm:$0xff]
    %v2476 = vld [vmem:[%s2435 + $0x10] sm:$0xff]
    %v2477 = vld [vmem:[%s2435 + $0x28] sm:$0xff]
    %v2478 = vld [vmem:[%s2435 + $0x30] sm:$0xff]
    %v2479 = vld [vmem:[%s2435 + $0x48] sm:$0xff]
    %v2480 = vld [vmem:[%s2435 + $0x50] sm:$0xff]
    %v2481 = vld [vmem:[%s2435 + $0x68] sm:$0xff]
    %v2482 = vld [vmem:[%s2435 + $0x70] sm:$0xff]
    %v2483 = vld [vmem:[%s2435 + $0x248] sm:$0xff]
    %v2484 = vld [vmem:[%s2435 + $0x250] sm:$0xff]
    %v2485 = vld [vmem:[%s2435 + $0x268] sm:$0xff]
    %v2486 = vld [vmem:[%s2435 + $0x270] sm:$0xff]
    %v2487 = vld [vmem:[%s2435 + $0x288] sm:$0xff]
    %v2488 = vld [vmem:[%s2435 + $0x290] sm:$0xff]
    %v2489 = vld [vmem:[%s2435 + $0x2a8] sm:$0xff]
    %v2490 = vld [vmem:[%s2435 + $0x2b0] sm:$0xff]
    %v2491 = vld [vmem:[%s1000] sm:$0x1]
    %v2493 = vlaneseq
    %v2494 = vshrl.u32 %v2493, 7
    %v2495 = vsub.s32 0, %v2494
    %v2496 = vrot.slane %v2491, %v2495
    %v2498 = vmul.f32 %v2475, %v2496
    %v2499 = vmul.f32 %v2476, %v2496
    %v2500 = vmul.f32 %v2477, %v2496
    %v2501 = vmul.f32 %v2478, %v2496
    %v2502 = vmul.f32 %v2479, %v2496
    %v2503 = vmul.f32 %v2480, %v2496
    %v2504 = vmul.f32 %v2481, %v2496
    %v2505 = vmul.f32 %v2482, %v2496
    %v2506 = vmul.f32 %v2483, %v2496
    %v2507 = vmul.f32 %v2484, %v2496
    %v2508 = vmul.f32 %v2485, %v2496
    %v2509 = vmul.f32 %v2486, %v2496
    %v2510 = vmul.f32 %v2487, %v2496
    %v2511 = vmul.f32 %v2488, %v2496
    %v2512 = vmul.f32 %v2489, %v2496
    %v2513 = vmul.f32 %v2490, %v2496
    %v2514 = vadd.f32 %v2459, %v2498
    %v2515 = vadd.f32 %v2460, %v2499
    %v2516 = vadd.f32 %v2461, %v2500
    %v2517 = vadd.f32 %v2462, %v2501
    %v2518 = vadd.f32 %v2463, %v2502
    %v2519 = vadd.f32 %v2464, %v2503
    %v2520 = vadd.f32 %v2465, %v2504
    %v2521 = vadd.f32 %v2466, %v2505
    %v2522 = vadd.f32 %v2467, %v2506
    %v2523 = vadd.f32 %v2468, %v2507
    %v2524 = vadd.f32 %v2469, %v2508
    %v2525 = vadd.f32 %v2470, %v2509
    %v2526 = vadd.f32 %v2471, %v2510
    %v2527 = vadd.f32 %v2472, %v2511
    %v2528 = vadd.f32 %v2473, %v2512
    %v2529 = vadd.f32 %v2474, %v2513
    %v2530 = vld [vmem:[%s2435 + $0x9] sm:$0xff]
    %v2531 = vld [vmem:[%s2435 + $0x11] sm:$0xff]
    %v2532 = vld [vmem:[%s2435 + $0x29] sm:$0xff]
    %v2533 = vld [vmem:[%s2435 + $0x31] sm:$0xff]
    %v2534 = vld [vmem:[%s2435 + $0x49] sm:$0xff]
    %v2535 = vld [vmem:[%s2435 + $0x51] sm:$0xff]
    %v2536 = vld [vmem:[%s2435 + $0x69] sm:$0xff]
    %v2537 = vld [vmem:[%s2435 + $0x71] sm:$0xff]
    %v2538 = vld [vmem:[%s2435 + $0x249] sm:$0xff]
    %v2539 = vld [vmem:[%s2435 + $0x251] sm:$0xff]
    %v2540 = vld [vmem:[%s2435 + $0x269] sm:$0xff]
    %v2541 = vld [vmem:[%s2435 + $0x271] sm:$0xff]
    %v2542 = vld [vmem:[%s2435 + $0x289] sm:$0xff]
    %v2543 = vld [vmem:[%s2435 + $0x291] sm:$0xff]
    %v2544 = vld [vmem:[%s2435 + $0x2a9] sm:$0xff]
    %v2545 = vld [vmem:[%s2435 + $0x2b1] sm:$0xff]
    %v2546 = vld [vmem:[%s1056] sm:$0x1]
    %v2548 = vlaneseq
    %v2549 = vshrl.u32 %v2548, 7
    %v2550 = vsub.s32 0, %v2549
    %v2551 = vrot.slane %v2546, %v2550
    %v2553 = vmul.f32 %v2530, %v2551
    %v2554 = vmul.f32 %v2531, %v2551
    %v2555 = vmul.f32 %v2532, %v2551
    %v2556 = vmul.f32 %v2533, %v2551
    %v2557 = vmul.f32 %v2534, %v2551
    %v2558 = vmul.f32 %v2535, %v2551
    %v2559 = vmul.f32 %v2536, %v2551
    %v2560 = vmul.f32 %v2537, %v2551
    %v2561 = vmul.f32 %v2538, %v2551
    %v2562 = vmul.f32 %v2539, %v2551
    %v2563 = vmul.f32 %v2540, %v2551
    %v2564 = vmul.f32 %v2541, %v2551
    %v2565 = vmul.f32 %v2542, %v2551
    %v2566 = vmul.f32 %v2543, %v2551
    %v2567 = vmul.f32 %v2544, %v2551
    %v2568 = vmul.f32 %v2545, %v2551
    %v2569 = vadd.f32 %v2514, %v2553
    %v2570 = vadd.f32 %v2515, %v2554
    %v2571 = vadd.f32 %v2516, %v2555
    %v2572 = vadd.f32 %v2517, %v2556
    %v2573 = vadd.f32 %v2518, %v2557
    %v2574 = vadd.f32 %v2519, %v2558
    %v2575 = vadd.f32 %v2520, %v2559
    %v2576 = vadd.f32 %v2521, %v2560
    %v2577 = vadd.f32 %v2522, %v2561
    %v2578 = vadd.f32 %v2523, %v2562
    %v2579 = vadd.f32 %v2524, %v2563
    %v2580 = vadd.f32 %v2525, %v2564
    %v2581 = vadd.f32 %v2526, %v2565
    %v2582 = vadd.f32 %v2527, %v2566
    %v2583 = vadd.f32 %v2528, %v2567
    %v2584 = vadd.f32 %v2529, %v2568
    %s2585 = scalar_lea.vmem [#allocation2], 288
    %v2586 = vld [vmem:[%s2585 + $0x7] sm:$0xff]
    %v2587 = vld [vmem:[%s2585 + $0xf] sm:$0xff]
    %v2588 = vld [vmem:[%s2585 + $0x27] sm:$0xff]
    %v2589 = vld [vmem:[%s2585 + $0x2f] sm:$0xff]
    %v2590 = vld [vmem:[%s2585 + $0x47] sm:$0xff]
    %v2591 = vld [vmem:[%s2585 + $0x4f] sm:$0xff]
    %v2592 = vld [vmem:[%s2585 + $0x67] sm:$0xff]
    %v2593 = vld [vmem:[%s2585 + $0x6f] sm:$0xff]
    %v2594 = vld [vmem:[%s2585 + $0x247] sm:$0xff]
    %v2595 = vld [vmem:[%s2585 + $0x24f] sm:$0xff]
    %v2596 = vld [vmem:[%s2585 + $0x267] sm:$0xff]
    %v2597 = vld [vmem:[%s2585 + $0x26f] sm:$0xff]
    %v2598 = vld [vmem:[%s2585 + $0x287] sm:$0xff]
    %v2599 = vld [vmem:[%s2585 + $0x28f] sm:$0xff]
    %v2600 = vld [vmem:[%s2585 + $0x2a7] sm:$0xff]
    %v2601 = vld [vmem:[%s2585 + $0x2af] sm:$0xff]
    %v2602 = vld [vmem:[%s1112] sm:$0x1]
    %v2604 = vlaneseq
    %v2605 = vshrl.u32 %v2604, 7
    %v2606 = vsub.s32 0, %v2605
    %v2607 = vrot.slane %v2602, %v2606
    %v2609 = vmul.f32 %v2586, %v2607
    %v2610 = vmul.f32 %v2587, %v2607
    %v2611 = vmul.f32 %v2588, %v2607
    %v2612 = vmul.f32 %v2589, %v2607
    %v2613 = vmul.f32 %v2590, %v2607
    %v2614 = vmul.f32 %v2591, %v2607
    %v2615 = vmul.f32 %v2592, %v2607
    %v2616 = vmul.f32 %v2593, %v2607
    %v2617 = vmul.f32 %v2594, %v2607
    %v2618 = vmul.f32 %v2595, %v2607
    %v2619 = vmul.f32 %v2596, %v2607
    %v2620 = vmul.f32 %v2597, %v2607
    %v2621 = vmul.f32 %v2598, %v2607
    %v2622 = vmul.f32 %v2599, %v2607
    %v2623 = vmul.f32 %v2600, %v2607
    %v2624 = vmul.f32 %v2601, %v2607
    %v2625 = vadd.f32 %v2569, %v2609
    %v2626 = vadd.f32 %v2570, %v2610
    %v2627 = vadd.f32 %v2571, %v2611
    %v2628 = vadd.f32 %v2572, %v2612
    %v2629 = vadd.f32 %v2573, %v2613
    %v2630 = vadd.f32 %v2574, %v2614
    %v2631 = vadd.f32 %v2575, %v2615
    %v2632 = vadd.f32 %v2576, %v2616
    %v2633 = vadd.f32 %v2577, %v2617
    %v2634 = vadd.f32 %v2578, %v2618
    %v2635 = vadd.f32 %v2579, %v2619
    %v2636 = vadd.f32 %v2580, %v2620
    %v2637 = vadd.f32 %v2581, %v2621
    %v2638 = vadd.f32 %v2582, %v2622
    %v2639 = vadd.f32 %v2583, %v2623
    %v2640 = vadd.f32 %v2584, %v2624
    %v2641 = vld [vmem:[%s2585 + $0x8] sm:$0xff]
    %v2642 = vld [vmem:[%s2585 + $0x10] sm:$0xff]
    %v2643 = vld [vmem:[%s2585 + $0x28] sm:$0xff]
    %v2644 = vld [vmem:[%s2585 + $0x30] sm:$0xff]
    %v2645 = vld [vmem:[%s2585 + $0x48] sm:$0xff]
    %v2646 = vld [vmem:[%s2585 + $0x50] sm:$0xff]
    %v2647 = vld [vmem:[%s2585 + $0x68] sm:$0xff]
    %v2648 = vld [vmem:[%s2585 + $0x70] sm:$0xff]
    %v2649 = vld [vmem:[%s2585 + $0x248] sm:$0xff]
    %v2650 = vld [vmem:[%s2585 + $0x250] sm:$0xff]
    %v2651 = vld [vmem:[%s2585 + $0x268] sm:$0xff]
    %v2652 = vld [vmem:[%s2585 + $0x270] sm:$0xff]
    %v2653 = vld [vmem:[%s2585 + $0x288] sm:$0xff]
    %v2654 = vld [vmem:[%s2585 + $0x290] sm:$0xff]
    %v2655 = vld [vmem:[%s2585 + $0x2a8] sm:$0xff]
    %v2656 = vld [vmem:[%s2585 + $0x2b0] sm:$0xff]
    %v2657 = vld [vmem:[%s1168] sm:$0x1]
    %v2659 = vlaneseq
    %v2660 = vshrl.u32 %v2659, 7
    %v2661 = vsub.s32 0, %v2660
    %v2662 = vrot.slane %v2657, %v2661
    %v2664 = vmul.f32 %v2641, %v2662
    %v2665 = vmul.f32 %v2642, %v2662
    %v2666 = vmul.f32 %v2643, %v2662
    %v2667 = vmul.f32 %v2644, %v2662
    %v2668 = vmul.f32 %v2645, %v2662
    %v2669 = vmul.f32 %v2646, %v2662
    %v2670 = vmul.f32 %v2647, %v2662
    %v2671 = vmul.f32 %v2648, %v2662
    %v2672 = vmul.f32 %v2649, %v2662
    %v2673 = vmul.f32 %v2650, %v2662
    %v2674 = vmul.f32 %v2651, %v2662
    %v2675 = vmul.f32 %v2652, %v2662
    %v2676 = vmul.f32 %v2653, %v2662
    %v2677 = vmul.f32 %v2654, %v2662
    %v2678 = vmul.f32 %v2655, %v2662
    %v2679 = vmul.f32 %v2656, %v2662
    %v2680 = vadd.f32 %v2625, %v2664
    %v2681 = vadd.f32 %v2626, %v2665
    %v2682 = vadd.f32 %v2627, %v2666
    %v2683 = vadd.f32 %v2628, %v2667
    %v2684 = vadd.f32 %v2629, %v2668
    %v2685 = vadd.f32 %v2630, %v2669
    %v2686 = vadd.f32 %v2631, %v2670
    %v2687 = vadd.f32 %v2632, %v2671
    %v2688 = vadd.f32 %v2633, %v2672
    %v2689 = vadd.f32 %v2634, %v2673
    %v2690 = vadd.f32 %v2635, %v2674
    %v2691 = vadd.f32 %v2636, %v2675
    %v2692 = vadd.f32 %v2637, %v2676
    %v2693 = vadd.f32 %v2638, %v2677
    %v2694 = vadd.f32 %v2639, %v2678
    %v2695 = vadd.f32 %v2640, %v2679
    %v2696 = vld [vmem:[%s2585 + $0x9] sm:$0xff]
    %v2697 = vld [vmem:[%s2585 + $0x11] sm:$0xff]
    %v2698 = vld [vmem:[%s2585 + $0x29] sm:$0xff]
    %v2699 = vld [vmem:[%s2585 + $0x31] sm:$0xff]
    %v2700 = vld [vmem:[%s2585 + $0x49] sm:$0xff]
    %v2701 = vld [vmem:[%s2585 + $0x51] sm:$0xff]
    %v2702 = vld [vmem:[%s2585 + $0x69] sm:$0xff]
    %v2703 = vld [vmem:[%s2585 + $0x71] sm:$0xff]
    %v2704 = vld [vmem:[%s2585 + $0x249] sm:$0xff]
    %v2705 = vld [vmem:[%s2585 + $0x251] sm:$0xff]
    %v2706 = vld [vmem:[%s2585 + $0x269] sm:$0xff]
    %v2707 = vld [vmem:[%s2585 + $0x271] sm:$0xff]
    %v2708 = vld [vmem:[%s2585 + $0x289] sm:$0xff]
    %v2709 = vld [vmem:[%s2585 + $0x291] sm:$0xff]
    %v2710 = vld [vmem:[%s2585 + $0x2a9] sm:$0xff]
    %v2711 = vld [vmem:[%s2585 + $0x2b1] sm:$0xff]
    %v2712 = vld [vmem:[%s1224] sm:$0x1]
    %v2714 = vlaneseq
    %v2715 = vshrl.u32 %v2714, 7
    %v2716 = vsub.s32 0, %v2715
    %v2717 = vrot.slane %v2712, %v2716
    %v2719 = vmul.f32 %v2696, %v2717
    %v2720 = vmul.f32 %v2697, %v2717
    %v2721 = vmul.f32 %v2698, %v2717
    %v2722 = vmul.f32 %v2699, %v2717
    %v2723 = vmul.f32 %v2700, %v2717
    %v2724 = vmul.f32 %v2701, %v2717
    %v2725 = vmul.f32 %v2702, %v2717
    %v2726 = vmul.f32 %v2703, %v2717
    %v2727 = vmul.f32 %v2704, %v2717
    %v2728 = vmul.f32 %v2705, %v2717
    %v2729 = vmul.f32 %v2706, %v2717
    %v2730 = vmul.f32 %v2707, %v2717
    %v2731 = vmul.f32 %v2708, %v2717
    %v2732 = vmul.f32 %v2709, %v2717
    %v2733 = vmul.f32 %v2710, %v2717
    %v2734 = vmul.f32 %v2711, %v2717
    %v2735 = vadd.f32 %v2680, %v2719
    %v2736 = vadd.f32 %v2681, %v2720
    %v2737 = vadd.f32 %v2682, %v2721
    %v2738 = vadd.f32 %v2683, %v2722
    %v2739 = vadd.f32 %v2684, %v2723
    %v2740 = vadd.f32 %v2685, %v2724
    %v2741 = vadd.f32 %v2686, %v2725
    %v2742 = vadd.f32 %v2687, %v2726
    %v2743 = vadd.f32 %v2688, %v2727
    %v2744 = vadd.f32 %v2689, %v2728
    %v2745 = vadd.f32 %v2690, %v2729
    %v2746 = vadd.f32 %v2691, %v2730
    %v2747 = vadd.f32 %v2692, %v2731
    %v2748 = vadd.f32 %v2693, %v2732
    %v2749 = vadd.f32 %v2694, %v2733
    %v2750 = vadd.f32 %v2695, %v2734
    %s2751 = scalar_lea.vmem [#allocation2], 320
    %v2752 = vld [vmem:[%s2751 + $0x7] sm:$0xff]
    %v2753 = vld [vmem:[%s2751 + $0xf] sm:$0xff]
    %v2754 = vld [vmem:[%s2751 + $0x27] sm:$0xff]
    %v2755 = vld [vmem:[%s2751 + $0x2f] sm:$0xff]
    %v2756 = vld [vmem:[%s2751 + $0x47] sm:$0xff]
    %v2757 = vld [vmem:[%s2751 + $0x4f] sm:$0xff]
    %v2758 = vld [vmem:[%s2751 + $0x67] sm:$0xff]
    %v2759 = vld [vmem:[%s2751 + $0x6f] sm:$0xff]
    %v2760 = vld [vmem:[%s2751 + $0x247] sm:$0xff]
    %v2761 = vld [vmem:[%s2751 + $0x24f] sm:$0xff]
    %v2762 = vld [vmem:[%s2751 + $0x267] sm:$0xff]
    %v2763 = vld [vmem:[%s2751 + $0x26f] sm:$0xff]
    %v2764 = vld [vmem:[%s2751 + $0x287] sm:$0xff]
    %v2765 = vld [vmem:[%s2751 + $0x28f] sm:$0xff]
    %v2766 = vld [vmem:[%s2751 + $0x2a7] sm:$0xff]
    %v2767 = vld [vmem:[%s2751 + $0x2af] sm:$0xff]
    %v2768 = vld [vmem:[%s1281] sm:$0x1]
    %v2770 = vlaneseq
    %v2771 = vshrl.u32 %v2770, 7
    %v2772 = vsub.s32 0, %v2771
    %v2773 = vrot.slane %v2768, %v2772
    %v2775 = vmul.f32 %v2752, %v2773
    %v2776 = vmul.f32 %v2753, %v2773
    %v2777 = vmul.f32 %v2754, %v2773
    %v2778 = vmul.f32 %v2755, %v2773
    %v2779 = vmul.f32 %v2756, %v2773
    %v2780 = vmul.f32 %v2757, %v2773
    %v2781 = vmul.f32 %v2758, %v2773
    %v2782 = vmul.f32 %v2759, %v2773
    %v2783 = vmul.f32 %v2760, %v2773
    %v2784 = vmul.f32 %v2761, %v2773
    %v2785 = vmul.f32 %v2762, %v2773
    %v2786 = vmul.f32 %v2763, %v2773
    %v2787 = vmul.f32 %v2764, %v2773
    %v2788 = vmul.f32 %v2765, %v2773
    %v2789 = vmul.f32 %v2766, %v2773
    %v2790 = vmul.f32 %v2767, %v2773
    %v2791 = vadd.f32 %v2735, %v2775
    %v2792 = vadd.f32 %v2736, %v2776
    %v2793 = vadd.f32 %v2737, %v2777
    %v2794 = vadd.f32 %v2738, %v2778
    %v2795 = vadd.f32 %v2739, %v2779
    %v2796 = vadd.f32 %v2740, %v2780
    %v2797 = vadd.f32 %v2741, %v2781
    %v2798 = vadd.f32 %v2742, %v2782
    %v2799 = vadd.f32 %v2743, %v2783
    %v2800 = vadd.f32 %v2744, %v2784
    %v2801 = vadd.f32 %v2745, %v2785
    %v2802 = vadd.f32 %v2746, %v2786
    %v2803 = vadd.f32 %v2747, %v2787
    %v2804 = vadd.f32 %v2748, %v2788
    %v2805 = vadd.f32 %v2749, %v2789
    %v2806 = vadd.f32 %v2750, %v2790
    %v2807 = vld [vmem:[%s2751 + $0x8] sm:$0xff]
    %v2808 = vld [vmem:[%s2751 + $0x10] sm:$0xff]
    %v2809 = vld [vmem:[%s2751 + $0x28] sm:$0xff]
    %v2810 = vld [vmem:[%s2751 + $0x30] sm:$0xff]
    %v2811 = vld [vmem:[%s2751 + $0x48] sm:$0xff]
    %v2812 = vld [vmem:[%s2751 + $0x50] sm:$0xff]
    %v2813 = vld [vmem:[%s2751 + $0x68] sm:$0xff]
    %v2814 = vld [vmem:[%s2751 + $0x70] sm:$0xff]
    %v2815 = vld [vmem:[%s2751 + $0x248] sm:$0xff]
    %v2816 = vld [vmem:[%s2751 + $0x250] sm:$0xff]
    %v2817 = vld [vmem:[%s2751 + $0x268] sm:$0xff]
    %v2818 = vld [vmem:[%s2751 + $0x270] sm:$0xff]
    %v2819 = vld [vmem:[%s2751 + $0x288] sm:$0xff]
    %v2820 = vld [vmem:[%s2751 + $0x290] sm:$0xff]
    %v2821 = vld [vmem:[%s2751 + $0x2a8] sm:$0xff]
    %v2822 = vld [vmem:[%s2751 + $0x2b0] sm:$0xff]
    %v2823 = vld [vmem:[%s1337] sm:$0x1]
    %v2825 = vlaneseq
    %v2826 = vshrl.u32 %v2825, 7
    %v2827 = vsub.s32 0, %v2826
    %v2828 = vrot.slane %v2823, %v2827
    %v2830 = vmul.f32 %v2807, %v2828
    %v2831 = vmul.f32 %v2808, %v2828
    %v2832 = vmul.f32 %v2809, %v2828
    %v2833 = vmul.f32 %v2810, %v2828
    %v2834 = vmul.f32 %v2811, %v2828
    %v2835 = vmul.f32 %v2812, %v2828
    %v2836 = vmul.f32 %v2813, %v2828
    %v2837 = vmul.f32 %v2814, %v2828
    %v2838 = vmul.f32 %v2815, %v2828
    %v2839 = vmul.f32 %v2816, %v2828
    %v2840 = vmul.f32 %v2817, %v2828
    %v2841 = vmul.f32 %v2818, %v2828
    %v2842 = vmul.f32 %v2819, %v2828
    %v2843 = vmul.f32 %v2820, %v2828
    %v2844 = vmul.f32 %v2821, %v2828
    %v2845 = vmul.f32 %v2822, %v2828
    %v2846 = vadd.f32 %v2791, %v2830
    %v2847 = vadd.f32 %v2792, %v2831
    %v2848 = vadd.f32 %v2793, %v2832
    %v2849 = vadd.f32 %v2794, %v2833
    %v2850 = vadd.f32 %v2795, %v2834
    %v2851 = vadd.f32 %v2796, %v2835
    %v2852 = vadd.f32 %v2797, %v2836
    %v2853 = vadd.f32 %v2798, %v2837
    %v2854 = vadd.f32 %v2799, %v2838
    %v2855 = vadd.f32 %v2800, %v2839
    %v2856 = vadd.f32 %v2801, %v2840
    %v2857 = vadd.f32 %v2802, %v2841
    %v2858 = vadd.f32 %v2803, %v2842
    %v2859 = vadd.f32 %v2804, %v2843
    %v2860 = vadd.f32 %v2805, %v2844
    %v2861 = vadd.f32 %v2806, %v2845
    %v2862 = vld [vmem:[%s2751 + $0x9] sm:$0xff]
    %v2863 = vld [vmem:[%s2751 + $0x11] sm:$0xff]
    %v2864 = vld [vmem:[%s2751 + $0x29] sm:$0xff]
    %v2865 = vld [vmem:[%s2751 + $0x31] sm:$0xff]
    %v2866 = vld [vmem:[%s2751 + $0x49] sm:$0xff]
    %v2867 = vld [vmem:[%s2751 + $0x51] sm:$0xff]
    %v2868 = vld [vmem:[%s2751 + $0x69] sm:$0xff]
    %v2869 = vld [vmem:[%s2751 + $0x71] sm:$0xff]
    %v2870 = vld [vmem:[%s2751 + $0x249] sm:$0xff]
    %v2871 = vld [vmem:[%s2751 + $0x251] sm:$0xff]
    %v2872 = vld [vmem:[%s2751 + $0x269] sm:$0xff]
    %v2873 = vld [vmem:[%s2751 + $0x271] sm:$0xff]
    %v2874 = vld [vmem:[%s2751 + $0x289] sm:$0xff]
    %v2875 = vld [vmem:[%s2751 + $0x291] sm:$0xff]
    %v2876 = vld [vmem:[%s2751 + $0x2a9] sm:$0xff]
    %v2877 = vld [vmem:[%s2751 + $0x2b1] sm:$0xff]
    %v2878 = vld [vmem:[%s1393] sm:$0x1]
    %v2880 = vlaneseq
    %v2881 = vshrl.u32 %v2880, 7
    %v2882 = vsub.s32 0, %v2881
    %v2883 = vrot.slane %v2878, %v2882
    %v2885 = vmul.f32 %v2862, %v2883
    %v2886 = vmul.f32 %v2863, %v2883
    %v2887 = vmul.f32 %v2864, %v2883
    %v2888 = vmul.f32 %v2865, %v2883
    %v2889 = vmul.f32 %v2866, %v2883
    %v2890 = vmul.f32 %v2867, %v2883
    %v2891 = vmul.f32 %v2868, %v2883
    %v2892 = vmul.f32 %v2869, %v2883
    %v2893 = vmul.f32 %v2870, %v2883
    %v2894 = vmul.f32 %v2871, %v2883
    %v2895 = vmul.f32 %v2872, %v2883
    %v2896 = vmul.f32 %v2873, %v2883
    %v2897 = vmul.f32 %v2874, %v2883
    %v2898 = vmul.f32 %v2875, %v2883
    %v2899 = vmul.f32 %v2876, %v2883
    %v2900 = vmul.f32 %v2877, %v2883
    %v2901 = vadd.f32 %v2846, %v2885
    %v2902 = vadd.f32 %v2847, %v2886
    %v2903 = vadd.f32 %v2848, %v2887
    %v2904 = vadd.f32 %v2849, %v2888
    %v2905 = vadd.f32 %v2850, %v2889
    %v2906 = vadd.f32 %v2851, %v2890
    %v2907 = vadd.f32 %v2852, %v2891
    %v2908 = vadd.f32 %v2853, %v2892
    %v2909 = vadd.f32 %v2854, %v2893
    %v2910 = vadd.f32 %v2855, %v2894
    %v2911 = vadd.f32 %v2856, %v2895
    %v2912 = vadd.f32 %v2857, %v2896
    %v2913 = vadd.f32 %v2858, %v2897
    %v2914 = vadd.f32 %v2859, %v2898
    %v2915 = vadd.f32 %v2860, %v2899
    %v2916 = vadd.f32 %v2861, %v2900
    %v2917 = vld [vmem:[%s4] sm:$0x1]
    %v2919 = vlaneseq
    %v2920 = vshrl.u32 %v2919, 7
    %v2921 = vsub.s32 0, %v2920
    %v2922 = vrot.slane %v2917, %v2921
    %v2924 = vadd.f32 %v2901, %v2922
    %v2925 = vadd.f32 %v2902, %v2922
    %v2926 = vadd.f32 %v2903, %v2922
    %v2927 = vadd.f32 %v2904, %v2922
    %v2928 = vadd.f32 %v2905, %v2922
    %v2929 = vadd.f32 %v2906, %v2922
    %v2930 = vadd.f32 %v2907, %v2922
    %v2931 = vadd.f32 %v2908, %v2922
    %v2932 = vadd.f32 %v2909, %v2922
    %v2933 = vadd.f32 %v2910, %v2922
    %v2934 = vadd.f32 %v2911, %v2922
    %v2935 = vadd.f32 %v2912, %v2922
    %v2936 = vadd.f32 %v2913, %v2922
    %v2937 = vadd.f32 %v2914, %v2922
    %v2938 = vadd.f32 %v2915, %v2922
    %v2939 = vadd.f32 %v2916, %v2922
    %v2940 = vmax.f32 %v2924, 0.0
    %v2941 = vmax.f32 %v2925, 0.0
    %v2942 = vmax.f32 %v2926, 0.0
    %v2943 = vmax.f32 %v2927, 0.0
    %v2944 = vmax.f32 %v2928, 0.0
    %v2945 = vmax.f32 %v2929, 0.0
    %v2946 = vmax.f32 %v2930, 0.0
    %v2947 = vmax.f32 %v2931, 0.0
    %v2948 = vmax.f32 %v2932, 0.0
    %v2949 = vmax.f32 %v2933, 0.0
    %v2950 = vmax.f32 %v2934, 0.0
    %v2951 = vmax.f32 %v2935, 0.0
    %v2952 = vmax.f32 %v2936, 0.0
    %v2953 = vmax.f32 %v2937, 0.0
    %v2954 = vmax.f32 %v2938, 0.0
    %v2955 = vmax.f32 %v2939, 0.0
    %v2956 = vld [vmem:[#allocation9] sm:$0xff]
    %v2957 = vld [vmem:[#allocation9 + $0x8] sm:$0xff]
    %v2958 = vld [vmem:[#allocation9 + $0x10] sm:$0xff]
    %v2959 = vld [vmem:[#allocation9 + $0x18] sm:$0xff]
    %v2960 = vld [vmem:[%s6] sm:$0x1]
    %v2962 = vlaneseq
    %v2963 = vshrl.u32 %v2962, 7
    %v2964 = vsub.s32 0, %v2963
    %v2965 = vrot.slane %v2960, %v2964
    %v2968 = vsel %vm797, %v2940, 0
    %v2971 = vsel %vm797, %v2941, 0
    %v2974 = vsel %vm797, %v2942, 0
    %v2977 = vsel %vm797, %v2943, 0
    %v2980 = vsel %vm797, %v2944, 0
    %v2983 = vsel %vm797, %v2945, 0
    %v2986 = vsel %vm797, %v2946, 0
    %v2989 = vsel %vm797, %v2947, 0
    %v2992 = vsel %vm797, %v2948, 0
    %v2995 = vsel %vm797, %v2949, 0
    %v2998 = vsel %vm797, %v2950, 0
    %v3001 = vsel %vm797, %v2951, 0
    %v3004 = vsel %vm797, %v2952, 0
    %v3007 = vsel %vm797, %v2953, 0
    %v3010 = vsel %vm797, %v2954, 0
    %v3013 = vsel %vm797, %v2955, 0
    %3015 = vmatprep.subr.mxu0 0.0
    %3016 = vmatpush1.msra.mxu0 0.0
    %3017 = vmatprep.subr.mxu0 0.0
    %3018 = vmatpush1.msra.mxu0 0.0
    %3019 = vmatprep.subr.mxu0 0.0
    %3020 = vmatpush1.msra.mxu0 0.0
    %3021 = vmatprep.subr.mxu0 0.0
    %3022 = vmatpush1.msra.mxu0 0.0
    %3023 = vmatprep.subr.mxu0 0.0
    %3024 = vmatpush1.msra.mxu0 0.0
    %3025 = vmatprep.subr.mxu0 0.0
    %3026 = vmatpush1.msra.mxu0 0.0
    %3027 = vmatprep.subr.mxu0 0.0
    %3028 = vmatpush1.msra.mxu0 0.0
    %3029 = vmatprep.subr.mxu0 0.0
    %3030 = vmatpush1.msra.mxu0 0.0
    %3031 = vmatprep.subr.mxu0 0.0
    %3032 = vmatpush1.msra.mxu0 0.0
    %3033 = vmatprep.subr.mxu0 0.0
    %3034 = vmatpush1.msra.mxu0 0.0
    %3035 = vmatprep.subr.mxu0 0.0
    %3036 = vmatpush1.msra.mxu0 0.0
    %3037 = vmatprep.subr.mxu0 0.0
    %3038 = vmatpush1.msra.mxu0 0.0
    %3039 = vmatprep.subr.mxu0 0.0
    %3040 = vmatpush1.msra.mxu0 %v2959
    %3041 = vmatprep.subr.mxu0 0.0
    %3042 = vmatpush1.msra.mxu0 %v2958
    %3043 = vmatprep.subr.mxu0 0.0
    %3044 = vmatpush1.msra.mxu0 %v2957
    %3045 = vmatprep.subr.mxu0 0.0
    %3046 = vmatpush1.msra.mxu0 %v2956
    %3047 = vmatprep.subr.mxu0 0.0
    %3048 = vmatpush2.msra.mxu0 0.0
    %3049 = vmatprep.subr.mxu0 0.0
    %3050 = vmatpush2.msra.mxu0 0.0
    %3051 = vmatprep.subr.mxu0 0.0
    %3052 = vmatpush2.msra.mxu0 0.0
    %3053 = vmatprep.subr.mxu0 0.0
    %3054 = vmatpush2.msra.mxu0 0.0
    %3055 = vmatprep.subr.mxu0 0.0
    %3056 = vmatpush2.msra.mxu0 0.0
    %3057 = vmatprep.subr.mxu0 0.0
    %3058 = vmatpush2.msra.mxu0 0.0
    %3059 = vmatprep.subr.mxu0 0.0
    %3060 = vmatpush2.msra.mxu0 0.0
    %3061 = vmatprep.subr.mxu0 0.0
    %3062 = vmatpush2.msra.mxu0 0.0
    %3063 = vmatprep.subr.mxu0 0.0
    %3064 = vmatpush2.msra.mxu0 0.0
    %3065 = vmatprep.subr.mxu0 0.0
    %3066 = vmatpush2.msra.mxu0 0.0
    %3067 = vmatprep.subr.mxu0 0.0
    %3068 = vmatpush2.msra.mxu0 0.0
    %3069 = vmatprep.subr.mxu0 0.0
    %3070 = vmatpush2.msra.mxu0 0.0
    %3071 = vmatprep.subr.mxu0 0.0
    %3072 = vmatpush2.msra.mxu0 0.0
    %3073 = vmatprep.subr.mxu0 0.0
    %3074 = vmatpush2.msra.mxu0 0.0
    %3075 = vmatprep.subr.mxu0 0.0
    %3076 = vmatpush2.msra.mxu0 0.0
    %3077 = vmatprep.subr.mxu0 0.0
    %3078 = vmatpush2.msra.mxu0 0.0
    %3079 = vmatprep.mubr.f32.mxu0 0.0
    %3080 = vmatmul.mubr.f32.gmra.mxu0 %v2968
    %v3081 = vpop.f32.mrf.mxu0
    %v3082 = vadd.f32 %v2965, %v3081
    %v3083 = vpop.f32.mrf.mxu0
    %3084 = vmatprep.mubr.f32.mxu0 0.0
    %3085 = vmatmul.mubr.f32.gmra.mxu0 %v2971
    %v3086 = vpop.f32.mrf.mxu0
    %v3087 = vadd.f32 %v2965, %v3086
    %v3088 = vpop.f32.mrf.mxu0
    %3089 = vmatprep.mubr.f32.mxu0 0.0
    %3090 = vmatmul.mubr.f32.gmra.mxu0 %v2974
    %v3091 = vpop.f32.mrf.mxu0
    %v3092 = vadd.f32 %v2965, %v3091
    %v3093 = vpop.f32.mrf.mxu0
    %3094 = vmatprep.mubr.f32.mxu0 0.0
    %3095 = vmatmul.mubr.f32.gmra.mxu0 %v2977
    %v3096 = vpop.f32.mrf.mxu0
    %v3097 = vadd.f32 %v2965, %v3096
    %v3098 = vpop.f32.mrf.mxu0
    %3099 = vmatprep.mubr.f32.mxu0 0.0
    %3100 = vmatmul.mubr.f32.gmra.mxu0 %v2980
    %v3101 = vpop.f32.mrf.mxu0
    %v3102 = vadd.f32 %v2965, %v3101
    %v3103 = vpop.f32.mrf.mxu0
    %3104 = vmatprep.mubr.f32.mxu0 0.0
    %3105 = vmatmul.mubr.f32.gmra.mxu0 %v2983
    %v3106 = vpop.f32.mrf.mxu0
    %v3107 = vadd.f32 %v2965, %v3106
    %v3108 = vpop.f32.mrf.mxu0
    %3109 = vmatprep.mubr.f32.mxu0 0.0
    %3110 = vmatmul.mubr.f32.gmra.mxu0 %v2986
    %v3111 = vpop.f32.mrf.mxu0
    %v3112 = vadd.f32 %v2965, %v3111
    %v3113 = vpop.f32.mrf.mxu0
    %3114 = vmatprep.mubr.f32.mxu0 0.0
    %3115 = vmatmul.mubr.f32.gmra.mxu0 %v2989
    %v3116 = vpop.f32.mrf.mxu0
    %v3117 = vadd.f32 %v2965, %v3116
    %v3118 = vpop.f32.mrf.mxu0
    %3119 = vmatprep.mubr.f32.mxu0 0.0
    %3120 = vmatmul.mubr.f32.gmra.mxu0 %v2992
    %v3121 = vpop.f32.mrf.mxu0
    %v3122 = vadd.f32 %v2965, %v3121
    %v3123 = vpop.f32.mrf.mxu0
    %3124 = vmatprep.mubr.f32.mxu0 0.0
    %3125 = vmatmul.mubr.f32.gmra.mxu0 %v2995
    %v3126 = vpop.f32.mrf.mxu0
    %v3127 = vadd.f32 %v2965, %v3126
    %v3128 = vpop.f32.mrf.mxu0
    %3129 = vmatprep.mubr.f32.mxu0 0.0
    %3130 = vmatmul.mubr.f32.gmra.mxu0 %v2998
    %v3131 = vpop.f32.mrf.mxu0
    %v3132 = vadd.f32 %v2965, %v3131
    %v3133 = vpop.f32.mrf.mxu0
    %3134 = vmatprep.mubr.f32.mxu0 0.0
    %3135 = vmatmul.mubr.f32.gmra.mxu0 %v3001
    %v3136 = vpop.f32.mrf.mxu0
    %v3137 = vadd.f32 %v2965, %v3136
    %v3138 = vpop.f32.mrf.mxu0
    %3139 = vmatprep.mubr.f32.mxu0 0.0
    %3140 = vmatmul.mubr.f32.gmra.mxu0 %v3004
    %v3141 = vpop.f32.mrf.mxu0
    %v3142 = vadd.f32 %v2965, %v3141
    %v3143 = vpop.f32.mrf.mxu0
    %3144 = vmatprep.mubr.f32.mxu0 0.0
    %3145 = vmatmul.mubr.f32.gmra.mxu0 %v3007
    %v3146 = vpop.f32.mrf.mxu0
    %v3147 = vadd.f32 %v2965, %v3146
    %v3148 = vpop.f32.mrf.mxu0
    %3149 = vmatprep.mubr.f32.mxu0 0.0
    %3150 = vmatmul.mubr.f32.gmra.mxu0 %v3010
    %v3151 = vpop.f32.mrf.mxu0
    %v3152 = vadd.f32 %v2965, %v3151
    %v3153 = vpop.f32.mrf.mxu0
    %3154 = vmatprep.mubr.f32.mxu0 0.0
    %3155 = vmatmul.mubr.f32.gmra.mxu0 %v3013
    %v3156 = vpop.f32.mrf.mxu0
    %v3157 = vadd.f32 %v2965, %v3156
    %v3158 = vpop.f32.mrf.mxu0
    %3159 = vdwg.mxu0
    %s3160 = scalar_lea.vmem [#allocation11], 128
    %3161 = vst.msk [vmem:[%s3160] sm:$0xff] %vm1676, %v3082
    %3162 = vst.msk [vmem:[%s3160 + $0x8] sm:$0xff] %vm1676, %v3087
    %3163 = vst.msk [vmem:[%s3160 + $0x10] sm:$0xff] %vm1676, %v3092
    %3164 = vst.msk [vmem:[%s3160 + $0x18] sm:$0xff] %vm1676, %v3097
    %3165 = vst.msk [vmem:[%s3160 + $0x20] sm:$0xff] %vm1676, %v3102
    %3166 = vst.msk [vmem:[%s3160 + $0x28] sm:$0xff] %vm1676, %v3107
    %3167 = vst.msk [vmem:[%s3160 + $0x30] sm:$0xff] %vm1676, %v3112
    %3168 = vst.msk [vmem:[%s3160 + $0x38] sm:$0xff] %vm1676, %v3117
    %3169 = vst.msk [vmem:[%s3160 + $0x100] sm:$0xff] %vm1676, %v3122
    %3170 = vst.msk [vmem:[%s3160 + $0x108] sm:$0xff] %vm1676, %v3127
    %3171 = vst.msk [vmem:[%s3160 + $0x110] sm:$0xff] %vm1676, %v3132
    %3172 = vst.msk [vmem:[%s3160 + $0x118] sm:$0xff] %vm1676, %v3137
    %3173 = vst.msk [vmem:[%s3160 + $0x120] sm:$0xff] %vm1676, %v3142
    %3174 = vst.msk [vmem:[%s3160 + $0x128] sm:$0xff] %vm1676, %v3147
    %3175 = vst.msk [vmem:[%s3160 + $0x130] sm:$0xff] %vm1676, %v3152
    %3176 = vst.msk [vmem:[%s3160 + $0x138] sm:$0xff] %vm1676, %v3157
    %s3177 = scalar_lea.vmem [#allocation2], 384
    %v3178 = vld [vmem:[%s3177 + $0x7] sm:$0xff]
    %v3179 = vld [vmem:[%s3177 + $0xf] sm:$0xff]
    %v3180 = vld [vmem:[%s3177 + $0x27] sm:$0xff]
    %v3181 = vld [vmem:[%s3177 + $0x2f] sm:$0xff]
    %v3182 = vld [vmem:[%s3177 + $0x47] sm:$0xff]
    %v3183 = vld [vmem:[%s3177 + $0x4f] sm:$0xff]
    %v3184 = vld [vmem:[%s3177 + $0x67] sm:$0xff]
    %v3185 = vld [vmem:[%s3177 + $0x6f] sm:$0xff]
    %v3186 = vld [vmem:[%s3177 + $0x247] sm:$0xff]
    %v3187 = vld [vmem:[%s3177 + $0x24f] sm:$0xff]
    %v3188 = vld [vmem:[%s3177 + $0x267] sm:$0xff]
    %v3189 = vld [vmem:[%s3177 + $0x26f] sm:$0xff]
    %v3190 = vld [vmem:[%s3177 + $0x287] sm:$0xff]
    %v3191 = vld [vmem:[%s3177 + $0x28f] sm:$0xff]
    %v3192 = vld [vmem:[%s3177 + $0x2a7] sm:$0xff]
    %v3193 = vld [vmem:[%s3177 + $0x2af] sm:$0xff]
    %v3194 = vld [vmem:[#allocation8] sm:$0x1]
    %v3196 = vlaneseq
    %v3197 = vshrl.u32 %v3196, 7
    %v3198 = vsub.s32 0, %v3197
    %v3199 = vrot.slane %v3194, %v3198
    %v3201 = vmul.f32 %v3178, %v3199
    %v3202 = vmul.f32 %v3179, %v3199
    %v3203 = vmul.f32 %v3180, %v3199
    %v3204 = vmul.f32 %v3181, %v3199
    %v3205 = vmul.f32 %v3182, %v3199
    %v3206 = vmul.f32 %v3183, %v3199
    %v3207 = vmul.f32 %v3184, %v3199
    %v3208 = vmul.f32 %v3185, %v3199
    %v3209 = vmul.f32 %v3186, %v3199
    %v3210 = vmul.f32 %v3187, %v3199
    %v3211 = vmul.f32 %v3188, %v3199
    %v3212 = vmul.f32 %v3189, %v3199
    %v3213 = vmul.f32 %v3190, %v3199
    %v3214 = vmul.f32 %v3191, %v3199
    %v3215 = vmul.f32 %v3192, %v3199
    %v3216 = vmul.f32 %v3193, %v3199
    %v3217 = vld [vmem:[%s3177 + $0x8] sm:$0xff]
    %v3218 = vld [vmem:[%s3177 + $0x10] sm:$0xff]
    %v3219 = vld [vmem:[%s3177 + $0x28] sm:$0xff]
    %v3220 = vld [vmem:[%s3177 + $0x30] sm:$0xff]
    %v3221 = vld [vmem:[%s3177 + $0x48] sm:$0xff]
    %v3222 = vld [vmem:[%s3177 + $0x50] sm:$0xff]
    %v3223 = vld [vmem:[%s3177 + $0x68] sm:$0xff]
    %v3224 = vld [vmem:[%s3177 + $0x70] sm:$0xff]
    %v3225 = vld [vmem:[%s3177 + $0x248] sm:$0xff]
    %v3226 = vld [vmem:[%s3177 + $0x250] sm:$0xff]
    %v3227 = vld [vmem:[%s3177 + $0x268] sm:$0xff]
    %v3228 = vld [vmem:[%s3177 + $0x270] sm:$0xff]
    %v3229 = vld [vmem:[%s3177 + $0x288] sm:$0xff]
    %v3230 = vld [vmem:[%s3177 + $0x290] sm:$0xff]
    %v3231 = vld [vmem:[%s3177 + $0x2a8] sm:$0xff]
    %v3232 = vld [vmem:[%s3177 + $0x2b0] sm:$0xff]
    %v3233 = vld [vmem:[%s1000] sm:$0x1]
    %v3235 = vlaneseq
    %v3236 = vshrl.u32 %v3235, 7
    %v3237 = vsub.s32 0, %v3236
    %v3238 = vrot.slane %v3233, %v3237
    %v3240 = vmul.f32 %v3217, %v3238
    %v3241 = vmul.f32 %v3218, %v3238
    %v3242 = vmul.f32 %v3219, %v3238
    %v3243 = vmul.f32 %v3220, %v3238
    %v3244 = vmul.f32 %v3221, %v3238
    %v3245 = vmul.f32 %v3222, %v3238
    %v3246 = vmul.f32 %v3223, %v3238
    %v3247 = vmul.f32 %v3224, %v3238
    %v3248 = vmul.f32 %v3225, %v3238
    %v3249 = vmul.f32 %v3226, %v3238
    %v3250 = vmul.f32 %v3227, %v3238
    %v3251 = vmul.f32 %v3228, %v3238
    %v3252 = vmul.f32 %v3229, %v3238
    %v3253 = vmul.f32 %v3230, %v3238
    %v3254 = vmul.f32 %v3231, %v3238
    %v3255 = vmul.f32 %v3232, %v3238
    %v3256 = vadd.f32 %v3201, %v3240
    %v3257 = vadd.f32 %v3202, %v3241
    %v3258 = vadd.f32 %v3203, %v3242
    %v3259 = vadd.f32 %v3204, %v3243
    %v3260 = vadd.f32 %v3205, %v3244
    %v3261 = vadd.f32 %v3206, %v3245
    %v3262 = vadd.f32 %v3207, %v3246
    %v3263 = vadd.f32 %v3208, %v3247
    %v3264 = vadd.f32 %v3209, %v3248
    %v3265 = vadd.f32 %v3210, %v3249
    %v3266 = vadd.f32 %v3211, %v3250
    %v3267 = vadd.f32 %v3212, %v3251
    %v3268 = vadd.f32 %v3213, %v3252
    %v3269 = vadd.f32 %v3214, %v3253
    %v3270 = vadd.f32 %v3215, %v3254
    %v3271 = vadd.f32 %v3216, %v3255
    %v3272 = vld [vmem:[%s3177 + $0x9] sm:$0xff]
    %v3273 = vld [vmem:[%s3177 + $0x11] sm:$0xff]
    %v3274 = vld [vmem:[%s3177 + $0x29] sm:$0xff]
    %v3275 = vld [vmem:[%s3177 + $0x31] sm:$0xff]
    %v3276 = vld [vmem:[%s3177 + $0x49] sm:$0xff]
    %v3277 = vld [vmem:[%s3177 + $0x51] sm:$0xff]
    %v3278 = vld [vmem:[%s3177 + $0x69] sm:$0xff]
    %v3279 = vld [vmem:[%s3177 + $0x71] sm:$0xff]
    %v3280 = vld [vmem:[%s3177 + $0x249] sm:$0xff]
    %v3281 = vld [vmem:[%s3177 + $0x251] sm:$0xff]
    %v3282 = vld [vmem:[%s3177 + $0x269] sm:$0xff]
    %v3283 = vld [vmem:[%s3177 + $0x271] sm:$0xff]
    %v3284 = vld [vmem:[%s3177 + $0x289] sm:$0xff]
    %v3285 = vld [vmem:[%s3177 + $0x291] sm:$0xff]
    %v3286 = vld [vmem:[%s3177 + $0x2a9] sm:$0xff]
    %v3287 = vld [vmem:[%s3177 + $0x2b1] sm:$0xff]
    %v3288 = vld [vmem:[%s1056] sm:$0x1]
    %v3290 = vlaneseq
    %v3291 = vshrl.u32 %v3290, 7
    %v3292 = vsub.s32 0, %v3291
    %v3293 = vrot.slane %v3288, %v3292
    %v3295 = vmul.f32 %v3272, %v3293
    %v3296 = vmul.f32 %v3273, %v3293
    %v3297 = vmul.f32 %v3274, %v3293
    %v3298 = vmul.f32 %v3275, %v3293
    %v3299 = vmul.f32 %v3276, %v3293
    %v3300 = vmul.f32 %v3277, %v3293
    %v3301 = vmul.f32 %v3278, %v3293
    %v3302 = vmul.f32 %v3279, %v3293
    %v3303 = vmul.f32 %v3280, %v3293
    %v3304 = vmul.f32 %v3281, %v3293
    %v3305 = vmul.f32 %v3282, %v3293
    %v3306 = vmul.f32 %v3283, %v3293
    %v3307 = vmul.f32 %v3284, %v3293
    %v3308 = vmul.f32 %v3285, %v3293
    %v3309 = vmul.f32 %v3286, %v3293
    %v3310 = vmul.f32 %v3287, %v3293
    %v3311 = vadd.f32 %v3256, %v3295
    %v3312 = vadd.f32 %v3257, %v3296
    %v3313 = vadd.f32 %v3258, %v3297
    %v3314 = vadd.f32 %v3259, %v3298
    %v3315 = vadd.f32 %v3260, %v3299
    %v3316 = vadd.f32 %v3261, %v3300
    %v3317 = vadd.f32 %v3262, %v3301
    %v3318 = vadd.f32 %v3263, %v3302
    %v3319 = vadd.f32 %v3264, %v3303
    %v3320 = vadd.f32 %v3265, %v3304
    %v3321 = vadd.f32 %v3266, %v3305
    %v3322 = vadd.f32 %v3267, %v3306
    %v3323 = vadd.f32 %v3268, %v3307
    %v3324 = vadd.f32 %v3269, %v3308
    %v3325 = vadd.f32 %v3270, %v3309
    %v3326 = vadd.f32 %v3271, %v3310
    %s3327 = scalar_lea.vmem [#allocation2], 416
    %v3328 = vld [vmem:[%s3327 + $0x7] sm:$0xff]
    %v3329 = vld [vmem:[%s3327 + $0xf] sm:$0xff]
    %v3330 = vld [vmem:[%s3327 + $0x27] sm:$0xff]
    %v3331 = vld [vmem:[%s3327 + $0x2f] sm:$0xff]
    %v3332 = vld [vmem:[%s3327 + $0x47] sm:$0xff]
    %v3333 = vld [vmem:[%s3327 + $0x4f] sm:$0xff]
    %v3334 = vld [vmem:[%s3327 + $0x67] sm:$0xff]
    %v3335 = vld [vmem:[%s3327 + $0x6f] sm:$0xff]
    %v3336 = vld [vmem:[%s3327 + $0x247] sm:$0xff]
    %v3337 = vld [vmem:[%s3327 + $0x24f] sm:$0xff]
    %v3338 = vld [vmem:[%s3327 + $0x267] sm:$0xff]
    %v3339 = vld [vmem:[%s3327 + $0x26f] sm:$0xff]
    %v3340 = vld [vmem:[%s3327 + $0x287] sm:$0xff]
    %v3341 = vld [vmem:[%s3327 + $0x28f] sm:$0xff]
    %v3342 = vld [vmem:[%s3327 + $0x2a7] sm:$0xff]
    %v3343 = vld [vmem:[%s3327 + $0x2af] sm:$0xff]
    %v3344 = vld [vmem:[%s1112] sm:$0x1]
    %v3346 = vlaneseq
    %v3347 = vshrl.u32 %v3346, 7
    %v3348 = vsub.s32 0, %v3347
    %v3349 = vrot.slane %v3344, %v3348
    %v3351 = vmul.f32 %v3328, %v3349
    %v3352 = vmul.f32 %v3329, %v3349
    %v3353 = vmul.f32 %v3330, %v3349
    %v3354 = vmul.f32 %v3331, %v3349
    %v3355 = vmul.f32 %v3332, %v3349
    %v3356 = vmul.f32 %v3333, %v3349
    %v3357 = vmul.f32 %v3334, %v3349
    %v3358 = vmul.f32 %v3335, %v3349
    %v3359 = vmul.f32 %v3336, %v3349
    %v3360 = vmul.f32 %v3337, %v3349
    %v3361 = vmul.f32 %v3338, %v3349
    %v3362 = vmul.f32 %v3339, %v3349
    %v3363 = vmul.f32 %v3340, %v3349
    %v3364 = vmul.f32 %v3341, %v3349
    %v3365 = vmul.f32 %v3342, %v3349
    %v3366 = vmul.f32 %v3343, %v3349
    %v3367 = vadd.f32 %v3311, %v3351
    %v3368 = vadd.f32 %v3312, %v3352
    %v3369 = vadd.f32 %v3313, %v3353
    %v3370 = vadd.f32 %v3314, %v3354
    %v3371 = vadd.f32 %v3315, %v3355
    %v3372 = vadd.f32 %v3316, %v3356
    %v3373 = vadd.f32 %v3317, %v3357
    %v3374 = vadd.f32 %v3318, %v3358
    %v3375 = vadd.f32 %v3319, %v3359
    %v3376 = vadd.f32 %v3320, %v3360
    %v3377 = vadd.f32 %v3321, %v3361
    %v3378 = vadd.f32 %v3322, %v3362
    %v3379 = vadd.f32 %v3323, %v3363
    %v3380 = vadd.f32 %v3324, %v3364
    %v3381 = vadd.f32 %v3325, %v3365
    %v3382 = vadd.f32 %v3326, %v3366
    %v3383 = vld [vmem:[%s3327 + $0x8] sm:$0xff]
    %v3384 = vld [vmem:[%s3327 + $0x10] sm:$0xff]
    %v3385 = vld [vmem:[%s3327 + $0x28] sm:$0xff]
    %v3386 = vld [vmem:[%s3327 + $0x30] sm:$0xff]
    %v3387 = vld [vmem:[%s3327 + $0x48] sm:$0xff]
    %v3388 = vld [vmem:[%s3327 + $0x50] sm:$0xff]
    %v3389 = vld [vmem:[%s3327 + $0x68] sm:$0xff]
    %v3390 = vld [vmem:[%s3327 + $0x70] sm:$0xff]
    %v3391 = vld [vmem:[%s3327 + $0x248] sm:$0xff]
    %v3392 = vld [vmem:[%s3327 + $0x250] sm:$0xff]
    %v3393 = vld [vmem:[%s3327 + $0x268] sm:$0xff]
    %v3394 = vld [vmem:[%s3327 + $0x270] sm:$0xff]
    %v3395 = vld [vmem:[%s3327 + $0x288] sm:$0xff]
    %v3396 = vld [vmem:[%s3327 + $0x290] sm:$0xff]
    %v3397 = vld [vmem:[%s3327 + $0x2a8] sm:$0xff]
    %v3398 = vld [vmem:[%s3327 + $0x2b0] sm:$0xff]
    %v3399 = vld [vmem:[%s1168] sm:$0x1]
    %v3401 = vlaneseq
    %v3402 = vshrl.u32 %v3401, 7
    %v3403 = vsub.s32 0, %v3402
    %v3404 = vrot.slane %v3399, %v3403
    %v3406 = vmul.f32 %v3383, %v3404
    %v3407 = vmul.f32 %v3384, %v3404
    %v3408 = vmul.f32 %v3385, %v3404
    %v3409 = vmul.f32 %v3386, %v3404
    %v3410 = vmul.f32 %v3387, %v3404
    %v3411 = vmul.f32 %v3388, %v3404
    %v3412 = vmul.f32 %v3389, %v3404
    %v3413 = vmul.f32 %v3390, %v3404
    %v3414 = vmul.f32 %v3391, %v3404
    %v3415 = vmul.f32 %v3392, %v3404
    %v3416 = vmul.f32 %v3393, %v3404
    %v3417 = vmul.f32 %v3394, %v3404
    %v3418 = vmul.f32 %v3395, %v3404
    %v3419 = vmul.f32 %v3396, %v3404
    %v3420 = vmul.f32 %v3397, %v3404
    %v3421 = vmul.f32 %v3398, %v3404
    %v3422 = vadd.f32 %v3367, %v3406
    %v3423 = vadd.f32 %v3368, %v3407
    %v3424 = vadd.f32 %v3369, %v3408
    %v3425 = vadd.f32 %v3370, %v3409
    %v3426 = vadd.f32 %v3371, %v3410
    %v3427 = vadd.f32 %v3372, %v3411
    %v3428 = vadd.f32 %v3373, %v3412
    %v3429 = vadd.f32 %v3374, %v3413
    %v3430 = vadd.f32 %v3375, %v3414
    %v3431 = vadd.f32 %v3376, %v3415
    %v3432 = vadd.f32 %v3377, %v3416
    %v3433 = vadd.f32 %v3378, %v3417
    %v3434 = vadd.f32 %v3379, %v3418
    %v3435 = vadd.f32 %v3380, %v3419
    %v3436 = vadd.f32 %v3381, %v3420
    %v3437 = vadd.f32 %v3382, %v3421
    %v3438 = vld [vmem:[%s3327 + $0x9] sm:$0xff]
    %v3439 = vld [vmem:[%s3327 + $0x11] sm:$0xff]
    %v3440 = vld [vmem:[%s3327 + $0x29] sm:$0xff]
    %v3441 = vld [vmem:[%s3327 + $0x31] sm:$0xff]
    %v3442 = vld [vmem:[%s3327 + $0x49] sm:$0xff]
    %v3443 = vld [vmem:[%s3327 + $0x51] sm:$0xff]
    %v3444 = vld [vmem:[%s3327 + $0x69] sm:$0xff]
    %v3445 = vld [vmem:[%s3327 + $0x71] sm:$0xff]
    %v3446 = vld [vmem:[%s3327 + $0x249] sm:$0xff]
    %v3447 = vld [vmem:[%s3327 + $0x251] sm:$0xff]
    %v3448 = vld [vmem:[%s3327 + $0x269] sm:$0xff]
    %v3449 = vld [vmem:[%s3327 + $0x271] sm:$0xff]
    %v3450 = vld [vmem:[%s3327 + $0x289] sm:$0xff]
    %v3451 = vld [vmem:[%s3327 + $0x291] sm:$0xff]
    %v3452 = vld [vmem:[%s3327 + $0x2a9] sm:$0xff]
    %v3453 = vld [vmem:[%s3327 + $0x2b1] sm:$0xff]
    %v3454 = vld [vmem:[%s1224] sm:$0x1]
    %v3456 = vlaneseq
    %v3457 = vshrl.u32 %v3456, 7
    %v3458 = vsub.s32 0, %v3457
    %v3459 = vrot.slane %v3454, %v3458
    %v3461 = vmul.f32 %v3438, %v3459
    %v3462 = vmul.f32 %v3439, %v3459
    %v3463 = vmul.f32 %v3440, %v3459
    %v3464 = vmul.f32 %v3441, %v3459
    %v3465 = vmul.f32 %v3442, %v3459
    %v3466 = vmul.f32 %v3443, %v3459
    %v3467 = vmul.f32 %v3444, %v3459
    %v3468 = vmul.f32 %v3445, %v3459
    %v3469 = vmul.f32 %v3446, %v3459
    %v3470 = vmul.f32 %v3447, %v3459
    %v3471 = vmul.f32 %v3448, %v3459
    %v3472 = vmul.f32 %v3449, %v3459
    %v3473 = vmul.f32 %v3450, %v3459
    %v3474 = vmul.f32 %v3451, %v3459
    %v3475 = vmul.f32 %v3452, %v3459
    %v3476 = vmul.f32 %v3453, %v3459
    %v3477 = vadd.f32 %v3422, %v3461
    %v3478 = vadd.f32 %v3423, %v3462
    %v3479 = vadd.f32 %v3424, %v3463
    %v3480 = vadd.f32 %v3425, %v3464
    %v3481 = vadd.f32 %v3426, %v3465
    %v3482 = vadd.f32 %v3427, %v3466
    %v3483 = vadd.f32 %v3428, %v3467
    %v3484 = vadd.f32 %v3429, %v3468
    %v3485 = vadd.f32 %v3430, %v3469
    %v3486 = vadd.f32 %v3431, %v3470
    %v3487 = vadd.f32 %v3432, %v3471
    %v3488 = vadd.f32 %v3433, %v3472
    %v3489 = vadd.f32 %v3434, %v3473
    %v3490 = vadd.f32 %v3435, %v3474
    %v3491 = vadd.f32 %v3436, %v3475
    %v3492 = vadd.f32 %v3437, %v3476
    %s3493 = scalar_lea.vmem [#allocation2], 448
    %v3494 = vld [vmem:[%s3493 + $0x7] sm:$0xff]
    %v3495 = vld [vmem:[%s3493 + $0xf] sm:$0xff]
    %v3496 = vld [vmem:[%s3493 + $0x27] sm:$0xff]
    %v3497 = vld [vmem:[%s3493 + $0x2f] sm:$0xff]
    %v3498 = vld [vmem:[%s3493 + $0x47] sm:$0xff]
    %v3499 = vld [vmem:[%s3493 + $0x4f] sm:$0xff]
    %v3500 = vld [vmem:[%s3493 + $0x67] sm:$0xff]
    %v3501 = vld [vmem:[%s3493 + $0x6f] sm:$0xff]
    %v3502 = vld [vmem:[%s3493 + $0x247] sm:$0xff]
    %v3503 = vld [vmem:[%s3493 + $0x24f] sm:$0xff]
    %v3504 = vld [vmem:[%s3493 + $0x267] sm:$0xff]
    %v3505 = vld [vmem:[%s3493 + $0x26f] sm:$0xff]
    %v3506 = vld [vmem:[%s3493 + $0x287] sm:$0xff]
    %v3507 = vld [vmem:[%s3493 + $0x28f] sm:$0xff]
    %v3508 = vld [vmem:[%s3493 + $0x2a7] sm:$0xff]
    %v3509 = vld [vmem:[%s3493 + $0x2af] sm:$0xff]
    %v3510 = vld [vmem:[%s1281] sm:$0x1]
    %v3512 = vlaneseq
    %v3513 = vshrl.u32 %v3512, 7
    %v3514 = vsub.s32 0, %v3513
    %v3515 = vrot.slane %v3510, %v3514
    %v3517 = vmul.f32 %v3494, %v3515
    %v3518 = vmul.f32 %v3495, %v3515
    %v3519 = vmul.f32 %v3496, %v3515
    %v3520 = vmul.f32 %v3497, %v3515
    %v3521 = vmul.f32 %v3498, %v3515
    %v3522 = vmul.f32 %v3499, %v3515
    %v3523 = vmul.f32 %v3500, %v3515
    %v3524 = vmul.f32 %v3501, %v3515
    %v3525 = vmul.f32 %v3502, %v3515
    %v3526 = vmul.f32 %v3503, %v3515
    %v3527 = vmul.f32 %v3504, %v3515
    %v3528 = vmul.f32 %v3505, %v3515
    %v3529 = vmul.f32 %v3506, %v3515
    %v3530 = vmul.f32 %v3507, %v3515
    %v3531 = vmul.f32 %v3508, %v3515
    %v3532 = vmul.f32 %v3509, %v3515
    %v3533 = vadd.f32 %v3477, %v3517
    %v3534 = vadd.f32 %v3478, %v3518
    %v3535 = vadd.f32 %v3479, %v3519
    %v3536 = vadd.f32 %v3480, %v3520
    %v3537 = vadd.f32 %v3481, %v3521
    %v3538 = vadd.f32 %v3482, %v3522
    %v3539 = vadd.f32 %v3483, %v3523
    %v3540 = vadd.f32 %v3484, %v3524
    %v3541 = vadd.f32 %v3485, %v3525
    %v3542 = vadd.f32 %v3486, %v3526
    %v3543 = vadd.f32 %v3487, %v3527
    %v3544 = vadd.f32 %v3488, %v3528
    %v3545 = vadd.f32 %v3489, %v3529
    %v3546 = vadd.f32 %v3490, %v3530
    %v3547 = vadd.f32 %v3491, %v3531
    %v3548 = vadd.f32 %v3492, %v3532
    %v3549 = vld [vmem:[%s3493 + $0x8] sm:$0xff]
    %v3550 = vld [vmem:[%s3493 + $0x10] sm:$0xff]
    %v3551 = vld [vmem:[%s3493 + $0x28] sm:$0xff]
    %v3552 = vld [vmem:[%s3493 + $0x30] sm:$0xff]
    %v3553 = vld [vmem:[%s3493 + $0x48] sm:$0xff]
    %v3554 = vld [vmem:[%s3493 + $0x50] sm:$0xff]
    %v3555 = vld [vmem:[%s3493 + $0x68] sm:$0xff]
    %v3556 = vld [vmem:[%s3493 + $0x70] sm:$0xff]
    %v3557 = vld [vmem:[%s3493 + $0x248] sm:$0xff]
    %v3558 = vld [vmem:[%s3493 + $0x250] sm:$0xff]
    %v3559 = vld [vmem:[%s3493 + $0x268] sm:$0xff]
    %v3560 = vld [vmem:[%s3493 + $0x270] sm:$0xff]
    %v3561 = vld [vmem:[%s3493 + $0x288] sm:$0xff]
    %v3562 = vld [vmem:[%s3493 + $0x290] sm:$0xff]
    %v3563 = vld [vmem:[%s3493 + $0x2a8] sm:$0xff]
    %v3564 = vld [vmem:[%s3493 + $0x2b0] sm:$0xff]
    %v3565 = vld [vmem:[%s1337] sm:$0x1]
    %v3567 = vlaneseq
    %v3568 = vshrl.u32 %v3567, 7
    %v3569 = vsub.s32 0, %v3568
    %v3570 = vrot.slane %v3565, %v3569
    %v3572 = vmul.f32 %v3549, %v3570
    %v3573 = vmul.f32 %v3550, %v3570
    %v3574 = vmul.f32 %v3551, %v3570
    %v3575 = vmul.f32 %v3552, %v3570
    %v3576 = vmul.f32 %v3553, %v3570
    %v3577 = vmul.f32 %v3554, %v3570
    %v3578 = vmul.f32 %v3555, %v3570
    %v3579 = vmul.f32 %v3556, %v3570
    %v3580 = vmul.f32 %v3557, %v3570
    %v3581 = vmul.f32 %v3558, %v3570
    %v3582 = vmul.f32 %v3559, %v3570
    %v3583 = vmul.f32 %v3560, %v3570
    %v3584 = vmul.f32 %v3561, %v3570
    %v3585 = vmul.f32 %v3562, %v3570
    %v3586 = vmul.f32 %v3563, %v3570
    %v3587 = vmul.f32 %v3564, %v3570
    %v3588 = vadd.f32 %v3533, %v3572
    %v3589 = vadd.f32 %v3534, %v3573
    %v3590 = vadd.f32 %v3535, %v3574
    %v3591 = vadd.f32 %v3536, %v3575
    %v3592 = vadd.f32 %v3537, %v3576
    %v3593 = vadd.f32 %v3538, %v3577
    %v3594 = vadd.f32 %v3539, %v3578
    %v3595 = vadd.f32 %v3540, %v3579
    %v3596 = vadd.f32 %v3541, %v3580
    %v3597 = vadd.f32 %v3542, %v3581
    %v3598 = vadd.f32 %v3543, %v3582
    %v3599 = vadd.f32 %v3544, %v3583
    %v3600 = vadd.f32 %v3545, %v3584
    %v3601 = vadd.f32 %v3546, %v3585
    %v3602 = vadd.f32 %v3547, %v3586
    %v3603 = vadd.f32 %v3548, %v3587
    %v3604 = vld [vmem:[%s3493 + $0x9] sm:$0xff]
    %v3605 = vld [vmem:[%s3493 + $0x11] sm:$0xff]
    %v3606 = vld [vmem:[%s3493 + $0x29] sm:$0xff]
    %v3607 = vld [vmem:[%s3493 + $0x31] sm:$0xff]
    %v3608 = vld [vmem:[%s3493 + $0x49] sm:$0xff]
    %v3609 = vld [vmem:[%s3493 + $0x51] sm:$0xff]
    %v3610 = vld [vmem:[%s3493 + $0x69] sm:$0xff]
    %v3611 = vld [vmem:[%s3493 + $0x71] sm:$0xff]
    %v3612 = vld [vmem:[%s3493 + $0x249] sm:$0xff]
    %v3613 = vld [vmem:[%s3493 + $0x251] sm:$0xff]
    %v3614 = vld [vmem:[%s3493 + $0x269] sm:$0xff]
    %v3615 = vld [vmem:[%s3493 + $0x271] sm:$0xff]
    %v3616 = vld [vmem:[%s3493 + $0x289] sm:$0xff]
    %v3617 = vld [vmem:[%s3493 + $0x291] sm:$0xff]
    %v3618 = vld [vmem:[%s3493 + $0x2a9] sm:$0xff]
    %v3619 = vld [vmem:[%s3493 + $0x2b1] sm:$0xff]
    %v3620 = vld [vmem:[%s1393] sm:$0x1]
    %v3622 = vlaneseq
    %v3623 = vshrl.u32 %v3622, 7
    %v3624 = vsub.s32 0, %v3623
    %v3625 = vrot.slane %v3620, %v3624
    %v3627 = vmul.f32 %v3604, %v3625
    %v3628 = vmul.f32 %v3605, %v3625
    %v3629 = vmul.f32 %v3606, %v3625
    %v3630 = vmul.f32 %v3607, %v3625
    %v3631 = vmul.f32 %v3608, %v3625
    %v3632 = vmul.f32 %v3609, %v3625
    %v3633 = vmul.f32 %v3610, %v3625
    %v3634 = vmul.f32 %v3611, %v3625
    %v3635 = vmul.f32 %v3612, %v3625
    %v3636 = vmul.f32 %v3613, %v3625
    %v3637 = vmul.f32 %v3614, %v3625
    %v3638 = vmul.f32 %v3615, %v3625
    %v3639 = vmul.f32 %v3616, %v3625
    %v3640 = vmul.f32 %v3617, %v3625
    %v3641 = vmul.f32 %v3618, %v3625
    %v3642 = vmul.f32 %v3619, %v3625
    %v3643 = vadd.f32 %v3588, %v3627
    %v3644 = vadd.f32 %v3589, %v3628
    %v3645 = vadd.f32 %v3590, %v3629
    %v3646 = vadd.f32 %v3591, %v3630
    %v3647 = vadd.f32 %v3592, %v3631
    %v3648 = vadd.f32 %v3593, %v3632
    %v3649 = vadd.f32 %v3594, %v3633
    %v3650 = vadd.f32 %v3595, %v3634
    %v3651 = vadd.f32 %v3596, %v3635
    %v3652 = vadd.f32 %v3597, %v3636
    %v3653 = vadd.f32 %v3598, %v3637
    %v3654 = vadd.f32 %v3599, %v3638
    %v3655 = vadd.f32 %v3600, %v3639
    %v3656 = vadd.f32 %v3601, %v3640
    %v3657 = vadd.f32 %v3602, %v3641
    %v3658 = vadd.f32 %v3603, %v3642
    %v3659 = vld [vmem:[%s4] sm:$0x1]
    %v3661 = vlaneseq
    %v3662 = vshrl.u32 %v3661, 7
    %v3663 = vsub.s32 0, %v3662
    %v3664 = vrot.slane %v3659, %v3663
    %v3666 = vadd.f32 %v3643, %v3664
    %v3667 = vadd.f32 %v3644, %v3664
    %v3668 = vadd.f32 %v3645, %v3664
    %v3669 = vadd.f32 %v3646, %v3664
    %v3670 = vadd.f32 %v3647, %v3664
    %v3671 = vadd.f32 %v3648, %v3664
    %v3672 = vadd.f32 %v3649, %v3664
    %v3673 = vadd.f32 %v3650, %v3664
    %v3674 = vadd.f32 %v3651, %v3664
    %v3675 = vadd.f32 %v3652, %v3664
    %v3676 = vadd.f32 %v3653, %v3664
    %v3677 = vadd.f32 %v3654, %v3664
    %v3678 = vadd.f32 %v3655, %v3664
    %v3679 = vadd.f32 %v3656, %v3664
    %v3680 = vadd.f32 %v3657, %v3664
    %v3681 = vadd.f32 %v3658, %v3664
    %v3682 = vmax.f32 %v3666, 0.0
    %v3683 = vmax.f32 %v3667, 0.0
    %v3684 = vmax.f32 %v3668, 0.0
    %v3685 = vmax.f32 %v3669, 0.0
    %v3686 = vmax.f32 %v3670, 0.0
    %v3687 = vmax.f32 %v3671, 0.0
    %v3688 = vmax.f32 %v3672, 0.0
    %v3689 = vmax.f32 %v3673, 0.0
    %v3690 = vmax.f32 %v3674, 0.0
    %v3691 = vmax.f32 %v3675, 0.0
    %v3692 = vmax.f32 %v3676, 0.0
    %v3693 = vmax.f32 %v3677, 0.0
    %v3694 = vmax.f32 %v3678, 0.0
    %v3695 = vmax.f32 %v3679, 0.0
    %v3696 = vmax.f32 %v3680, 0.0
    %v3697 = vmax.f32 %v3681, 0.0
    %v3698 = vld [vmem:[#allocation9] sm:$0xff]
    %v3699 = vld [vmem:[#allocation9 + $0x8] sm:$0xff]
    %v3700 = vld [vmem:[#allocation9 + $0x10] sm:$0xff]
    %v3701 = vld [vmem:[#allocation9 + $0x18] sm:$0xff]
    %v3702 = vld [vmem:[%s6] sm:$0x1]
    %v3704 = vlaneseq
    %v3705 = vshrl.u32 %v3704, 7
    %v3706 = vsub.s32 0, %v3705
    %v3707 = vrot.slane %v3702, %v3706
    %v3710 = vsel %vm797, %v3682, 0
    %v3713 = vsel %vm797, %v3683, 0
    %v3716 = vsel %vm797, %v3684, 0
    %v3719 = vsel %vm797, %v3685, 0
    %v3722 = vsel %vm797, %v3686, 0
    %v3725 = vsel %vm797, %v3687, 0
    %v3728 = vsel %vm797, %v3688, 0
    %v3731 = vsel %vm797, %v3689, 0
    %v3734 = vsel %vm797, %v3690, 0
    %v3737 = vsel %vm797, %v3691, 0
    %v3740 = vsel %vm797, %v3692, 0
    %v3743 = vsel %vm797, %v3693, 0
    %v3746 = vsel %vm797, %v3694, 0
    %v3749 = vsel %vm797, %v3695, 0
    %v3752 = vsel %vm797, %v3696, 0
    %v3755 = vsel %vm797, %v3697, 0
    %3757 = vmatprep.subr.mxu0 0.0
    %3758 = vmatpush1.msra.mxu0 0.0
    %3759 = vmatprep.subr.mxu0 0.0
    %3760 = vmatpush1.msra.mxu0 0.0
    %3761 = vmatprep.subr.mxu0 0.0
    %3762 = vmatpush1.msra.mxu0 0.0
    %3763 = vmatprep.subr.mxu0 0.0
    %3764 = vmatpush1.msra.mxu0 0.0
    %3765 = vmatprep.subr.mxu0 0.0
    %3766 = vmatpush1.msra.mxu0 0.0
    %3767 = vmatprep.subr.mxu0 0.0
    %3768 = vmatpush1.msra.mxu0 0.0
    %3769 = vmatprep.subr.mxu0 0.0
    %3770 = vmatpush1.msra.mxu0 0.0
    %3771 = vmatprep.subr.mxu0 0.0
    %3772 = vmatpush1.msra.mxu0 0.0
    %3773 = vmatprep.subr.mxu0 0.0
    %3774 = vmatpush1.msra.mxu0 0.0
    %3775 = vmatprep.subr.mxu0 0.0
    %3776 = vmatpush1.msra.mxu0 0.0
    %3777 = vmatprep.subr.mxu0 0.0
    %3778 = vmatpush1.msra.mxu0 0.0
    %3779 = vmatprep.subr.mxu0 0.0
    %3780 = vmatpush1.msra.mxu0 0.0
    %3781 = vmatprep.subr.mxu0 0.0
    %3782 = vmatpush1.msra.mxu0 %v3701
    %3783 = vmatprep.subr.mxu0 0.0
    %3784 = vmatpush1.msra.mxu0 %v3700
    %3785 = vmatprep.subr.mxu0 0.0
    %3786 = vmatpush1.msra.mxu0 %v3699
    %3787 = vmatprep.subr.mxu0 0.0
    %3788 = vmatpush1.msra.mxu0 %v3698
    %3789 = vmatprep.subr.mxu0 0.0
    %3790 = vmatpush2.msra.mxu0 0.0
    %3791 = vmatprep.subr.mxu0 0.0
    %3792 = vmatpush2.msra.mxu0 0.0
    %3793 = vmatprep.subr.mxu0 0.0
    %3794 = vmatpush2.msra.mxu0 0.0
    %3795 = vmatprep.subr.mxu0 0.0
    %3796 = vmatpush2.msra.mxu0 0.0
    %3797 = vmatprep.subr.mxu0 0.0
    %3798 = vmatpush2.msra.mxu0 0.0
    %3799 = vmatprep.subr.mxu0 0.0
    %3800 = vmatpush2.msra.mxu0 0.0
    %3801 = vmatprep.subr.mxu0 0.0
    %3802 = vmatpush2.msra.mxu0 0.0
    %3803 = vmatprep.subr.mxu0 0.0
    %3804 = vmatpush2.msra.mxu0 0.0
    %3805 = vmatprep.subr.mxu0 0.0
    %3806 = vmatpush2.msra.mxu0 0.0
    %3807 = vmatprep.subr.mxu0 0.0
    %3808 = vmatpush2.msra.mxu0 0.0
    %3809 = vmatprep.subr.mxu0 0.0
    %3810 = vmatpush2.msra.mxu0 0.0
    %3811 = vmatprep.subr.mxu0 0.0
    %3812 = vmatpush2.msra.mxu0 0.0
    %3813 = vmatprep.subr.mxu0 0.0
    %3814 = vmatpush2.msra.mxu0 0.0
    %3815 = vmatprep.subr.mxu0 0.0
    %3816 = vmatpush2.msra.mxu0 0.0
    %3817 = vmatprep.subr.mxu0 0.0
    %3818 = vmatpush2.msra.mxu0 0.0
    %3819 = vmatprep.subr.mxu0 0.0
    %3820 = vmatpush2.msra.mxu0 0.0
    %3821 = vmatprep.mubr.f32.mxu0 0.0
    %3822 = vmatmul.mubr.f32.gmra.mxu0 %v3710
    %v3823 = vpop.f32.mrf.mxu0
    %v3824 = vadd.f32 %v3707, %v3823
    %v3825 = vpop.f32.mrf.mxu0
    %3826 = vmatprep.mubr.f32.mxu0 0.0
    %3827 = vmatmul.mubr.f32.gmra.mxu0 %v3713
    %v3828 = vpop.f32.mrf.mxu0
    %v3829 = vadd.f32 %v3707, %v3828
    %v3830 = vpop.f32.mrf.mxu0
    %3831 = vmatprep.mubr.f32.mxu0 0.0
    %3832 = vmatmul.mubr.f32.gmra.mxu0 %v3716
    %v3833 = vpop.f32.mrf.mxu0
    %v3834 = vadd.f32 %v3707, %v3833
    %v3835 = vpop.f32.mrf.mxu0
    %3836 = vmatprep.mubr.f32.mxu0 0.0
    %3837 = vmatmul.mubr.f32.gmra.mxu0 %v3719
    %v3838 = vpop.f32.mrf.mxu0
    %v3839 = vadd.f32 %v3707, %v3838
    %v3840 = vpop.f32.mrf.mxu0
    %3841 = vmatprep.mubr.f32.mxu0 0.0
    %3842 = vmatmul.mubr.f32.gmra.mxu0 %v3722
    %v3843 = vpop.f32.mrf.mxu0
    %v3844 = vadd.f32 %v3707, %v3843
    %v3845 = vpop.f32.mrf.mxu0
    %3846 = vmatprep.mubr.f32.mxu0 0.0
    %3847 = vmatmul.mubr.f32.gmra.mxu0 %v3725
    %v3848 = vpop.f32.mrf.mxu0
    %v3849 = vadd.f32 %v3707, %v3848
    %v3850 = vpop.f32.mrf.mxu0
    %3851 = vmatprep.mubr.f32.mxu0 0.0
    %3852 = vmatmul.mubr.f32.gmra.mxu0 %v3728
    %v3853 = vpop.f32.mrf.mxu0
    %v3854 = vadd.f32 %v3707, %v3853
    %v3855 = vpop.f32.mrf.mxu0
    %3856 = vmatprep.mubr.f32.mxu0 0.0
    %3857 = vmatmul.mubr.f32.gmra.mxu0 %v3731
    %v3858 = vpop.f32.mrf.mxu0
    %v3859 = vadd.f32 %v3707, %v3858
    %v3860 = vpop.f32.mrf.mxu0
    %3861 = vmatprep.mubr.f32.mxu0 0.0
    %3862 = vmatmul.mubr.f32.gmra.mxu0 %v3734
    %v3863 = vpop.f32.mrf.mxu0
    %v3864 = vadd.f32 %v3707, %v3863
    %v3865 = vpop.f32.mrf.mxu0
    %3866 = vmatprep.mubr.f32.mxu0 0.0
    %3867 = vmatmul.mubr.f32.gmra.mxu0 %v3737
    %v3868 = vpop.f32.mrf.mxu0
    %v3869 = vadd.f32 %v3707, %v3868
    %v3870 = vpop.f32.mrf.mxu0
    %3871 = vmatprep.mubr.f32.mxu0 0.0
    %3872 = vmatmul.mubr.f32.gmra.mxu0 %v3740
    %v3873 = vpop.f32.mrf.mxu0
    %v3874 = vadd.f32 %v3707, %v3873
    %v3875 = vpop.f32.mrf.mxu0
    %3876 = vmatprep.mubr.f32.mxu0 0.0
    %3877 = vmatmul.mubr.f32.gmra.mxu0 %v3743
    %v3878 = vpop.f32.mrf.mxu0
    %v3879 = vadd.f32 %v3707, %v3878
    %v3880 = vpop.f32.mrf.mxu0
    %3881 = vmatprep.mubr.f32.mxu0 0.0
    %3882 = vmatmul.mubr.f32.gmra.mxu0 %v3746
    %v3883 = vpop.f32.mrf.mxu0
    %v3884 = vadd.f32 %v3707, %v3883
    %v3885 = vpop.f32.mrf.mxu0
    %3886 = vmatprep.mubr.f32.mxu0 0.0
    %3887 = vmatmul.mubr.f32.gmra.mxu0 %v3749
    %v3888 = vpop.f32.mrf.mxu0
    %v3889 = vadd.f32 %v3707, %v3888
    %v3890 = vpop.f32.mrf.mxu0
    %3891 = vmatprep.mubr.f32.mxu0 0.0
    %3892 = vmatmul.mubr.f32.gmra.mxu0 %v3752
    %v3893 = vpop.f32.mrf.mxu0
    %v3894 = vadd.f32 %v3707, %v3893
    %v3895 = vpop.f32.mrf.mxu0
    %3896 = vmatprep.mubr.f32.mxu0 0.0
    %3897 = vmatmul.mubr.f32.gmra.mxu0 %v3755
    %v3898 = vpop.f32.mrf.mxu0
    %v3899 = vadd.f32 %v3707, %v3898
    %v3900 = vpop.f32.mrf.mxu0
    %3901 = vdwg.mxu0
    %s3902 = scalar_lea.vmem [#allocation11], 192
    %3903 = vst.msk [vmem:[%s3902] sm:$0xff] %vm1676, %v3824
    %3904 = vst.msk [vmem:[%s3902 + $0x8] sm:$0xff] %vm1676, %v3829
    %3905 = vst.msk [vmem:[%s3902 + $0x10] sm:$0xff] %vm1676, %v3834
    %3906 = vst.msk [vmem:[%s3902 + $0x18] sm:$0xff] %vm1676, %v3839
    %3907 = vst.msk [vmem:[%s3902 + $0x20] sm:$0xff] %vm1676, %v3844
    %3908 = vst.msk [vmem:[%s3902 + $0x28] sm:$0xff] %vm1676, %v3849
    %3909 = vst.msk [vmem:[%s3902 + $0x30] sm:$0xff] %vm1676, %v3854
    %3910 = vst.msk [vmem:[%s3902 + $0x38] sm:$0xff] %vm1676, %v3859
    %3911 = vst.msk [vmem:[%s3902 + $0x100] sm:$0xff] %vm1676, %v3864
    %3912 = vst.msk [vmem:[%s3902 + $0x108] sm:$0xff] %vm1676, %v3869
    %3913 = vst.msk [vmem:[%s3902 + $0x110] sm:$0xff] %vm1676, %v3874
    %3914 = vst.msk [vmem:[%s3902 + $0x118] sm:$0xff] %vm1676, %v3879
    %3915 = vst.msk [vmem:[%s3902 + $0x120] sm:$0xff] %vm1676, %v3884
    %3916 = vst.msk [vmem:[%s3902 + $0x128] sm:$0xff] %vm1676, %v3889
    %3917 = vst.msk [vmem:[%s3902 + $0x130] sm:$0xff] %vm1676, %v3894
    %3918 = vst.msk [vmem:[%s3902 + $0x138] sm:$0xff] %vm1676, %v3899
    // Predicated region
    $region46: #{tpu_custom_call.1} parent=1 // pred_check
      _
    $region47: #{tpu_custom_call.1} parent=1 // pred_check_branch
      %3920 = sbr.rel (0) target = $region49
    $region48: #{tpu_custom_call.1} parent=1 // pred_region
      %s3922 = ssub.s32 8192, 8192
      %3923 = vsyncadd [#allocation5], %s3922
      %s3924 = sshll.u32 [#allocation11], 4
      %s3925 = int_to_ptr.vmem [resolvable:$true] %s3924
      %3930 = dma.vmem_to_hbm [thread:$0]  %s3925, 8192, %s7, [#allocation5], 128, 128, 8
    $region49: #{tpu_custom_call.1} parent=1 // pred_fallthru
      _
    // Predicated region
    $region50: #{tpu_custom_call.1} parent=1 // pred_check
      _
    $region51: #{tpu_custom_call.1} parent=1 // pred_check_branch
      %3932 = sbr.rel (0) target = $region53
    $region52: #{tpu_custom_call.1} parent=1 // pred_region
      %3933 = dma.done [#allocation5], 8192
    $region53: #{tpu_custom_call.1} parent=1 // pred_fallthru
      _
    %3934 = vsyncpa [#allocation4], 1
    %3935 = vsyncpa [#allocation7], 1
    %3936 = vsyncpa [#allocation10], 1
    %3937 = vsyncpa [#allocation5], 1

</llo_original>
